<compile_context>
chip_gen: v6e
topology: v6e:2x2x1
jax: 0.10.0
libtpu: 0.0.40
codegen_flags: <defaults>
</compile_context>

<pallas_src>
import functools

import jax
import jax.numpy as jnp
from jax.experimental import pallas as pl
from jax.experimental.pallas import tpu as pltpu

HEADS = 3
PRENORM_EPS = 1e-5   # nn.LayerNorm default inside PreNorm
OUTNORM_EPS = 1e-6   # nn.LayerNorm(dim, eps=1e-6) applied after concat


# ----------------------------------------------------------------------------
# Fused per-layer kernel
# ----------------------------------------------------------------------------
def fused_layer_kernel(xs_ref, xl_ref,
                       # branch updating xl (cross_attn_l + n_l)
                       lg_l, lb_l, wq_l, wkv_l, wp_l, pb_l, og_l, ob_l,
                       # branch updating xs (cross_attn_s + n_s)
                       lg_s, lb_s, wq_s, wkv_s, wp_s, pb_s, og_s, ob_s,
                       xs_out_ref, xl_out_ref,
                       kv_scr,
                       *, B, Ns, Nl):
    """xs_ref: (B*Ns, D) flattened small sequence, xl_ref: (B*Nl, D) large seq.

    Row layout: rows [b*N, (b+1)*N) are batch element b; row b*N is the class
    token. Outputs have the same layout.
    """
    D = xs_ref.shape[-1]
    dh = D // HEADS

    xs = xs_ref[...]          # (B*Ns, D) original small sequence
    xl = xl_ref[...]          # (B*Nl, D) original large sequence

    def ln_rows(x, g, b, eps):
        mu = jnp.mean(x, axis=-1, keepdims=True)
        c = x - mu
        var = jnp.mean(c * c, axis=-1, keepdims=True)
        return c * jax.lax.rsqrt(var + eps) * g + b

    def gather_cls(x, N):
        # rows {b*N} -> (B, D); B is tiny & static
        return jnp.concatenate([x[b * N:b * N + 1, :] for b in range(B)], axis=0)

    xs_cls = gather_cls(xs, Ns)   # (B, D) small class tokens
    xl_cls = gather_cls(xl, Nl)   # (B, D) large class tokens

    def cross_branch(q_cls, kv_src, N, lg, lb, wq, wkv, wp, pb):
        """PreNorm + CrossAttention + residual for one branch.

        q_cls : (B, D)    un-normalised query class tokens (other branch's cls)
        kv_src: (B*N, D)  sequence whose patch rows (1..N-1 per batch) are the
                          key/value context (its class rows get replaced).
        returns (B, D) = q_cls + proj(attention)
        """
        BN = B * N
        lgv, lbv = lg[...], lb[...]
        wpv = wp[...]                                  # (D, D), loaded once

        # assemble cal_qkv = [class ; patches] per batch into VMEM scratch
        kv_scr[0:BN, :] = kv_src
        for b in range(B):
            kv_scr[b * N:b * N + 1, :] = q_cls[b:b + 1, :]

        xn = ln_rows(kv_scr[0:BN, :], lgv, lbv, PRENORM_EPS)               # (BN, D)
        kv2 = jnp.dot(xn, wkv[...], preferred_element_type=jnp.float32)    # (BN, 2D)
        qn = ln_rows(q_cls, lgv, lbv, PRENORM_EPS)                         # (B, D)
        # wq is pre-scaled by head_dim**-0.5 at parameter construction time
        q2 = jnp.dot(qn, wq[...], preferred_element_type=jnp.float32)      # (B, D)

        # block-diagonal mask: query row b only attends to columns [b*N, (b+1)*N)
        row = jax.lax.broadcasted_iota(jnp.int32, (B, BN), 0)
        col = jax.lax.broadcasted_iota(jnp.int32, (B, BN), 1)
        valid = (col >= row * N) & (col < (row + 1) * N)

        proj = pb[...]                                  # (1, D), broadcasts to (B, D)
        for h in range(HEADS):                          # static, unrolled
            lo, hi = h * dh, (h + 1) * dh
            k_h = kv2[:, lo:hi]                         # (BN, dh)
            v_h = kv2[:, D + lo:D + hi]                 # (BN, dh)
            logits = jax.lax.dot_general(
                q2[:, lo:hi], k_h, (((1,), (1,)), ((), ())),
                preferred_element_type=jnp.float32)     # (B, BN)
            logits = jnp.where(valid, logits, -1e30)
            m = jnp.max(logits, axis=-1, keepdims=True)
            e = jnp.exp(logits - m)                     # masked -> 0
            s = jnp.sum(e, axis=-1, keepdims=True)
            attn = e * pl.reciprocal(s, approx=True)
            head_out = jnp.dot(attn, v_h, preferred_element_type=jnp.float32)   # (B, dh)
            # accumulate output projection per head (block decomposition of Wp)
            proj = proj + jnp.dot(head_out, wpv[lo:hi, :],
                                  preferred_element_type=jnp.float32)           # (B, D)

        return q_cls + proj            # residual with un-normalised class token

    # --- branch 1: large class token attends over small patch tokens -> new xl
    new_cls_l = cross_branch(xl_cls, xs, Ns,
                             lg_l, lb_l, wq_l, wkv_l, wp_l, pb_l)
    xl_out_ref[...] = ln_rows(xl, og_l[...], ob_l[...], OUTNORM_EPS)
    ln_cls_l = ln_rows(new_cls_l, og_l[...], ob_l[...], OUTNORM_EPS)
    for b in range(B):
        xl_out_ref[b * Nl:b * Nl + 1, :] = ln_cls_l[b:b + 1, :]

    # --- branch 2: small class token attends over (original) large patches -> new xs
    new_cls_s = cross_branch(xs_cls, xl, Nl,
                             lg_s, lb_s, wq_s, wkv_s, wp_s, pb_s)
    xs_out_ref[...] = ln_rows(xs, og_s[...], ob_s[...], OUTNORM_EPS)
    ln_cls_s = ln_rows(new_cls_s, og_s[...], ob_s[...], OUTNORM_EPS)
    for b in range(B):
        xs_out_ref[b * Ns:b * Ns + 1, :] = ln_cls_s[b:b + 1, :]


# ----------------------------------------------------------------------------
# pallas_call wrapper (one call per layer)
# ----------------------------------------------------------------------------
def fused_layer(xs2, xl2, ca_l, n_l, ca_s, n_s, B, Ns, Nl):
    D = xs2.shape[-1]
    assert D % HEADS == 0
    BNs, BNl = B * Ns, B * Nl
    Nmax = max(Ns, Nl)

    wspec = pl.BlockSpec((D, D), lambda i: (0, 0))
    kvspec = pl.BlockSpec((D, 2 * D), lambda i: (0, 0))
    vspec = pl.BlockSpec((1, D), lambda i: (0, 0))
    xs_spec = pl.BlockSpec((BNs, D), lambda i: (0, 0))
    xl_spec = pl.BlockSpec((BNl, D), lambda i: (0, 0))
    branch_specs = [vspec, vspec, wspec, kvspec, wspec, vspec, vspec, vspec]

    kernel = functools.partial(fused_layer_kernel, B=B, Ns=Ns, Nl=Nl)
    return pl.pallas_call(
        kernel,
        out_shape=[jax.ShapeDtypeStruct((BNs, D), jnp.float32),
                   jax.ShapeDtypeStruct((BNl, D), jnp.float32)],
        grid=(1,),
        in_specs=[xs_spec, xl_spec] + branch_specs + branch_specs,
        out_specs=[xs_spec, xl_spec],
        scratch_shapes=[pltpu.VMEM((B * Nmax, D), jnp.float32)],   # cal_qkv assembly
        compiler_params=pltpu.CompilerParams(dimension_semantics=("arbitrary",)),
    )(xs2, xl2,
      ca_l["ln_g"], ca_l["ln_b"], ca_l["wq"], ca_l["wkv"], ca_l["wp"], ca_l["pb"],
      n_l["g"], n_l["b"],
      ca_s["ln_g"], ca_s["ln_b"], ca_s["wq"], ca_s["wkv"], ca_s["wp"], ca_s["pb"],
      n_s["g"], n_s["b"])


# ----------------------------------------------------------------------------
# Module forward (mirrors MultiScaleTransformerEncoder.forward)
# ----------------------------------------------------------------------------
def multi_scale_encoder_forward(xs, xl, layers):
    B, Ns, D = xs.shape
    Nl = xl.shape[1]
    xs2 = xs.reshape(B * Ns, D)        # free row-major bitcasts
    xl2 = xl.reshape(B * Nl, D)
    for (cross_attn_s, n_l, cross_attn_l, n_s) in layers:
        xs2, xl2 = fused_layer(xs2, xl2, cross_attn_l, n_l, cross_attn_s, n_s,
                               B, Ns, Nl)
    return xs2.reshape(B, Ns, D), xl2.reshape(B, Nl, D)


# ----------------------------------------------------------------------------
# Pure-JAX reference (for correctness check)
# ----------------------------------------------------------------------------
def _ref_cross_attn(cal_qkv, p):
    x = cal_qkv
    mean = jnp.mean(x, axis=-1, keepdims=True)
    var = jnp.mean((x - mean) ** 2, axis=-1, keepdims=True)
    xn = (x - mean) * jax.lax.rsqrt(var + PRENORM_EPS) * p["ln_g"] + p["ln_b"]
    B, N, D = x.shape
    dh = D // HEADS
    wk = p["wkv"][:, :D]
    wv = p["wkv"][:, D:]
    # p["wq"] already carries the head_dim**-0.5 attention scale.
    q = (xn[:, 0:1] @ p["wq"]).reshape(B, 1, HEADS, dh).transpose(0, 2, 1, 3)
    k = (xn @ wk).reshape(B, N, HEADS, dh).transpose(0, 2, 1, 3)
    v = (xn @ wv).reshape(B, N, HEADS, dh).transpose(0, 2, 1, 3)
    attn = jax.nn.softmax(q @ k.transpose(0, 1, 3, 2), axis=-1)
    o = (attn @ v).transpose(0, 2, 1, 3).reshape(B, 1, D)
    o = o @ p["wp"] + p["pb"]
    return x[:, 0:1] + o


def _ref_ln(x, p, eps):
    mean = jnp.mean(x, axis=-1, keepdims=True)
    var = jnp.mean((x - mean) ** 2, axis=-1, keepdims=True)
    return (x - mean) * jax.lax.rsqrt(var + eps) * p["g"] + p["b"]


def _ref_forward(xs, xl, layers):
    for (ca_s, n_l, ca_l, n_s) in layers:
        sc, x_s = xs[:, 0:1], xs[:, 1:]
        lc, x_l = xl[:, 0:1], xl[:, 1:]
        xl = _ref_ln(jnp.concatenate(
            [_ref_cross_attn(jnp.concatenate([lc, x_s], 1), ca_l), x_l], 1),
            n_l, OUTNORM_EPS)
        xs = _ref_ln(jnp.concatenate(
            [_ref_cross_attn(jnp.concatenate([sc, x_l], 1), ca_s), x_s], 1),
            n_s, OUTNORM_EPS)
    return xs, xl


# ----------------------------------------------------------------------------
# Deterministic parameter construction
# ----------------------------------------------------------------------------
def make_cross_attn_params(key, D):
    ks = jax.random.split(key, 5)
    std = 0.02
    scale = (D // HEADS) ** -0.5
    wk = (jax.random.normal(ks[1], (D, D)) * std).astype(jnp.float32)
    wv = (jax.random.normal(ks[2], (D, D)) * std).astype(jnp.float32)
    return {
        "ln_g": jnp.ones((1, D), jnp.float32),
        "ln_b": jnp.zeros((1, D), jnp.float32),
        # wq is stored pre-multiplied by the attention scale head_dim**-0.5
        # (folded in at init time); kernel & reference both assume this.
        "wq": (jax.random.normal(ks[0], (D, D)) * std * scale).astype(jnp.float32),
        # Wk | Wv fused at parameter construction time -> single K/V matmul.
        "wkv": jnp.concatenate([wk, wv], axis=1),
        "wp": (jax.random.normal(ks[3], (D, D)) * std).astype(jnp.float32),
        "pb": (jax.random.normal(ks[4], (1, D)) * std).astype(jnp.float32),
    }


def make_layernorm_params(D):
    return {"g": jnp.ones((1, D), jnp.float32),
            "b": jnp.zeros((1, D), jnp.float32)}


if __name__ == "__main__":
    B, Ns, Nl, D = 2, 9, 5, 48          # D divisible by HEADS=3 (head_dim=16)
    key = jax.random.PRNGKey(0)
    k_xs, k_xl, k_l0, k_l1 = jax.random.split(key, 4)

    xs = jax.random.normal(k_xs, (B, Ns, D), jnp.float32)
    xl = jax.random.normal(k_xl, (B, Nl, D), jnp.float32)

    # one cross-attn layer (cross_attn_depth=1); module order matches torch:
    # [PreNorm+CrossAttn, LayerNorm, PreNorm+CrossAttn, LayerNorm]
    # unpacked as (cross_attn_s, n_l, cross_attn_l, n_s)
    layers = [(
        make_cross_attn_params(k_l0, D),   # cross_attn_s
        make_layernorm_params(D),          # n_l
        make_cross_attn_params(k_l1, D),   # cross_attn_l
        make_layernorm_params(D),          # n_s
    )]

    fwd = jax.jit(multi_scale_encoder_forward)
    out_xs, out_xl = fwd(xs, xl, layers)
    jax.block_until_ready((out_xs, out_xl))

    ref_xs, ref_xl = _ref_forward(xs, xl, layers)
    assert out_xs.shape == (B, Ns, D) and out_xl.shape == (B, Nl, D)
    assert jnp.allclose(out_xs, ref_xs, atol=5e-4, rtol=5e-4)
    assert jnp.allclose(out_xl, ref_xl, atol=5e-4, rtol=5e-4)

    print("KERNEL_OK")
</pallas_src>

<mosaic_0001>
module attributes {stable_mosaic.version = 11 : i64} {
  func.func @fused_layer_kernel(%arg0: i32, %arg1: memref<18x48xf32, #tpu.memory_space<vmem>>, %arg2: memref<10x48xf32, #tpu.memory_space<vmem>>, %arg3: memref<1x48xf32, #tpu.memory_space<vmem>>, %arg4: memref<1x48xf32, #tpu.memory_space<vmem>>, %arg5: memref<48x48xf32, #tpu.memory_space<vmem>>, %arg6: memref<48x96xf32, #tpu.memory_space<vmem>>, %arg7: memref<48x48xf32, #tpu.memory_space<vmem>>, %arg8: memref<1x48xf32, #tpu.memory_space<vmem>>, %arg9: memref<1x48xf32, #tpu.memory_space<vmem>>, %arg10: memref<1x48xf32, #tpu.memory_space<vmem>>, %arg11: memref<1x48xf32, #tpu.memory_space<vmem>>, %arg12: memref<1x48xf32, #tpu.memory_space<vmem>>, %arg13: memref<48x48xf32, #tpu.memory_space<vmem>>, %arg14: memref<48x96xf32, #tpu.memory_space<vmem>>, %arg15: memref<48x48xf32, #tpu.memory_space<vmem>>, %arg16: memref<1x48xf32, #tpu.memory_space<vmem>>, %arg17: memref<1x48xf32, #tpu.memory_space<vmem>>, %arg18: memref<1x48xf32, #tpu.memory_space<vmem>>, %arg19: memref<18x48xf32, #tpu.memory_space<vmem>>, %arg20: memref<10x48xf32, #tpu.memory_space<vmem>>, %arg21: memref<18x48xf32, #tpu.memory_space<vmem>>) attributes {dimension_semantics = [#tpu.dimension_semantics<arbitrary>], iteration_bounds = array<i64: 1>, scalar_prefetch = 0 : i64, scratch_operands = 1 : i64, tpu.core_type = #tpu.core_type<tc>, window_params = [{pipeline_mode = #tpu.pipeline_mode<synchronous>, transform_indices = @transform_0, window_bounds = array<i64: 18, 48>}, {pipeline_mode = #tpu.pipeline_mode<synchronous>, transform_indices = @transform_1, window_bounds = array<i64: 10, 48>}, {pipeline_mode = #tpu.pipeline_mode<synchronous>, transform_indices = @transform_2, window_bounds = array<i64: 1, 48>}, {pipeline_mode = #tpu.pipeline_mode<synchronous>, transform_indices = @transform_3, window_bounds = array<i64: 1, 48>}, {pipeline_mode = #tpu.pipeline_mode<synchronous>, transform_indices = @transform_4, window_bounds = array<i64: 48, 48>}, {pipeline_mode = #tpu.pipeline_mode<synchronous>, transform_indices = @transform_5, window_bounds = array<i64: 48, 96>}, {pipeline_mode = #tpu.pipeline_mode<synchronous>, transform_indices = @transform_6, window_bounds = array<i64: 48, 48>}, {pipeline_mode = #tpu.pipeline_mode<synchronous>, transform_indices = @transform_7, window_bounds = array<i64: 1, 48>}, {pipeline_mode = #tpu.pipeline_mode<synchronous>, transform_indices = @transform_8, window_bounds = array<i64: 1, 48>}, {pipeline_mode = #tpu.pipeline_mode<synchronous>, transform_indices = @transform_9, window_bounds = array<i64: 1, 48>}, {pipeline_mode = #tpu.pipeline_mode<synchronous>, transform_indices = @transform_10, window_bounds = array<i64: 1, 48>}, {pipeline_mode = #tpu.pipeline_mode<synchronous>, transform_indices = @transform_11, window_bounds = array<i64: 1, 48>}, {pipeline_mode = #tpu.pipeline_mode<synchronous>, transform_indices = @transform_12, window_bounds = array<i64: 48, 48>}, {pipeline_mode = #tpu.pipeline_mode<synchronous>, transform_indices = @transform_13, window_bounds = array<i64: 48, 96>}, {pipeline_mode = #tpu.pipeline_mode<synchronous>, transform_indices = @transform_14, window_bounds = array<i64: 48, 48>}, {pipeline_mode = #tpu.pipeline_mode<synchronous>, transform_indices = @transform_15, window_bounds = array<i64: 1, 48>}, {pipeline_mode = #tpu.pipeline_mode<synchronous>, transform_indices = @transform_16, window_bounds = array<i64: 1, 48>}, {pipeline_mode = #tpu.pipeline_mode<synchronous>, transform_indices = @transform_17, window_bounds = array<i64: 1, 48>}, {pipeline_mode = #tpu.pipeline_mode<synchronous>, transform_indices = @transform_18, window_bounds = array<i64: 18, 48>}, {pipeline_mode = #tpu.pipeline_mode<synchronous>, transform_indices = @transform_19, window_bounds = array<i64: 10, 48>}]} {
    %c0 = arith.constant 0 : index
    %c0_0 = arith.constant 0 : index
    %0 = vector.load %arg1[%c0, %c0_0] : memref<18x48xf32, #tpu.memory_space<vmem>>, vector<18x48xf32>
    %c0_1 = arith.constant 0 : index
    %c0_2 = arith.constant 0 : index
    %1 = vector.load %arg2[%c0_1, %c0_2] : memref<10x48xf32, #tpu.memory_space<vmem>>, vector<10x48xf32>
    %2 = vector.extract_strided_slice %0 {offsets = [0, 0], sizes = [1, 48], strides = [1, 1]} : vector<18x48xf32> to vector<1x48xf32>
    %3 = vector.extract_strided_slice %0 {offsets = [9, 0], sizes = [1, 48], strides = [1, 1]} : vector<18x48xf32> to vector<1x48xf32>
    %4 = tpu.concatenate %2, %3 in 0 : vector<1x48xf32>, vector<1x48xf32> -> vector<2x48xf32>
    %5 = vector.extract_strided_slice %1 {offsets = [0, 0], sizes = [1, 48], strides = [1, 1]} : vector<10x48xf32> to vector<1x48xf32>
    %6 = vector.extract_strided_slice %1 {offsets = [5, 0], sizes = [1, 48], strides = [1, 1]} : vector<10x48xf32> to vector<1x48xf32>
    %7 = tpu.concatenate %5, %6 in 0 : vector<1x48xf32>, vector<1x48xf32> -> vector<2x48xf32>
    %c0_3 = arith.constant 0 : index
    %c0_4 = arith.constant 0 : index
    %8 = vector.load %arg3[%c0_3, %c0_4] : memref<1x48xf32, #tpu.memory_space<vmem>>, vector<1x48xf32>
    %c0_5 = arith.constant 0 : index
    %c0_6 = arith.constant 0 : index
    %9 = vector.load %arg4[%c0_5, %c0_6] : memref<1x48xf32, #tpu.memory_space<vmem>>, vector<1x48xf32>
    %c0_7 = arith.constant 0 : index
    %c0_8 = arith.constant 0 : index
    %10 = vector.load %arg7[%c0_7, %c0_8] : memref<48x48xf32, #tpu.memory_space<vmem>>, vector<48x48xf32>
    %c0_9 = arith.constant 0 : index
    %c0_10 = arith.constant 0 : index
    %11 = vector.load %arg21[%c0_9, %c0_10] : memref<18x48xf32, #tpu.memory_space<vmem>>, vector<18x48xf32>
    tpu.vector_store %arg21[%c0_9, %c0_10], %0 {strides = array<i32>} : memref<18x48xf32, #tpu.memory_space<vmem>>, vector<18x48xf32>,
    %12 = vector.extract_strided_slice %7 {offsets = [0, 0], sizes = [1, 48], strides = [1, 1]} : vector<2x48xf32> to vector<1x48xf32>
    %c0_11 = arith.constant 0 : index
    %c0_12 = arith.constant 0 : index
    %13 = vector.load %arg21[%c0_11, %c0_12] : memref<18x48xf32, #tpu.memory_space<vmem>>, vector<1x48xf32>
    tpu.vector_store %arg21[%c0_11, %c0_12], %12 {strides = array<i32>} : memref<18x48xf32, #tpu.memory_space<vmem>>, vector<1x48xf32>,
    %14 = vector.extract_strided_slice %7 {offsets = [1, 0], sizes = [1, 48], strides = [1, 1]} : vector<2x48xf32> to vector<1x48xf32>
    %c9 = arith.constant 9 : index
    %c0_13 = arith.constant 0 : index
    %15 = vector.load %arg21[%c9, %c0_13] : memref<18x48xf32, #tpu.memory_space<vmem>>, vector<1x48xf32>
    tpu.vector_store %arg21[%c9, %c0_13], %14 {strides = array<i32>} : memref<18x48xf32, #tpu.memory_space<vmem>>, vector<1x48xf32>,
    %c0_14 = arith.constant 0 : index
    %c0_15 = arith.constant 0 : index
    %16 = vector.load %arg21[%c0_14, %c0_15] : memref<18x48xf32, #tpu.memory_space<vmem>>, vector<18x48xf32>
    %cst = arith.constant dense<0.000000e+00> : vector<18xf32>
    %17 = vector.multi_reduction <add>, %16, %cst [1] : vector<18x48xf32> to vector<18xf32>
    %18 = vector.shape_cast %17 : vector<18xf32> to vector<18x1xf32>
    %cst_16 = arith.constant 4.800000e+01 : f32
    %19 = vector.broadcast %cst_16 : f32 to vector<18x1xf32>
    %20 = arith.divf %18, %19 : vector<18x1xf32>
    %21 = vector.broadcast %20 : vector<18x1xf32> to vector<18x48xf32>
    %22 = arith.subf %16, %21 : vector<18x48xf32>
    %23 = arith.mulf %22, %22 : vector<18x48xf32>
    %cst_17 = arith.constant dense<0.000000e+00> : vector<18xf32>
    %24 = vector.multi_reduction <add>, %23, %cst_17 [1] : vector<18x48xf32> to vector<18xf32>
    %25 = vector.shape_cast %24 : vector<18xf32> to vector<18x1xf32>
    %cst_18 = arith.constant 4.800000e+01 : f32
    %26 = vector.broadcast %cst_18 : f32 to vector<18x1xf32>
    %27 = arith.divf %25, %26 : vector<18x1xf32>
    %cst_19 = arith.constant 9.99999974E-6 : f32
    %28 = vector.broadcast %cst_19 : f32 to vector<18x1xf32>
    %29 = arith.addf %27, %28 : vector<18x1xf32>
    %30 = math.rsqrt %29 : vector<18x1xf32>
    %31 = vector.broadcast %30 : vector<18x1xf32> to vector<18x48xf32>
    %32 = arith.mulf %22, %31 : vector<18x48xf32>
    %33 = vector.broadcast %8 : vector<1x48xf32> to vector<18x48xf32>
    %34 = arith.mulf %32, %33 : vector<18x48xf32>
    %35 = vector.broadcast %9 : vector<1x48xf32> to vector<18x48xf32>
    %36 = arith.addf %34, %35 : vector<18x48xf32>
    %c0_20 = arith.constant 0 : index
    %c0_21 = arith.constant 0 : index
    %37 = vector.load %arg6[%c0_20, %c0_21] : memref<48x96xf32, #tpu.memory_space<vmem>>, vector<48x96xf32>
    %cst_22 = arith.constant dense<0.000000e+00> : vector<18x96xf32>
    %38 = tpu.matmul %36, %37, %cst_22 {dimension_numbers = #tpu.dot_dimension_numbers<[1], [0], [0], [1], [0, 0, 1, 1], [], []>} : vector<18x48xf32>, vector<48x96xf32>, vector<18x96xf32> -> vector<18x96xf32>
    %cst_23 = arith.constant dense<0.000000e+00> : vector<2xf32>
    %39 = vector.multi_reduction <add>, %7, %cst_23 [1] : vector<2x48xf32> to vector<2xf32>
    %40 = vector.shape_cast %39 : vector<2xf32> to vector<2x1xf32>
    %cst_24 = arith.constant 4.800000e+01 : f32
    %41 = vector.broadcast %cst_24 : f32 to vector<2x1xf32>
    %42 = arith.divf %40, %41 : vector<2x1xf32>
    %43 = vector.broadcast %42 : vector<2x1xf32> to vector<2x48xf32>
    %44 = arith.subf %7, %43 : vector<2x48xf32>
    %45 = arith.mulf %44, %44 : vector<2x48xf32>
    %cst_25 = arith.constant dense<0.000000e+00> : vector<2xf32>
    %46 = vector.multi_reduction <add>, %45, %cst_25 [1] : vector<2x48xf32> to vector<2xf32>
    %47 = vector.shape_cast %46 : vector<2xf32> to vector<2x1xf32>
    %cst_26 = arith.constant 4.800000e+01 : f32
    %48 = vector.broadcast %cst_26 : f32 to vector<2x1xf32>
    %49 = arith.divf %47, %48 : vector<2x1xf32>
    %cst_27 = arith.constant 9.99999974E-6 : f32
    %50 = vector.broadcast %cst_27 : f32 to vector<2x1xf32>
    %51 = arith.addf %49, %50 : vector<2x1xf32>
    %52 = math.rsqrt %51 : vector<2x1xf32>
    %53 = vector.broadcast %52 : vector<2x1xf32> to vector<2x48xf32>
    %54 = arith.mulf %44, %53 : vector<2x48xf32>
    %55 = vector.broadcast %8 : vector<1x48xf32> to vector<2x48xf32>
    %56 = arith.mulf %54, %55 : vector<2x48xf32>
    %57 = vector.broadcast %9 : vector<1x48xf32> to vector<2x48xf32>
    %58 = arith.addf %56, %57 : vector<2x48xf32>
    %c0_28 = arith.constant 0 : index
    %c0_29 = arith.constant 0 : index
    %59 = vector.load %arg5[%c0_28, %c0_29] : memref<48x48xf32, #tpu.memory_space<vmem>>, vector<48x48xf32>
    %cst_30 = arith.constant dense<0.000000e+00> : vector<2x48xf32>
    %60 = tpu.matmul %58, %59, %cst_30 {dimension_numbers = #tpu.dot_dimension_numbers<[1], [0], [0], [1], [0, 0, 1, 1], [], []>} : vector<2x48xf32>, vector<48x48xf32>, vector<2x48xf32> -> vector<2x48xf32>
    %61 = tpu.iota {dimensions = array<i32: 0>} : vector<2x18xi32>
    %62 = tpu.iota {dimensions = array<i32: 1>} : vector<2x18xi32>
    %c9_i32 = arith.constant 9 : i32
    %63 = vector.broadcast %c9_i32 : i32 to vector<2x18xi32>
    %64 = arith.muli %61, %63 : vector<2x18xi32>
    %65 = arith.cmpi sge, %62, %64 : vector<2x18xi32>
    %c1_i32 = arith.constant 1 : i32
    %66 = vector.broadcast %c1_i32 : i32 to vector<2x18xi32>
    %67 = arith.addi %61, %66 : vector<2x18xi32>
    %c9_i32_31 = arith.constant 9 : i32
    %68 = vector.broadcast %c9_i32_31 : i32 to vector<2x18xi32>
    %69 = arith.muli %67, %68 : vector<2x18xi32>
    %70 = arith.cmpi slt, %62, %69 : vector<2x18xi32>
    %71 = arith.andi %65, %70 : vector<2x18xi1>
    %c0_32 = arith.constant 0 : index
    %c0_33 = arith.constant 0 : index
    %72 = vector.load %arg8[%c0_32, %c0_33] : memref<1x48xf32, #tpu.memory_space<vmem>>, vector<1x48xf32>
    %73 = vector.extract_strided_slice %38 {offsets = [0, 0], sizes = [18, 16], strides = [1, 1]} : vector<18x96xf32> to vector<18x16xf32>
    %74 = vector.extract_strided_slice %38 {offsets = [0, 48], sizes = [18, 16], strides = [1, 1]} : vector<18x96xf32> to vector<18x16xf32>
    %75 = vector.extract_strided_slice %60 {offsets = [0, 0], sizes = [2, 16], strides = [1, 1]} : vector<2x48xf32> to vector<2x16xf32>
    %cst_34 = arith.constant dense<0.000000e+00> : vector<2x18xf32>
    %76 = tpu.matmul %75, %73, %cst_34 {dimension_numbers = #tpu.dot_dimension_numbers<[1], [1], [0], [0], [0, 0, 1, 0], [], []>} : vector<2x16xf32>, vector<18x16xf32>, vector<2x18xf32> -> vector<2x18xf32>
    %cst_35 = arith.constant -1.000000e+30 : f32
    %77 = vector.broadcast %cst_35 : f32 to vector<2x18xf32>
    %78 = arith.select %71, %76, %77 : vector<2x18xi1>, vector<2x18xf32>
    %cst_36 = arith.constant dense<0xFF800000> : vector<2xf32>
    %79 = vector.multi_reduction <maximumf>, %78, %cst_36 [1] : vector<2x18xf32> to vector<2xf32>
    %80 = vector.shape_cast %79 : vector<2xf32> to vector<2x1xf32>
    %81 = vector.broadcast %80 : vector<2x1xf32> to vector<2x18xf32>
    %82 = arith.subf %78, %81 : vector<2x18xf32>
    %83 = math.exp %82 : vector<2x18xf32>
    %cst_37 = arith.constant dense<0.000000e+00> : vector<2xf32>
    %84 = vector.multi_reduction <add>, %83, %cst_37 [1] : vector<2x18xf32> to vector<2xf32>
    %85 = vector.shape_cast %84 : vector<2xf32> to vector<2x1xf32>
    %86 = tpu.reciprocal %85 {approx = true} : vector<2x1xf32> -> vector<2x1xf32>
    %87 = vector.broadcast %86 : vector<2x1xf32> to vector<2x18xf32>
    %88 = arith.mulf %83, %87 : vector<2x18xf32>
    %cst_38 = arith.constant dense<0.000000e+00> : vector<2x16xf32>
    %89 = tpu.matmul %88, %74, %cst_38 {dimension_numbers = #tpu.dot_dimension_numbers<[1], [0], [0], [1], [0, 0, 1, 1], [], []>} : vector<2x18xf32>, vector<18x16xf32>, vector<2x16xf32> -> vector<2x16xf32>
    %90 = vector.extract_strided_slice %10 {offsets = [0, 0], sizes = [16, 48], strides = [1, 1]} : vector<48x48xf32> to vector<16x48xf32>
    %cst_39 = arith.constant dense<0.000000e+00> : vector<2x48xf32>
    %91 = tpu.matmul %89, %90, %cst_39 {dimension_numbers = #tpu.dot_dimension_numbers<[1], [0], [0], [1], [0, 0, 1, 1], [], []>} : vector<2x16xf32>, vector<16x48xf32>, vector<2x48xf32> -> vector<2x48xf32>
    %92 = vector.broadcast %72 : vector<1x48xf32> to vector<2x48xf32>
    %93 = arith.addf %92, %91 : vector<2x48xf32>
    %94 = vector.extract_strided_slice %38 {offsets = [0, 16], sizes = [18, 16], strides = [1, 1]} : vector<18x96xf32> to vector<18x16xf32>
    %95 = vector.extract_strided_slice %38 {offsets = [0, 64], sizes = [18, 16], strides = [1, 1]} : vector<18x96xf32> to vector<18x16xf32>
    %96 = vector.extract_strided_slice %60 {offsets = [0, 16], sizes = [2, 16], strides = [1, 1]} : vector<2x48xf32> to vector<2x16xf32>
    %cst_40 = arith.constant dense<0.000000e+00> : vector<2x18xf32>
    %97 = tpu.matmul %96, %94, %cst_40 {dimension_numbers = #tpu.dot_dimension_numbers<[1], [1], [0], [0], [0, 0, 1, 0], [], []>} : vector<2x16xf32>, vector<18x16xf32>, vector<2x18xf32> -> vector<2x18xf32>
    %cst_41 = arith.constant -1.000000e+30 : f32
    %98 = vector.broadcast %cst_41 : f32 to vector<2x18xf32>
    %99 = arith.select %71, %97, %98 : vector<2x18xi1>, vector<2x18xf32>
    %cst_42 = arith.constant dense<0xFF800000> : vector<2xf32>
    %100 = vector.multi_reduction <maximumf>, %99, %cst_42 [1] : vector<2x18xf32> to vector<2xf32>
    %101 = vector.shape_cast %100 : vector<2xf32> to vector<2x1xf32>
    %102 = vector.broadcast %101 : vector<2x1xf32> to vector<2x18xf32>
    %103 = arith.subf %99, %102 : vector<2x18xf32>
    %104 = math.exp %103 : vector<2x18xf32>
    %cst_43 = arith.constant dense<0.000000e+00> : vector<2xf32>
    %105 = vector.multi_reduction <add>, %104, %cst_43 [1] : vector<2x18xf32> to vector<2xf32>
    %106 = vector.shape_cast %105 : vector<2xf32> to vector<2x1xf32>
    %107 = tpu.reciprocal %106 {approx = true} : vector<2x1xf32> -> vector<2x1xf32>
    %108 = vector.broadcast %107 : vector<2x1xf32> to vector<2x18xf32>
    %109 = arith.mulf %104, %108 : vector<2x18xf32>
    %cst_44 = arith.constant dense<0.000000e+00> : vector<2x16xf32>
    %110 = tpu.matmul %109, %95, %cst_44 {dimension_numbers = #tpu.dot_dimension_numbers<[1], [0], [0], [1], [0, 0, 1, 1], [], []>} : vector<2x18xf32>, vector<18x16xf32>, vector<2x16xf32> -> vector<2x16xf32>
    %111 = vector.extract_strided_slice %10 {offsets = [16, 0], sizes = [16, 48], strides = [1, 1]} : vector<48x48xf32> to vector<16x48xf32>
    %cst_45 = arith.constant dense<0.000000e+00> : vector<2x48xf32>
    %112 = tpu.matmul %110, %111, %cst_45 {dimension_numbers = #tpu.dot_dimension_numbers<[1], [0], [0], [1], [0, 0, 1, 1], [], []>} : vector<2x16xf32>, vector<16x48xf32>, vector<2x48xf32> -> vector<2x48xf32>
    %113 = arith.addf %93, %112 : vector<2x48xf32>
    %114 = vector.extract_strided_slice %38 {offsets = [0, 32], sizes = [18, 16], strides = [1, 1]} : vector<18x96xf32> to vector<18x16xf32>
    %115 = vector.extract_strided_slice %38 {offsets = [0, 80], sizes = [18, 16], strides = [1, 1]} : vector<18x96xf32> to vector<18x16xf32>
    %116 = vector.extract_strided_slice %60 {offsets = [0, 32], sizes = [2, 16], strides = [1, 1]} : vector<2x48xf32> to vector<2x16xf32>
    %cst_46 = arith.constant dense<0.000000e+00> : vector<2x18xf32>
    %117 = tpu.matmul %116, %114, %cst_46 {dimension_numbers = #tpu.dot_dimension_numbers<[1], [1], [0], [0], [0, 0, 1, 0], [], []>} : vector<2x16xf32>, vector<18x16xf32>, vector<2x18xf32> -> vector<2x18xf32>
    %cst_47 = arith.constant -1.000000e+30 : f32
    %118 = vector.broadcast %cst_47 : f32 to vector<2x18xf32>
    %119 = arith.select %71, %117, %118 : vector<2x18xi1>, vector<2x18xf32>
    %cst_48 = arith.constant dense<0xFF800000> : vector<2xf32>
    %120 = vector.multi_reduction <maximumf>, %119, %cst_48 [1] : vector<2x18xf32> to vector<2xf32>
    %121 = vector.shape_cast %120 : vector<2xf32> to vector<2x1xf32>
    %122 = vector.broadcast %121 : vector<2x1xf32> to vector<2x18xf32>
    %123 = arith.subf %119, %122 : vector<2x18xf32>
    %124 = math.exp %123 : vector<2x18xf32>
    %cst_49 = arith.constant dense<0.000000e+00> : vector<2xf32>
    %125 = vector.multi_reduction <add>, %124, %cst_49 [1] : vector<2x18xf32> to vector<2xf32>
    %126 = vector.shape_cast %125 : vector<2xf32> to vector<2x1xf32>
    %127 = tpu.reciprocal %126 {approx = true} : vector<2x1xf32> -> vector<2x1xf32>
    %128 = vector.broadcast %127 : vector<2x1xf32> to vector<2x18xf32>
    %129 = arith.mulf %124, %128 : vector<2x18xf32>
    %cst_50 = arith.constant dense<0.000000e+00> : vector<2x16xf32>
    %130 = tpu.matmul %129, %115, %cst_50 {dimension_numbers = #tpu.dot_dimension_numbers<[1], [0], [0], [1], [0, 0, 1, 1], [], []>} : vector<2x18xf32>, vector<18x16xf32>, vector<2x16xf32> -> vector<2x16xf32>
    %131 = vector.extract_strided_slice %10 {offsets = [32, 0], sizes = [16, 48], strides = [1, 1]} : vector<48x48xf32> to vector<16x48xf32>
    %cst_51 = arith.constant dense<0.000000e+00> : vector<2x48xf32>
    %132 = tpu.matmul %130, %131, %cst_51 {dimension_numbers = #tpu.dot_dimension_numbers<[1], [0], [0], [1], [0, 0, 1, 1], [], []>} : vector<2x16xf32>, vector<16x48xf32>, vector<2x48xf32> -> vector<2x48xf32>
    %133 = arith.addf %113, %132 : vector<2x48xf32>
    %134 = arith.addf %7, %133 : vector<2x48xf32>
    %c0_52 = arith.constant 0 : index
    %c0_53 = arith.constant 0 : index
    %135 = vector.load %arg9[%c0_52, %c0_53] : memref<1x48xf32, #tpu.memory_space<vmem>>, vector<1x48xf32>
    %c0_54 = arith.constant 0 : index
    %c0_55 = arith.constant 0 : index
    %136 = vector.load %arg10[%c0_54, %c0_55] : memref<1x48xf32, #tpu.memory_space<vmem>>, vector<1x48xf32>
    %cst_56 = arith.constant dense<0.000000e+00> : vector<10xf32>
    %137 = vector.multi_reduction <add>, %1, %cst_56 [1] : vector<10x48xf32> to vector<10xf32>
    %138 = vector.shape_cast %137 : vector<10xf32> to vector<10x1xf32>
    %cst_57 = arith.constant 4.800000e+01 : f32
    %139 = vector.broadcast %cst_57 : f32 to vector<10x1xf32>
    %140 = arith.divf %138, %139 : vector<10x1xf32>
    %141 = vector.broadcast %140 : vector<10x1xf32> to vector<10x48xf32>
    %142 = arith.subf %1, %141 : vector<10x48xf32>
    %143 = arith.mulf %142, %142 : vector<10x48xf32>
    %cst_58 = arith.constant dense<0.000000e+00> : vector<10xf32>
    %144 = vector.multi_reduction <add>, %143, %cst_58 [1] : vector<10x48xf32> to vector<10xf32>
    %145 = vector.shape_cast %144 : vector<10xf32> to vector<10x1xf32>
    %cst_59 = arith.constant 4.800000e+01 : f32
    %146 = vector.broadcast %cst_59 : f32 to vector<10x1xf32>
    %147 = arith.divf %145, %146 : vector<10x1xf32>
    %cst_60 = arith.constant 9.99999997E-7 : f32
    %148 = vector.broadcast %cst_60 : f32 to vector<10x1xf32>
    %149 = arith.addf %147, %148 : vector<10x1xf32>
    %150 = math.rsqrt %149 : vector<10x1xf32>
    %151 = vector.broadcast %150 : vector<10x1xf32> to vector<10x48xf32>
    %152 = arith.mulf %142, %151 : vector<10x48xf32>
    %153 = vector.broadcast %135 : vector<1x48xf32> to vector<10x48xf32>
    %154 = arith.mulf %152, %153 : vector<10x48xf32>
    %155 = vector.broadcast %136 : vector<1x48xf32> to vector<10x48xf32>
    %156 = arith.addf %154, %155 : vector<10x48xf32>
    %c0_61 = arith.constant 0 : index
    %c0_62 = arith.constant 0 : index
    %157 = vector.load %arg20[%c0_61, %c0_62] : memref<10x48xf32, #tpu.memory_space<vmem>>, vector<10x48xf32>
    tpu.vector_store %arg20[%c0_61, %c0_62], %156 {strides = array<i32>} : memref<10x48xf32, #tpu.memory_space<vmem>>, vector<10x48xf32>,
    %c0_63 = arith.constant 0 : index
    %c0_64 = arith.constant 0 : index
    %158 = vector.load %arg9[%c0_63, %c0_64] : memref<1x48xf32, #tpu.memory_space<vmem>>, vector<1x48xf32>
    %c0_65 = arith.constant 0 : index
    %c0_66 = arith.constant 0 : index
    %159 = vector.load %arg10[%c0_65, %c0_66] : memref<1x48xf32, #tpu.memory_space<vmem>>, vector<1x48xf32>
    %cst_67 = arith.constant dense<0.000000e+00> : vector<2xf32>
    %160 = vector.multi_reduction <add>, %134, %cst_67 [1] : vector<2x48xf32> to vector<2xf32>
    %161 = vector.shape_cast %160 : vector<2xf32> to vector<2x1xf32>
    %cst_68 = arith.constant 4.800000e+01 : f32
    %162 = vector.broadcast %cst_68 : f32 to vector<2x1xf32>
    %163 = arith.divf %161, %162 : vector<2x1xf32>
    %164 = vector.broadcast %163 : vector<2x1xf32> to vector<2x48xf32>
    %165 = arith.subf %134, %164 : vector<2x48xf32>
    %166 = arith.mulf %165, %165 : vector<2x48xf32>
    %cst_69 = arith.constant dense<0.000000e+00> : vector<2xf32>
    %167 = vector.multi_reduction <add>, %166, %cst_69 [1] : vector<2x48xf32> to vector<2xf32>
    %168 = vector.shape_cast %167 : vector<2xf32> to vector<2x1xf32>
    %cst_70 = arith.constant 4.800000e+01 : f32
    %169 = vector.broadcast %cst_70 : f32 to vector<2x1xf32>
    %170 = arith.divf %168, %169 : vector<2x1xf32>
    %cst_71 = arith.constant 9.99999997E-7 : f32
    %171 = vector.broadcast %cst_71 : f32 to vector<2x1xf32>
    %172 = arith.addf %170, %171 : vector<2x1xf32>
    %173 = math.rsqrt %172 : vector<2x1xf32>
    %174 = vector.broadcast %173 : vector<2x1xf32> to vector<2x48xf32>
    %175 = arith.mulf %165, %174 : vector<2x48xf32>
    %176 = vector.broadcast %158 : vector<1x48xf32> to vector<2x48xf32>
    %177 = arith.mulf %175, %176 : vector<2x48xf32>
    %178 = vector.broadcast %159 : vector<1x48xf32> to vector<2x48xf32>
    %179 = arith.addf %177, %178 : vector<2x48xf32>
    %180 = vector.extract_strided_slice %179 {offsets = [0, 0], sizes = [1, 48], strides = [1, 1]} : vector<2x48xf32> to vector<1x48xf32>
    %c0_72 = arith.constant 0 : index
    %c0_73 = arith.constant 0 : index
    %181 = vector.load %arg20[%c0_72, %c0_73] : memref<10x48xf32, #tpu.memory_space<vmem>>, vector<1x48xf32>
    tpu.vector_store %arg20[%c0_72, %c0_73], %180 {strides = array<i32>} : memref<10x48xf32, #tpu.memory_space<vmem>>, vector<1x48xf32>,
    %182 = vector.extract_strided_slice %179 {offsets = [1, 0], sizes = [1, 48], strides = [1, 1]} : vector<2x48xf32> to vector<1x48xf32>
    %c5 = arith.constant 5 : index
    %c0_74 = arith.constant 0 : index
    %183 = vector.load %arg20[%c5, %c0_74] : memref<10x48xf32, #tpu.memory_space<vmem>>, vector<1x48xf32>
    tpu.vector_store %arg20[%c5, %c0_74], %182 {strides = array<i32>} : memref<10x48xf32, #tpu.memory_space<vmem>>, vector<1x48xf32>,
    %c0_75 = arith.constant 0 : index
    %c0_76 = arith.constant 0 : index
    %184 = vector.load %arg11[%c0_75, %c0_76] : memref<1x48xf32, #tpu.memory_space<vmem>>, vector<1x48xf32>
    %c0_77 = arith.constant 0 : index
    %c0_78 = arith.constant 0 : index
    %185 = vector.load %arg12[%c0_77, %c0_78] : memref<1x48xf32, #tpu.memory_space<vmem>>, vector<1x48xf32>
    %c0_79 = arith.constant 0 : index
    %c0_80 = arith.constant 0 : index
    %186 = vector.load %arg15[%c0_79, %c0_80] : memref<48x48xf32, #tpu.memory_space<vmem>>, vector<48x48xf32>
    %c0_81 = arith.constant 0 : index
    %c0_82 = arith.constant 0 : index
    %187 = vector.load %arg21[%c0_81, %c0_82] : memref<18x48xf32, #tpu.memory_space<vmem>>, vector<10x48xf32>
    tpu.vector_store %arg21[%c0_81, %c0_82], %1 {strides = array<i32>} : memref<18x48xf32, #tpu.memory_space<vmem>>, vector<10x48xf32>,
    %188 = vector.extract_strided_slice %4 {offsets = [0, 0], sizes = [1, 48], strides = [1, 1]} : vector<2x48xf32> to vector<1x48xf32>
    %c0_83 = arith.constant 0 : index
    %c0_84 = arith.constant 0 : index
    %189 = vector.load %arg21[%c0_83, %c0_84] : memref<18x48xf32, #tpu.memory_space<vmem>>, vector<1x48xf32>
    tpu.vector_store %arg21[%c0_83, %c0_84], %188 {strides = array<i32>} : memref<18x48xf32, #tpu.memory_space<vmem>>, vector<1x48xf32>,
    %190 = vector.extract_strided_slice %4 {offsets = [1, 0], sizes = [1, 48], strides = [1, 1]} : vector<2x48xf32> to vector<1x48xf32>
    %c5_85 = arith.constant 5 : index
    %c0_86 = arith.constant 0 : index
    %191 = vector.load %arg21[%c5_85, %c0_86] : memref<18x48xf32, #tpu.memory_space<vmem>>, vector<1x48xf32>
    tpu.vector_store %arg21[%c5_85, %c0_86], %190 {strides = array<i32>} : memref<18x48xf32, #tpu.memory_space<vmem>>, vector<1x48xf32>,
    %c0_87 = arith.constant 0 : index
    %c0_88 = arith.constant 0 : index
    %192 = vector.load %arg21[%c0_87, %c0_88] : memref<18x48xf32, #tpu.memory_space<vmem>>, vector<10x48xf32>
    %cst_89 = arith.constant dense<0.000000e+00> : vector<10xf32>
    %193 = vector.multi_reduction <add>, %192, %cst_89 [1] : vector<10x48xf32> to vector<10xf32>
    %194 = vector.shape_cast %193 : vector<10xf32> to vector<10x1xf32>
    %cst_90 = arith.constant 4.800000e+01 : f32
    %195 = vector.broadcast %cst_90 : f32 to vector<10x1xf32>
    %196 = arith.divf %194, %195 : vector<10x1xf32>
    %197 = vector.broadcast %196 : vector<10x1xf32> to vector<10x48xf32>
    %198 = arith.subf %192, %197 : vector<10x48xf32>
    %199 = arith.mulf %198, %198 : vector<10x48xf32>
    %cst_91 = arith.constant dense<0.000000e+00> : vector<10xf32>
    %200 = vector.multi_reduction <add>, %199, %cst_91 [1] : vector<10x48xf32> to vector<10xf32>
    %201 = vector.shape_cast %200 : vector<10xf32> to vector<10x1xf32>
    %cst_92 = arith.constant 4.800000e+01 : f32
    %202 = vector.broadcast %cst_92 : f32 to vector<10x1xf32>
    %203 = arith.divf %201, %202 : vector<10x1xf32>
    %cst_93 = arith.constant 9.99999974E-6 : f32
    %204 = vector.broadcast %cst_93 : f32 to vector<10x1xf32>
    %205 = arith.addf %203, %204 : vector<10x1xf32>
    %206 = math.rsqrt %205 : vector<10x1xf32>
    %207 = vector.broadcast %206 : vector<10x1xf32> to vector<10x48xf32>
    %208 = arith.mulf %198, %207 : vector<10x48xf32>
    %209 = vector.broadcast %184 : vector<1x48xf32> to vector<10x48xf32>
    %210 = arith.mulf %208, %209 : vector<10x48xf32>
    %211 = vector.broadcast %185 : vector<1x48xf32> to vector<10x48xf32>
    %212 = arith.addf %210, %211 : vector<10x48xf32>
    %c0_94 = arith.constant 0 : index
    %c0_95 = arith.constant 0 : index
    %213 = vector.load %arg14[%c0_94, %c0_95] : memref<48x96xf32, #tpu.memory_space<vmem>>, vector<48x96xf32>
    %cst_96 = arith.constant dense<0.000000e+00> : vector<10x96xf32>
    %214 = tpu.matmul %212, %213, %cst_96 {dimension_numbers = #tpu.dot_dimension_numbers<[1], [0], [0], [1], [0, 0, 1, 1], [], []>} : vector<10x48xf32>, vector<48x96xf32>, vector<10x96xf32> -> vector<10x96xf32>
    %cst_97 = arith.constant dense<0.000000e+00> : vector<2xf32>
    %215 = vector.multi_reduction <add>, %4, %cst_97 [1] : vector<2x48xf32> to vector<2xf32>
    %216 = vector.shape_cast %215 : vector<2xf32> to vector<2x1xf32>
    %cst_98 = arith.constant 4.800000e+01 : f32
    %217 = vector.broadcast %cst_98 : f32 to vector<2x1xf32>
    %218 = arith.divf %216, %217 : vector<2x1xf32>
    %219 = vector.broadcast %218 : vector<2x1xf32> to vector<2x48xf32>
    %220 = arith.subf %4, %219 : vector<2x48xf32>
    %221 = arith.mulf %220, %220 : vector<2x48xf32>
    %cst_99 = arith.constant dense<0.000000e+00> : vector<2xf32>
    %222 = vector.multi_reduction <add>, %221, %cst_99 [1] : vector<2x48xf32> to vector<2xf32>
    %223 = vector.shape_cast %222 : vector<2xf32> to vector<2x1xf32>
    %cst_100 = arith.constant 4.800000e+01 : f32
    %224 = vector.broadcast %cst_100 : f32 to vector<2x1xf32>
    %225 = arith.divf %223, %224 : vector<2x1xf32>
    %cst_101 = arith.constant 9.99999974E-6 : f32
    %226 = vector.broadcast %cst_101 : f32 to vector<2x1xf32>
    %227 = arith.addf %225, %226 : vector<2x1xf32>
    %228 = math.rsqrt %227 : vector<2x1xf32>
    %229 = vector.broadcast %228 : vector<2x1xf32> to vector<2x48xf32>
    %230 = arith.mulf %220, %229 : vector<2x48xf32>
    %231 = vector.broadcast %184 : vector<1x48xf32> to vector<2x48xf32>
    %232 = arith.mulf %230, %231 : vector<2x48xf32>
    %233 = vector.broadcast %185 : vector<1x48xf32> to vector<2x48xf32>
    %234 = arith.addf %232, %233 : vector<2x48xf32>
    %c0_102 = arith.constant 0 : index
    %c0_103 = arith.constant 0 : index
    %235 = vector.load %arg13[%c0_102, %c0_103] : memref<48x48xf32, #tpu.memory_space<vmem>>, vector<48x48xf32>
    %cst_104 = arith.constant dense<0.000000e+00> : vector<2x48xf32>
    %236 = tpu.matmul %234, %235, %cst_104 {dimension_numbers = #tpu.dot_dimension_numbers<[1], [0], [0], [1], [0, 0, 1, 1], [], []>} : vector<2x48xf32>, vector<48x48xf32>, vector<2x48xf32> -> vector<2x48xf32>
    %237 = tpu.iota {dimensions = array<i32: 0>} : vector<2x10xi32>
    %238 = tpu.iota {dimensions = array<i32: 1>} : vector<2x10xi32>
    %c5_i32 = arith.constant 5 : i32
    %239 = vector.broadcast %c5_i32 : i32 to vector<2x10xi32>
    %240 = arith.muli %237, %239 : vector<2x10xi32>
    %241 = arith.cmpi sge, %238, %240 : vector<2x10xi32>
    %c1_i32_105 = arith.constant 1 : i32
    %242 = vector.broadcast %c1_i32_105 : i32 to vector<2x10xi32>
    %243 = arith.addi %237, %242 : vector<2x10xi32>
    %c5_i32_106 = arith.constant 5 : i32
    %244 = vector.broadcast %c5_i32_106 : i32 to vector<2x10xi32>
    %245 = arith.muli %243, %244 : vector<2x10xi32>
    %246 = arith.cmpi slt, %238, %245 : vector<2x10xi32>
    %247 = arith.andi %241, %246 : vector<2x10xi1>
    %c0_107 = arith.constant 0 : index
    %c0_108 = arith.constant 0 : index
    %248 = vector.load %arg16[%c0_107, %c0_108] : memref<1x48xf32, #tpu.memory_space<vmem>>, vector<1x48xf32>
    %249 = vector.extract_strided_slice %214 {offsets = [0, 0], sizes = [10, 16], strides = [1, 1]} : vector<10x96xf32> to vector<10x16xf32>
    %250 = vector.extract_strided_slice %214 {offsets = [0, 48], sizes = [10, 16], strides = [1, 1]} : vector<10x96xf32> to vector<10x16xf32>
    %251 = vector.extract_strided_slice %236 {offsets = [0, 0], sizes = [2, 16], strides = [1, 1]} : vector<2x48xf32> to vector<2x16xf32>
    %cst_109 = arith.constant dense<0.000000e+00> : vector<2x10xf32>
    %252 = tpu.matmul %251, %249, %cst_109 {dimension_numbers = #tpu.dot_dimension_numbers<[1], [1], [0], [0], [0, 0, 1, 0], [], []>} : vector<2x16xf32>, vector<10x16xf32>, vector<2x10xf32> -> vector<2x10xf32>
    %cst_110 = arith.constant -1.000000e+30 : f32
    %253 = vector.broadcast %cst_110 : f32 to vector<2x10xf32>
    %254 = arith.select %247, %252, %253 : vector<2x10xi1>, vector<2x10xf32>
    %cst_111 = arith.constant dense<0xFF800000> : vector<2xf32>
    %255 = vector.multi_reduction <maximumf>, %254, %cst_111 [1] : vector<2x10xf32> to vector<2xf32>
    %256 = vector.shape_cast %255 : vector<2xf32> to vector<2x1xf32>
    %257 = vector.broadcast %256 : vector<2x1xf32> to vector<2x10xf32>
    %258 = arith.subf %254, %257 : vector<2x10xf32>
    %259 = math.exp %258 : vector<2x10xf32>
    %cst_112 = arith.constant dense<0.000000e+00> : vector<2xf32>
    %260 = vector.multi_reduction <add>, %259, %cst_112 [1] : vector<2x10xf32> to vector<2xf32>
    %261 = vector.shape_cast %260 : vector<2xf32> to vector<2x1xf32>
    %262 = tpu.reciprocal %261 {approx = true} : vector<2x1xf32> -> vector<2x1xf32>
    %263 = vector.broadcast %262 : vector<2x1xf32> to vector<2x10xf32>
    %264 = arith.mulf %259, %263 : vector<2x10xf32>
    %cst_113 = arith.constant dense<0.000000e+00> : vector<2x16xf32>
    %265 = tpu.matmul %264, %250, %cst_113 {dimension_numbers = #tpu.dot_dimension_numbers<[1], [0], [0], [1], [0, 0, 1, 1], [], []>} : vector<2x10xf32>, vector<10x16xf32>, vector<2x16xf32> -> vector<2x16xf32>
    %266 = vector.extract_strided_slice %186 {offsets = [0, 0], sizes = [16, 48], strides = [1, 1]} : vector<48x48xf32> to vector<16x48xf32>
    %cst_114 = arith.constant dense<0.000000e+00> : vector<2x48xf32>
    %267 = tpu.matmul %265, %266, %cst_114 {dimension_numbers = #tpu.dot_dimension_numbers<[1], [0], [0], [1], [0, 0, 1, 1], [], []>} : vector<2x16xf32>, vector<16x48xf32>, vector<2x48xf32> -> vector<2x48xf32>
    %268 = vector.broadcast %248 : vector<1x48xf32> to vector<2x48xf32>
    %269 = arith.addf %268, %267 : vector<2x48xf32>
    %270 = vector.extract_strided_slice %214 {offsets = [0, 16], sizes = [10, 16], strides = [1, 1]} : vector<10x96xf32> to vector<10x16xf32>
    %271 = vector.extract_strided_slice %214 {offsets = [0, 64], sizes = [10, 16], strides = [1, 1]} : vector<10x96xf32> to vector<10x16xf32>
    %272 = vector.extract_strided_slice %236 {offsets = [0, 16], sizes = [2, 16], strides = [1, 1]} : vector<2x48xf32> to vector<2x16xf32>
    %cst_115 = arith.constant dense<0.000000e+00> : vector<2x10xf32>
    %273 = tpu.matmul %272, %270, %cst_115 {dimension_numbers = #tpu.dot_dimension_numbers<[1], [1], [0], [0], [0, 0, 1, 0], [], []>} : vector<2x16xf32>, vector<10x16xf32>, vector<2x10xf32> -> vector<2x10xf32>
    %cst_116 = arith.constant -1.000000e+30 : f32
    %274 = vector.broadcast %cst_116 : f32 to vector<2x10xf32>
    %275 = arith.select %247, %273, %274 : vector<2x10xi1>, vector<2x10xf32>
    %cst_117 = arith.constant dense<0xFF800000> : vector<2xf32>
    %276 = vector.multi_reduction <maximumf>, %275, %cst_117 [1] : vector<2x10xf32> to vector<2xf32>
    %277 = vector.shape_cast %276 : vector<2xf32> to vector<2x1xf32>
    %278 = vector.broadcast %277 : vector<2x1xf32> to vector<2x10xf32>
    %279 = arith.subf %275, %278 : vector<2x10xf32>
    %280 = math.exp %279 : vector<2x10xf32>
    %cst_118 = arith.constant dense<0.000000e+00> : vector<2xf32>
    %281 = vector.multi_reduction <add>, %280, %cst_118 [1] : vector<2x10xf32> to vector<2xf32>
    %282 = vector.shape_cast %281 : vector<2xf32> to vector<2x1xf32>
    %283 = tpu.reciprocal %282 {approx = true} : vector<2x1xf32> -> vector<2x1xf32>
    %284 = vector.broadcast %283 : vector<2x1xf32> to vector<2x10xf32>
    %285 = arith.mulf %280, %284 : vector<2x10xf32>
    %cst_119 = arith.constant dense<0.000000e+00> : vector<2x16xf32>
    %286 = tpu.matmul %285, %271, %cst_119 {dimension_numbers = #tpu.dot_dimension_numbers<[1], [0], [0], [1], [0, 0, 1, 1], [], []>} : vector<2x10xf32>, vector<10x16xf32>, vector<2x16xf32> -> vector<2x16xf32>
    %287 = vector.extract_strided_slice %186 {offsets = [16, 0], sizes = [16, 48], strides = [1, 1]} : vector<48x48xf32> to vector<16x48xf32>
    %cst_120 = arith.constant dense<0.000000e+00> : vector<2x48xf32>
    %288 = tpu.matmul %286, %287, %cst_120 {dimension_numbers = #tpu.dot_dimension_numbers<[1], [0], [0], [1], [0, 0, 1, 1], [], []>} : vector<2x16xf32>, vector<16x48xf32>, vector<2x48xf32> -> vector<2x48xf32>
    %289 = arith.addf %269, %288 : vector<2x48xf32>
    %290 = vector.extract_strided_slice %214 {offsets = [0, 32], sizes = [10, 16], strides = [1, 1]} : vector<10x96xf32> to vector<10x16xf32>
    %291 = vector.extract_strided_slice %214 {offsets = [0, 80], sizes = [10, 16], strides = [1, 1]} : vector<10x96xf32> to vector<10x16xf32>
    %292 = vector.extract_strided_slice %236 {offsets = [0, 32], sizes = [2, 16], strides = [1, 1]} : vector<2x48xf32> to vector<2x16xf32>
    %cst_121 = arith.constant dense<0.000000e+00> : vector<2x10xf32>
    %293 = tpu.matmul %292, %290, %cst_121 {dimension_numbers = #tpu.dot_dimension_numbers<[1], [1], [0], [0], [0, 0, 1, 0], [], []>} : vector<2x16xf32>, vector<10x16xf32>, vector<2x10xf32> -> vector<2x10xf32>
    %cst_122 = arith.constant -1.000000e+30 : f32
    %294 = vector.broadcast %cst_122 : f32 to vector<2x10xf32>
    %295 = arith.select %247, %293, %294 : vector<2x10xi1>, vector<2x10xf32>
    %cst_123 = arith.constant dense<0xFF800000> : vector<2xf32>
    %296 = vector.multi_reduction <maximumf>, %295, %cst_123 [1] : vector<2x10xf32> to vector<2xf32>
    %297 = vector.shape_cast %296 : vector<2xf32> to vector<2x1xf32>
    %298 = vector.broadcast %297 : vector<2x1xf32> to vector<2x10xf32>
    %299 = arith.subf %295, %298 : vector<2x10xf32>
    %300 = math.exp %299 : vector<2x10xf32>
    %cst_124 = arith.constant dense<0.000000e+00> : vector<2xf32>
    %301 = vector.multi_reduction <add>, %300, %cst_124 [1] : vector<2x10xf32> to vector<2xf32>
    %302 = vector.shape_cast %301 : vector<2xf32> to vector<2x1xf32>
    %303 = tpu.reciprocal %302 {approx = true} : vector<2x1xf32> -> vector<2x1xf32>
    %304 = vector.broadcast %303 : vector<2x1xf32> to vector<2x10xf32>
    %305 = arith.mulf %300, %304 : vector<2x10xf32>
    %cst_125 = arith.constant dense<0.000000e+00> : vector<2x16xf32>
    %306 = tpu.matmul %305, %291, %cst_125 {dimension_numbers = #tpu.dot_dimension_numbers<[1], [0], [0], [1], [0, 0, 1, 1], [], []>} : vector<2x10xf32>, vector<10x16xf32>, vector<2x16xf32> -> vector<2x16xf32>
    %307 = vector.extract_strided_slice %186 {offsets = [32, 0], sizes = [16, 48], strides = [1, 1]} : vector<48x48xf32> to vector<16x48xf32>
    %cst_126 = arith.constant dense<0.000000e+00> : vector<2x48xf32>
    %308 = tpu.matmul %306, %307, %cst_126 {dimension_numbers = #tpu.dot_dimension_numbers<[1], [0], [0], [1], [0, 0, 1, 1], [], []>} : vector<2x16xf32>, vector<16x48xf32>, vector<2x48xf32> -> vector<2x48xf32>
    %309 = arith.addf %289, %308 : vector<2x48xf32>
    %310 = arith.addf %4, %309 : vector<2x48xf32>
    %c0_127 = arith.constant 0 : index
    %c0_128 = arith.constant 0 : index
    %311 = vector.load %arg17[%c0_127, %c0_128] : memref<1x48xf32, #tpu.memory_space<vmem>>, vector<1x48xf32>
    %c0_129 = arith.constant 0 : index
    %c0_130 = arith.constant 0 : index
    %312 = vector.load %arg18[%c0_129, %c0_130] : memref<1x48xf32, #tpu.memory_space<vmem>>, vector<1x48xf32>
    %cst_131 = arith.constant dense<0.000000e+00> : vector<18xf32>
    %313 = vector.multi_reduction <add>, %0, %cst_131 [1] : vector<18x48xf32> to vector<18xf32>
    %314 = vector.shape_cast %313 : vector<18xf32> to vector<18x1xf32>
    %cst_132 = arith.constant 4.800000e+01 : f32
    %315 = vector.broadcast %cst_132 : f32 to vector<18x1xf32>
    %316 = arith.divf %314, %315 : vector<18x1xf32>
    %317 = vector.broadcast %316 : vector<18x1xf32> to vector<18x48xf32>
    %318 = arith.subf %0, %317 : vector<18x48xf32>
    %319 = arith.mulf %318, %318 : vector<18x48xf32>
    %cst_133 = arith.constant dense<0.000000e+00> : vector<18xf32>
    %320 = vector.multi_reduction <add>, %319, %cst_133 [1] : vector<18x48xf32> to vector<18xf32>
    %321 = vector.shape_cast %320 : vector<18xf32> to vector<18x1xf32>
    %cst_134 = arith.constant 4.800000e+01 : f32
    %322 = vector.broadcast %cst_134 : f32 to vector<18x1xf32>
    %323 = arith.divf %321, %322 : vector<18x1xf32>
    %cst_135 = arith.constant 9.99999997E-7 : f32
    %324 = vector.broadcast %cst_135 : f32 to vector<18x1xf32>
    %325 = arith.addf %323, %324 : vector<18x1xf32>
    %326 = math.rsqrt %325 : vector<18x1xf32>
    %327 = vector.broadcast %326 : vector<18x1xf32> to vector<18x48xf32>
    %328 = arith.mulf %318, %327 : vector<18x48xf32>
    %329 = vector.broadcast %311 : vector<1x48xf32> to vector<18x48xf32>
    %330 = arith.mulf %328, %329 : vector<18x48xf32>
    %331 = vector.broadcast %312 : vector<1x48xf32> to vector<18x48xf32>
    %332 = arith.addf %330, %331 : vector<18x48xf32>
    %c0_136 = arith.constant 0 : index
    %c0_137 = arith.constant 0 : index
    %333 = vector.load %arg19[%c0_136, %c0_137] : memref<18x48xf32, #tpu.memory_space<vmem>>, vector<18x48xf32>
    tpu.vector_store %arg19[%c0_136, %c0_137], %332 {strides = array<i32>} : memref<18x48xf32, #tpu.memory_space<vmem>>, vector<18x48xf32>,
    %c0_138 = arith.constant 0 : index
    %c0_139 = arith.constant 0 : index
    %334 = vector.load %arg17[%c0_138, %c0_139] : memref<1x48xf32, #tpu.memory_space<vmem>>, vector<1x48xf32>
    %c0_140 = arith.constant 0 : index
    %c0_141 = arith.constant 0 : index
    %335 = vector.load %arg18[%c0_140, %c0_141] : memref<1x48xf32, #tpu.memory_space<vmem>>, vector<1x48xf32>
    %cst_142 = arith.constant dense<0.000000e+00> : vector<2xf32>
    %336 = vector.multi_reduction <add>, %310, %cst_142 [1] : vector<2x48xf32> to vector<2xf32>
    %337 = vector.shape_cast %336 : vector<2xf32> to vector<2x1xf32>
    %cst_143 = arith.constant 4.800000e+01 : f32
    %338 = vector.broadcast %cst_143 : f32 to vector<2x1xf32>
    %339 = arith.divf %337, %338 : vector<2x1xf32>
    %340 = vector.broadcast %339 : vector<2x1xf32> to vector<2x48xf32>
    %341 = arith.subf %310, %340 : vector<2x48xf32>
    %342 = arith.mulf %341, %341 : vector<2x48xf32>
    %cst_144 = arith.constant dense<0.000000e+00> : vector<2xf32>
    %343 = vector.multi_reduction <add>, %342, %cst_144 [1] : vector<2x48xf32> to vector<2xf32>
    %344 = vector.shape_cast %343 : vector<2xf32> to vector<2x1xf32>
    %cst_145 = arith.constant 4.800000e+01 : f32
    %345 = vector.broadcast %cst_145 : f32 to vector<2x1xf32>
    %346 = arith.divf %344, %345 : vector<2x1xf32>
    %cst_146 = arith.constant 9.99999997E-7 : f32
    %347 = vector.broadcast %cst_146 : f32 to vector<2x1xf32>
    %348 = arith.addf %346, %347 : vector<2x1xf32>
    %349 = math.rsqrt %348 : vector<2x1xf32>
    %350 = vector.broadcast %349 : vector<2x1xf32> to vector<2x48xf32>
    %351 = arith.mulf %341, %350 : vector<2x48xf32>
    %352 = vector.broadcast %334 : vector<1x48xf32> to vector<2x48xf32>
    %353 = arith.mulf %351, %352 : vector<2x48xf32>
    %354 = vector.broadcast %335 : vector<1x48xf32> to vector<2x48xf32>
    %355 = arith.addf %353, %354 : vector<2x48xf32>
    %356 = vector.extract_strided_slice %355 {offsets = [0, 0], sizes = [1, 48], strides = [1, 1]} : vector<2x48xf32> to vector<1x48xf32>
    %c0_147 = arith.constant 0 : index
    %c0_148 = arith.constant 0 : index
    %357 = vector.load %arg19[%c0_147, %c0_148] : memref<18x48xf32, #tpu.memory_space<vmem>>, vector<1x48xf32>
    tpu.vector_store %arg19[%c0_147, %c0_148], %356 {strides = array<i32>} : memref<18x48xf32, #tpu.memory_space<vmem>>, vector<1x48xf32>,
    %358 = vector.extract_strided_slice %355 {offsets = [1, 0], sizes = [1, 48], strides = [1, 1]} : vector<2x48xf32> to vector<1x48xf32>
    %c9_149 = arith.constant 9 : index
    %c0_150 = arith.constant 0 : index
    %359 = vector.load %arg19[%c9_149, %c0_150] : memref<18x48xf32, #tpu.memory_space<vmem>>, vector<1x48xf32>
    tpu.vector_store %arg19[%c9_149, %c0_150], %358 {strides = array<i32>} : memref<18x48xf32, #tpu.memory_space<vmem>>, vector<1x48xf32>,
    return
  }
  func.func @transform_0(%arg0: i32) -> (i32, i32) {
    %c0_i32 = arith.constant 0 : i32
    %c0_i32_0 = arith.constant 0 : i32
    %c0_i32_1 = arith.constant 0 : i32
    return %c0_i32, %c0_i32_0 : i32, i32
  }
  func.func @transform_1(%arg0: i32) -> (i32, i32) {
    %c0_i32 = arith.constant 0 : i32
    %c0_i32_0 = arith.constant 0 : i32
    %c0_i32_1 = arith.constant 0 : i32
    return %c0_i32, %c0_i32_0 : i32, i32
  }
  func.func @transform_2(%arg0: i32) -> (i32, i32) {
    %c0_i32 = arith.constant 0 : i32
    %c0_i32_0 = arith.constant 0 : i32
    %c0_i32_1 = arith.constant 0 : i32
    return %c0_i32, %c0_i32_0 : i32, i32
  }
  func.func @transform_3(%arg0: i32) -> (i32, i32) {
    %c0_i32 = arith.constant 0 : i32
    %c0_i32_0 = arith.constant 0 : i32
    %c0_i32_1 = arith.constant 0 : i32
    return %c0_i32, %c0_i32_0 : i32, i32
  }
  func.func @transform_4(%arg0: i32) -> (i32, i32) {
    %c0_i32 = arith.constant 0 : i32
    %c0_i32_0 = arith.constant 0 : i32
    %c0_i32_1 = arith.constant 0 : i32
    return %c0_i32, %c0_i32_0 : i32, i32
  }
  func.func @transform_5(%arg0: i32) -> (i32, i32) {
    %c0_i32 = arith.constant 0 : i32
    %c0_i32_0 = arith.constant 0 : i32
    %c0_i32_1 = arith.constant 0 : i32
    return %c0_i32, %c0_i32_0 : i32, i32
  }
  func.func @transform_6(%arg0: i32) -> (i32, i32) {
    %c0_i32 = arith.constant 0 : i32
    %c0_i32_0 = arith.constant 0 : i32
    %c0_i32_1 = arith.constant 0 : i32
    return %c0_i32, %c0_i32_0 : i32, i32
  }
  func.func @transform_7(%arg0: i32) -> (i32, i32) {
    %c0_i32 = arith.constant 0 : i32
    %c0_i32_0 = arith.constant 0 : i32
    %c0_i32_1 = arith.constant 0 : i32
    return %c0_i32, %c0_i32_0 : i32, i32
  }
  func.func @transform_8(%arg0: i32) -> (i32, i32) {
    %c0_i32 = arith.constant 0 : i32
    %c0_i32_0 = arith.constant 0 : i32
    %c0_i32_1 = arith.constant 0 : i32
    return %c0_i32, %c0_i32_0 : i32, i32
  }
  func.func @transform_9(%arg0: i32) -> (i32, i32) {
    %c0_i32 = arith.constant 0 : i32
    %c0_i32_0 = arith.constant 0 : i32
    %c0_i32_1 = arith.constant 0 : i32
    return %c0_i32, %c0_i32_0 : i32, i32
  }
  func.func @transform_10(%arg0: i32) -> (i32, i32) {
    %c0_i32 = arith.constant 0 : i32
    %c0_i32_0 = arith.constant 0 : i32
    %c0_i32_1 = arith.constant 0 : i32
    return %c0_i32, %c0_i32_0 : i32, i32
  }
  func.func @transform_11(%arg0: i32) -> (i32, i32) {
    %c0_i32 = arith.constant 0 : i32
    %c0_i32_0 = arith.constant 0 : i32
    %c0_i32_1 = arith.constant 0 : i32
    return %c0_i32, %c0_i32_0 : i32, i32
  }
  func.func @transform_12(%arg0: i32) -> (i32, i32) {
    %c0_i32 = arith.constant 0 : i32
    %c0_i32_0 = arith.constant 0 : i32
    %c0_i32_1 = arith.constant 0 : i32
    return %c0_i32, %c0_i32_0 : i32, i32
  }
  func.func @transform_13(%arg0: i32) -> (i32, i32) {
    %c0_i32 = arith.constant 0 : i32
    %c0_i32_0 = arith.constant 0 : i32
    %c0_i32_1 = arith.constant 0 : i32
    return %c0_i32, %c0_i32_0 : i32, i32
  }
  func.func @transform_14(%arg0: i32) -> (i32, i32) {
    %c0_i32 = arith.constant 0 : i32
    %c0_i32_0 = arith.constant 0 : i32
    %c0_i32_1 = arith.constant 0 : i32
    return %c0_i32, %c0_i32_0 : i32, i32
  }
  func.func @transform_15(%arg0: i32) -> (i32, i32) {
    %c0_i32 = arith.constant 0 : i32
    %c0_i32_0 = arith.constant 0 : i32
    %c0_i32_1 = arith.constant 0 : i32
    return %c0_i32, %c0_i32_0 : i32, i32
  }
  func.func @transform_16(%arg0: i32) -> (i32, i32) {
    %c0_i32 = arith.constant 0 : i32
    %c0_i32_0 = arith.constant 0 : i32
    %c0_i32_1 = arith.constant 0 : i32
    return %c0_i32, %c0_i32_0 : i32, i32
  }
  func.func @transform_17(%arg0: i32) -> (i32, i32) {
    %c0_i32 = arith.constant 0 : i32
    %c0_i32_0 = arith.constant 0 : i32
    %c0_i32_1 = arith.constant 0 : i32
    return %c0_i32, %c0_i32_0 : i32, i32
  }
  func.func @transform_18(%arg0: i32) -> (i32, i32) {
    %c0_i32 = arith.constant 0 : i32
    %c0_i32_0 = arith.constant 0 : i32
    %c0_i32_1 = arith.constant 0 : i32
    return %c0_i32, %c0_i32_0 : i32, i32
  }
  func.func @transform_19(%arg0: i32) -> (i32, i32) {
    %c0_i32 = arith.constant 0 : i32
    %c0_i32_0 = arith.constant 0 : i32
    %c0_i32_1 = arith.constant 0 : i32
    return %c0_i32, %c0_i32_0 : i32, i32
  }
}

</mosaic_0001>

<llo_original>
// kernel: multi_scale_encoder_forward.1
$region0: #{multi_scale_encoder_forward.1}
  #allocation0 [shape = 'u32[]', space=smem, size = 0x4, offset = 0x4, fixed_abs, tag = 'smem constant byte address 0x4 - core index']
  #allocation1 [shape = 'u32[144,128]{1,0:T(1,128)}', space=vmem, size = 0x12000, scoped, tag = 'internal scratch']
  #allocation2 [shape = 'f32[18,48]{1,0:T(8,128)}', space=vmem, size = 0x3000, scoped, tag = 'scratch operand']
  %s0 = inlined_call_operand.vmem [shape: f32[18,48], index: 0, kind: input, shape index: {}]
  %s1 = inlined_call_operand.vmem [shape: f32[10,48], index: 1, kind: input, shape index: {}]
  %s2 = inlined_call_operand.vmem [shape: f32[1,48], index: 2, kind: input, shape index: {}]
  %s3 = inlined_call_operand.vmem [shape: f32[1,48], index: 3, kind: input, shape index: {}]
  %s4 = inlined_call_operand.vmem [shape: f32[48,48], index: 4, kind: input, shape index: {}]
  %s5 = inlined_call_operand.vmem [shape: f32[48,96], index: 5, kind: input, shape index: {}]
  %s6 = inlined_call_operand.vmem [shape: f32[48,48], index: 6, kind: input, shape index: {}]
  %s7 = inlined_call_operand.vmem [shape: f32[1,48], index: 7, kind: input, shape index: {}]
  %s8 = inlined_call_operand.vmem [shape: f32[1,48], index: 8, kind: input, shape index: {}]
  %s9 = inlined_call_operand.vmem [shape: f32[1,48], index: 9, kind: input, shape index: {}]
  %s10 = inlined_call_operand.vmem [shape: f32[1,48], index: 10, kind: input, shape index: {}]
  %s11 = inlined_call_operand.vmem [shape: f32[1,48], index: 11, kind: input, shape index: {}]
  %s12 = inlined_call_operand.hbm [shape: f32[48,48], index: 12, kind: input, shape index: {}]
  %s13 = inlined_call_operand.hbm [shape: f32[48,96], index: 13, kind: input, shape index: {}]
  %s14 = inlined_call_operand.hbm [shape: f32[48,48], index: 14, kind: input, shape index: {}]
  %s15 = inlined_call_operand.vmem [shape: f32[1,48], index: 15, kind: input, shape index: {}]
  %s16 = inlined_call_operand.vmem [shape: f32[1,48], index: 16, kind: input, shape index: {}]
  %s17 = inlined_call_operand.vmem [shape: f32[1,48], index: 17, kind: input, shape index: {}]
  %s18 = inlined_call_operand.vmem [shape: f32[18,48], index: 18, kind: output, shape index: {0}]
  %s19 = inlined_call_operand.vmem [shape: f32[10,48], index: 19, kind: output, shape index: {1}]
  %20 = xla_tuple %s18, %s19
  %s21 = sld [smem:[#allocation0]]
  $region102: #{multi_scale_encoder_forward.1} parent=0
    _
  %s23 = ssub.s32 1, %s21
  %s24 = scalar_select 0, %s23, %s21
  $region1: #{multi_scale_encoder_forward.1} parent=0
    #allocation3 [shape = 'u8[24576]{0}', space=vmem, size = 0x6000, scoped, tag = 'input window, operand 12, single buffered']
    #allocation4 [shape = 's32[1]{0}', space=sflag, size = 0x4, scoped, tag = 'scoped memory for multi_scale_encoder_forward.1']
    #allocation5 [shape = 'u8[24576]{0}', space=vmem, size = 0x6000, scoped, tag = 'input window, operand 13, single buffered']
    #allocation6 [shape = 's32[1]{0}', space=sflag, size = 0x4, scoped, tag = 'scoped memory for multi_scale_encoder_forward.1']
    #allocation7 [shape = 'u8[24576]{0}', space=vmem, size = 0x6000, scoped, tag = 'input window, operand 14, single buffered']
    %25 = vsyncpa [#allocation4], 0
    %26 = vsyncpa [#allocation6], 0
    // Predicated region
    $region2: #{multi_scale_encoder_forward.1} parent=1 // pred_check
      _
    $region3: #{multi_scale_encoder_forward.1} parent=1 // pred_check_branch
      %28 = sbr.rel (0) target = $region5
    $region4: #{multi_scale_encoder_forward.1} parent=1 // pred_region
      _
    $region5: #{multi_scale_encoder_forward.1} parent=1 // pred_fallthru
      _
    // Predicated region
    $region6: #{multi_scale_encoder_forward.1} parent=1 // pred_check
      _
    $region7: #{multi_scale_encoder_forward.1} parent=1 // pred_check_branch
      %30 = sbr.rel (0) target = $region9
    $region8: #{multi_scale_encoder_forward.1} parent=1 // pred_region
      _
    $region9: #{multi_scale_encoder_forward.1} parent=1 // pred_fallthru
      _
    // Predicated region
    $region10: #{multi_scale_encoder_forward.1} parent=1 // pred_check
      _
    $region11: #{multi_scale_encoder_forward.1} parent=1 // pred_check_branch
      %32 = sbr.rel (0) target = $region13
    $region12: #{multi_scale_encoder_forward.1} parent=1 // pred_region
      _
    $region13: #{multi_scale_encoder_forward.1} parent=1 // pred_fallthru
      _
    // Predicated region
    $region14: #{multi_scale_encoder_forward.1} parent=1 // pred_check
      _
    $region15: #{multi_scale_encoder_forward.1} parent=1 // pred_check_branch
      %34 = sbr.rel (0) target = $region17
    $region16: #{multi_scale_encoder_forward.1} parent=1 // pred_region
      _
    $region17: #{multi_scale_encoder_forward.1} parent=1 // pred_fallthru
      _
    // Predicated region
    $region18: #{multi_scale_encoder_forward.1} parent=1 // pred_check
      _
    $region19: #{multi_scale_encoder_forward.1} parent=1 // pred_check_branch
      %36 = sbr.rel (0) target = $region21
    $region20: #{multi_scale_encoder_forward.1} parent=1 // pred_region
      _
    $region21: #{multi_scale_encoder_forward.1} parent=1 // pred_fallthru
      _
    // Predicated region
    $region22: #{multi_scale_encoder_forward.1} parent=1 // pred_check
      _
    $region23: #{multi_scale_encoder_forward.1} parent=1 // pred_check_branch
      %38 = sbr.rel (0) target = $region25
    $region24: #{multi_scale_encoder_forward.1} parent=1 // pred_region
      _
    $region25: #{multi_scale_encoder_forward.1} parent=1 // pred_fallthru
      _
    // Predicated region
    $region26: #{multi_scale_encoder_forward.1} parent=1 // pred_check
      _
    $region27: #{multi_scale_encoder_forward.1} parent=1 // pred_check_branch
      %40 = sbr.rel (0) target = $region29
    $region28: #{multi_scale_encoder_forward.1} parent=1 // pred_region
      _
    $region29: #{multi_scale_encoder_forward.1} parent=1 // pred_fallthru
      _
    // Predicated region
    $region30: #{multi_scale_encoder_forward.1} parent=1 // pred_check
      _
    $region31: #{multi_scale_encoder_forward.1} parent=1 // pred_check_branch
      %42 = sbr.rel (0) target = $region33
    $region32: #{multi_scale_encoder_forward.1} parent=1 // pred_region
      _
    $region33: #{multi_scale_encoder_forward.1} parent=1 // pred_fallthru
      _
    // Predicated region
    $region34: #{multi_scale_encoder_forward.1} parent=1 // pred_check
      _
    $region35: #{multi_scale_encoder_forward.1} parent=1 // pred_check_branch
      %44 = sbr.rel (0) target = $region37
    $region36: #{multi_scale_encoder_forward.1} parent=1 // pred_region
      _
    $region37: #{multi_scale_encoder_forward.1} parent=1 // pred_fallthru
      _
    // Predicated region
    $region38: #{multi_scale_encoder_forward.1} parent=1 // pred_check
      _
    $region39: #{multi_scale_encoder_forward.1} parent=1 // pred_check_branch
      %46 = sbr.rel (0) target = $region41
    $region40: #{multi_scale_encoder_forward.1} parent=1 // pred_region
      _
    $region41: #{multi_scale_encoder_forward.1} parent=1 // pred_fallthru
      _
    // Predicated region
    $region42: #{multi_scale_encoder_forward.1} parent=1 // pred_check
      _
    $region43: #{multi_scale_encoder_forward.1} parent=1 // pred_check_branch
      %48 = sbr.rel (0) target = $region45
    $region44: #{multi_scale_encoder_forward.1} parent=1 // pred_region
      _
    $region45: #{multi_scale_encoder_forward.1} parent=1 // pred_fallthru
      _
    // Predicated region
    $region46: #{multi_scale_encoder_forward.1} parent=1 // pred_check
      _
    $region47: #{multi_scale_encoder_forward.1} parent=1 // pred_check_branch
      %50 = sbr.rel (0) target = $region49
    $region48: #{multi_scale_encoder_forward.1} parent=1 // pred_region
      _
    $region49: #{multi_scale_encoder_forward.1} parent=1 // pred_fallthru
      _
    // Predicated region
    $region50: #{multi_scale_encoder_forward.1} parent=1 // pred_check
      _
    $region51: #{multi_scale_encoder_forward.1} parent=1 // pred_check_branch
      %52 = sbr.rel (0) target = $region53
    $region52: #{multi_scale_encoder_forward.1} parent=1 // pred_region
      %s54 = ssub.s32 768, 768
      %55 = vsyncadd [#allocation4], %s54
      %s56 = sshll.u32 [#allocation3], 4
      %s57 = int_to_ptr.vmem [resolvable:$true] %s56
      %62 = dma.hbm_to_vmem [thread:$0]  %s12, 768, %s57, [#allocation4], 128, 128, 8
    $region53: #{multi_scale_encoder_forward.1} parent=1 // pred_fallthru
      _
    // Predicated region
    $region54: #{multi_scale_encoder_forward.1} parent=1 // pred_check
      _
    $region55: #{multi_scale_encoder_forward.1} parent=1 // pred_check_branch
      %64 = sbr.rel (0) target = $region57
    $region56: #{multi_scale_encoder_forward.1} parent=1 // pred_region
      %s66 = ssub.s32 768, 768
      %67 = vsyncadd [#allocation6], %s66
      %s68 = sshll.u32 [#allocation5], 4
      %s69 = int_to_ptr.vmem [resolvable:$true] %s68
      %74 = dma.hbm_to_vmem [thread:$0]  %s13, 768, %s69, [#allocation6], 128, 128, 8
    $region57: #{multi_scale_encoder_forward.1} parent=1 // pred_fallthru
      _
    // Predicated region
    $region58: #{multi_scale_encoder_forward.1} parent=1 // pred_check
      _
    $region59: #{multi_scale_encoder_forward.1} parent=1 // pred_check_branch
      %76 = sbr.rel (0) target = $region61
    $region60: #{multi_scale_encoder_forward.1} parent=1 // pred_region
      %s78 = ssub.s32 768, 768
      %79 = vsyncadd [#allocation6], %s78
      %s80 = sshll.u32 [#allocation7], 4
      %s81 = int_to_ptr.vmem [resolvable:$true] %s80
      %86 = dma.hbm_to_vmem [thread:$0]  %s14, 768, %s81, [#allocation6], 128, 128, 8
    $region61: #{multi_scale_encoder_forward.1} parent=1 // pred_fallthru
      _
    // Predicated region
    $region62: #{multi_scale_encoder_forward.1} parent=1 // pred_check
      _
    $region63: #{multi_scale_encoder_forward.1} parent=1 // pred_check_branch
      %88 = sbr.rel (0) target = $region65
    $region64: #{multi_scale_encoder_forward.1} parent=1 // pred_region
      _
    $region65: #{multi_scale_encoder_forward.1} parent=1 // pred_fallthru
      _
    // Predicated region
    $region66: #{multi_scale_encoder_forward.1} parent=1 // pred_check
      _
    $region67: #{multi_scale_encoder_forward.1} parent=1 // pred_check_branch
      %90 = sbr.rel (0) target = $region69
    $region68: #{multi_scale_encoder_forward.1} parent=1 // pred_region
      _
    $region69: #{multi_scale_encoder_forward.1} parent=1 // pred_fallthru
      _
    // Predicated region
    $region70: #{multi_scale_encoder_forward.1} parent=1 // pred_check
      _
    $region71: #{multi_scale_encoder_forward.1} parent=1 // pred_check_branch
      %92 = sbr.rel (0) target = $region73
    $region72: #{multi_scale_encoder_forward.1} parent=1 // pred_region
      _
    $region73: #{multi_scale_encoder_forward.1} parent=1 // pred_fallthru
      _
    // Predicated region
    $region74: #{multi_scale_encoder_forward.1} parent=1 // pred_check
      _
    $region75: #{multi_scale_encoder_forward.1} parent=1 // pred_check_branch
      %94 = sbr.rel (0) target = $region77
    $region76: #{multi_scale_encoder_forward.1} parent=1 // pred_region
      %95 = dma.done [#allocation4], 768
    $region77: #{multi_scale_encoder_forward.1} parent=1 // pred_fallthru
      _
    // Predicated region
    $region78: #{multi_scale_encoder_forward.1} parent=1 // pred_check
      _
    $region79: #{multi_scale_encoder_forward.1} parent=1 // pred_check_branch
      %97 = sbr.rel (0) target = $region81
    $region80: #{multi_scale_encoder_forward.1} parent=1 // pred_region
      %98 = dma.done [#allocation6], 768
    $region81: #{multi_scale_encoder_forward.1} parent=1 // pred_fallthru
      _
    // Predicated region
    $region82: #{multi_scale_encoder_forward.1} parent=1 // pred_check
      _
    $region83: #{multi_scale_encoder_forward.1} parent=1 // pred_check_branch
      %100 = sbr.rel (0) target = $region85
    $region84: #{multi_scale_encoder_forward.1} parent=1 // pred_region
      %101 = dma.done [#allocation6], 768
    $region85: #{multi_scale_encoder_forward.1} parent=1 // pred_fallthru
      _
    %v102 = vld [vmem:[%s0] sm:$0xff]
    %v103 = vld [vmem:[%s0 + $0x8] sm:$0xff]
    %v104 = vld [vmem:[%s0 + $0x10] sm:$0x3]
    %v105 = vld [vmem:[%s1] sm:$0xff]
    %v106 = vld [vmem:[%s1 + $0x8] sm:$0x3]
    %vm107 = vcmask 1040384
    %v108 = vsel %vm107, %v102, %v103
    %v110 = vrot.slane %v105, 4
    %v112 = vsel %vm107, %v105, %v110
    %v113 = vld [vmem:[%s2] sm:$0x1]
    %v114 = vld [vmem:[%s3] sm:$0x1]
    %v115 = vld [vmem:[%s6] sm:$0xff]
    %v116 = vld [vmem:[%s6 + $0x8] sm:$0xff]
    %v117 = vld [vmem:[%s6 + $0x10] sm:$0xff]
    %v118 = vld [vmem:[%s6 + $0x18] sm:$0xff]
    %v119 = vld [vmem:[%s6 + $0x20] sm:$0xff]
    %v120 = vld [vmem:[%s6 + $0x28] sm:$0xff]
    %vm121 = vcmask 392192
    %122 = vst.msk [vmem:[#allocation2] sm:$0xff] %vm121, %v102
    %123 = vst.msk [vmem:[#allocation2 + $0x8] sm:$0xff] %vm121, %v103
    %vm124 = vcmask 386048
    %125 = vst.msk [vmem:[#allocation2 + $0x10] sm:$0x3] %vm124, %v104
    %vm126 = vcmask 385024
    %127 = vst.msk [vmem:[#allocation2] sm:$0x1] %vm126, %v112
    %vm128 = vcmask 386049
    %129 = vst.msk [vmem:[#allocation2 + $0x8] sm:$0x2] %vm128, %v112
    %v130 = vld [vmem:[#allocation2] sm:$0xff]
    %v131 = vld [vmem:[#allocation2 + $0x8] sm:$0xff]
    %v132 = vld [vmem:[#allocation2 + $0x10] sm:$0x3]
    %v133 = vsel %vm121, %v130, 0.0
    %134 = vadd.xlane.f32.xlu0 %v133
    %v135 = vpop.xlane.xlu0 %134
    %v136 = vsel %vm121, %v131, 0.0
    %137 = vadd.xlane.f32.xlu0 %v136
    %v138 = vpop.xlane.xlu0 %137
    %v139 = vsel %vm124, %v132, 0.0
    %140 = vadd.xlane.f32.xlu0 %v139
    %v141 = vpop.xlane.xlu0 %140
    %v142 = vrcp.pop 48.0
    %v143 = vmul.f32 %v135, %v142
    %v144 = vmul.f32 %v138, %v142
    %v145 = vmul.f32 %v141, %v142
    %v146 = vsub.f32 %v130, %v143
    %v147 = vsub.f32 %v131, %v144
    %v148 = vsub.f32 %v132, %v145
    %v149 = vmul.f32 %v146, %v146
    %v150 = vmul.f32 %v147, %v147
    %v151 = vmul.f32 %v148, %v148
    %v152 = vsel %vm121, %v149, 0.0
    %153 = vadd.xlane.f32.xlu0 %v152
    %v154 = vpop.xlane.xlu0 %153
    %v155 = vsel %vm121, %v150, 0.0
    %156 = vadd.xlane.f32.xlu0 %v155
    %v157 = vpop.xlane.xlu0 %156
    %v158 = vsel %vm124, %v151, 0.0
    %159 = vadd.xlane.f32.xlu0 %v158
    %v160 = vpop.xlane.xlu0 %159
    %v161 = vmul.f32 %v154, %v142
    %v162 = vmul.f32 %v157, %v142
    %v163 = vmul.f32 %v160, %v142
    %v164 = vadd.f32 %v161, 1e-05
    %v165 = vadd.f32 %v162, 1e-05
    %v166 = vadd.f32 %v163, 1e-05
    %v167 = vrsqrt.pop %v164
    %v168 = vrsqrt.pop %v165
    %v169 = vrsqrt.pop %v166
    %v170 = vmul.f32 %v146, %v167
    %v171 = vmul.f32 %v147, %v168
    %v172 = vmul.f32 %v148, %v169
    %v174 = vlaneseq
    %v175 = vshrl.u32 %v174, 7
    %v176 = vsub.s32 0, %v175
    %v177 = vrot.slane %v113, %v176
    %v179 = vmul.f32 %v170, %v177
    %v180 = vmul.f32 %v171, %v177
    %v181 = vmul.f32 %v172, %v177
    %v183 = vlaneseq
    %v184 = vshrl.u32 %v183, 7
    %v185 = vsub.s32 0, %v184
    %v186 = vrot.slane %v114, %v185
    %v188 = vadd.f32 %v179, %v186
    %v189 = vadd.f32 %v180, %v186
    %v190 = vadd.f32 %v181, %v186
    %v191 = vld [vmem:[%s5] sm:$0xff]
    %v192 = vld [vmem:[%s5 + $0x8] sm:$0xff]
    %v193 = vld [vmem:[%s5 + $0x10] sm:$0xff]
    %v194 = vld [vmem:[%s5 + $0x18] sm:$0xff]
    %v195 = vld [vmem:[%s5 + $0x20] sm:$0xff]
    %v196 = vld [vmem:[%s5 + $0x28] sm:$0xff]
    %v198 = vsel %vm121, %v188, 0
    %v201 = vsel %vm121, %v189, 0
    %v204 = vsel %vm121, %v190, 0
    %206 = vmatprep.subr.mxu0 0.0
    %207 = vmatpush1.msra.mxu0 0.0
    %208 = vmatprep.subr.mxu0 0.0
    %209 = vmatpush1.msra.mxu0 0.0
    %210 = vmatprep.subr.mxu0 0.0
    %211 = vmatpush1.msra.mxu0 0.0
    %212 = vmatprep.subr.mxu0 0.0
    %213 = vmatpush1.msra.mxu0 0.0
    %214 = vmatprep.subr.mxu0 0.0
    %215 = vmatpush1.msra.mxu0 0.0
    %216 = vmatprep.subr.mxu0 0.0
    %217 = vmatpush1.msra.mxu0 0.0
    %218 = vmatprep.subr.mxu0 0.0
    %219 = vmatpush1.msra.mxu0 0.0
    %220 = vmatprep.subr.mxu0 0.0
    %221 = vmatpush1.msra.mxu0 0.0
    %222 = vmatprep.subr.mxu0 0.0
    %223 = vmatpush1.msra.mxu0 0.0
    %224 = vmatprep.subr.mxu0 0.0
    %225 = vmatpush1.msra.mxu0 0.0
    %226 = vmatprep.subr.mxu0 0.0
    %227 = vmatpush1.msra.mxu0 %v196
    %228 = vmatprep.subr.mxu0 0.0
    %229 = vmatpush1.msra.mxu0 %v195
    %230 = vmatprep.subr.mxu0 0.0
    %231 = vmatpush1.msra.mxu0 %v194
    %232 = vmatprep.subr.mxu0 0.0
    %233 = vmatpush1.msra.mxu0 %v193
    %234 = vmatprep.subr.mxu0 0.0
    %235 = vmatpush1.msra.mxu0 %v192
    %236 = vmatprep.subr.mxu0 0.0
    %237 = vmatpush1.msra.mxu0 %v191
    %238 = vmatprep.subr.mxu0 0.0
    %239 = vmatpush2.msra.mxu0 0.0
    %240 = vmatprep.subr.mxu0 0.0
    %241 = vmatpush2.msra.mxu0 0.0
    %242 = vmatprep.subr.mxu0 0.0
    %243 = vmatpush2.msra.mxu0 0.0
    %244 = vmatprep.subr.mxu0 0.0
    %245 = vmatpush2.msra.mxu0 0.0
    %246 = vmatprep.subr.mxu0 0.0
    %247 = vmatpush2.msra.mxu0 0.0
    %248 = vmatprep.subr.mxu0 0.0
    %249 = vmatpush2.msra.mxu0 0.0
    %250 = vmatprep.subr.mxu0 0.0
    %251 = vmatpush2.msra.mxu0 0.0
    %252 = vmatprep.subr.mxu0 0.0
    %253 = vmatpush2.msra.mxu0 0.0
    %254 = vmatprep.subr.mxu0 0.0
    %255 = vmatpush2.msra.mxu0 0.0
    %256 = vmatprep.subr.mxu0 0.0
    %257 = vmatpush2.msra.mxu0 0.0
    %258 = vmatprep.subr.mxu0 0.0
    %259 = vmatpush2.msra.mxu0 0.0
    %260 = vmatprep.subr.mxu0 0.0
    %261 = vmatpush2.msra.mxu0 0.0
    %262 = vmatprep.subr.mxu0 0.0
    %263 = vmatpush2.msra.mxu0 0.0
    %264 = vmatprep.subr.mxu0 0.0
    %265 = vmatpush2.msra.mxu0 0.0
    %266 = vmatprep.subr.mxu0 0.0
    %267 = vmatpush2.msra.mxu0 0.0
    %268 = vmatprep.subr.mxu0 0.0
    %269 = vmatpush2.msra.mxu0 0.0
    %270 = vmatprep.mubr.f32.mxu0 0.0
    %271 = vmatmul.mubr.f32.gmra.mxu0 %v198
    %v272 = vpop.f32.mrf.mxu0
    %v273 = vadd.f32 0.0, %v272
    %v274 = vpop.f32.mrf.mxu0
    %275 = vmatprep.mubr.f32.mxu0 0.0
    %276 = vmatmul.mubr.f32.gmra.mxu0 %v201
    %v277 = vpop.f32.mrf.mxu0
    %v278 = vadd.f32 0.0, %v277
    %v279 = vpop.f32.mrf.mxu0
    %280 = vmatprep.mubr.f32.mxu0 0.0
    %281 = vmatmul.mubr.f32.gmra.mxu0 %v204
    %v282 = vpop.f32.mrf.mxu0
    %v283 = vadd.f32 0.0, %v282
    %v284 = vpop.f32.mrf.mxu0
    %285 = vdwg.mxu0
    %v286 = vsel %vm124, %v112, 0.0
    %287 = vadd.xlane.f32.xlu0 %v286
    %v288 = vpop.xlane.xlu0 %287
    %v289 = vmul.f32 %v288, %v142
    %v290 = vsub.f32 %v112, %v289
    %v291 = vmul.f32 %v290, %v290
    %v292 = vsel %vm124, %v291, 0.0
    %293 = vadd.xlane.f32.xlu0 %v292
    %v294 = vpop.xlane.xlu0 %293
    %v295 = vmul.f32 %v294, %v142
    %v296 = vadd.f32 %v295, 1e-05
    %v297 = vrsqrt.pop %v296
    %v298 = vmul.f32 %v290, %v297
    %v299 = vmul.f32 %v298, %v177
    %v300 = vadd.f32 %v299, %v186
    %v301 = vld [vmem:[%s4] sm:$0xff]
    %v302 = vld [vmem:[%s4 + $0x8] sm:$0xff]
    %v303 = vld [vmem:[%s4 + $0x10] sm:$0xff]
    %v304 = vld [vmem:[%s4 + $0x18] sm:$0xff]
    %v305 = vld [vmem:[%s4 + $0x20] sm:$0xff]
    %v306 = vld [vmem:[%s4 + $0x28] sm:$0xff]
    %v308 = vsel %vm121, %v300, 0
    %310 = vmatprep.subr.mxu0 0.0
    %311 = vmatpush1.msra.mxu0 0.0
    %312 = vmatprep.subr.mxu0 0.0
    %313 = vmatpush1.msra.mxu0 0.0
    %314 = vmatprep.subr.mxu0 0.0
    %315 = vmatpush1.msra.mxu0 0.0
    %316 = vmatprep.subr.mxu0 0.0
    %317 = vmatpush1.msra.mxu0 0.0
    %318 = vmatprep.subr.mxu0 0.0
    %319 = vmatpush1.msra.mxu0 0.0
    %320 = vmatprep.subr.mxu0 0.0
    %321 = vmatpush1.msra.mxu0 0.0
    %322 = vmatprep.subr.mxu0 0.0
    %323 = vmatpush1.msra.mxu0 0.0
    %324 = vmatprep.subr.mxu0 0.0
    %325 = vmatpush1.msra.mxu0 0.0
    %326 = vmatprep.subr.mxu0 0.0
    %327 = vmatpush1.msra.mxu0 0.0
    %328 = vmatprep.subr.mxu0 0.0
    %329 = vmatpush1.msra.mxu0 0.0
    %330 = vmatprep.subr.mxu0 0.0
    %331 = vmatpush1.msra.mxu0 %v306
    %332 = vmatprep.subr.mxu0 0.0
    %333 = vmatpush1.msra.mxu0 %v305
    %334 = vmatprep.subr.mxu0 0.0
    %335 = vmatpush1.msra.mxu0 %v304
    %336 = vmatprep.subr.mxu0 0.0
    %337 = vmatpush1.msra.mxu0 %v303
    %338 = vmatprep.subr.mxu0 0.0
    %339 = vmatpush1.msra.mxu0 %v302
    %340 = vmatprep.subr.mxu0 0.0
    %341 = vmatpush1.msra.mxu0 %v301
    %342 = vmatprep.subr.mxu0 0.0
    %343 = vmatpush2.msra.mxu0 0.0
    %344 = vmatprep.subr.mxu0 0.0
    %345 = vmatpush2.msra.mxu0 0.0
    %346 = vmatprep.subr.mxu0 0.0
    %347 = vmatpush2.msra.mxu0 0.0
    %348 = vmatprep.subr.mxu0 0.0
    %349 = vmatpush2.msra.mxu0 0.0
    %350 = vmatprep.subr.mxu0 0.0
    %351 = vmatpush2.msra.mxu0 0.0
    %352 = vmatprep.subr.mxu0 0.0
    %353 = vmatpush2.msra.mxu0 0.0
    %354 = vmatprep.subr.mxu0 0.0
    %355 = vmatpush2.msra.mxu0 0.0
    %356 = vmatprep.subr.mxu0 0.0
    %357 = vmatpush2.msra.mxu0 0.0
    %358 = vmatprep.subr.mxu0 0.0
    %359 = vmatpush2.msra.mxu0 0.0
    %360 = vmatprep.subr.mxu0 0.0
    %361 = vmatpush2.msra.mxu0 0.0
    %362 = vmatprep.subr.mxu0 0.0
    %363 = vmatpush2.msra.mxu0 0.0
    %364 = vmatprep.subr.mxu0 0.0
    %365 = vmatpush2.msra.mxu0 0.0
    %366 = vmatprep.subr.mxu0 0.0
    %367 = vmatpush2.msra.mxu0 0.0
    %368 = vmatprep.subr.mxu0 0.0
    %369 = vmatpush2.msra.mxu0 0.0
    %370 = vmatprep.subr.mxu0 0.0
    %371 = vmatpush2.msra.mxu0 0.0
    %372 = vmatprep.subr.mxu0 0.0
    %373 = vmatpush2.msra.mxu0 0.0
    %374 = vmatprep.mubr.f32.mxu0 0.0
    %375 = vmatmul.mubr.f32.gmra.mxu0 %v308
    %v376 = vpop.f32.mrf.mxu0
    %v377 = vadd.f32 0.0, %v376
    %v378 = vpop.f32.mrf.mxu0
    %379 = vdwg.mxu0
    %v380 = vlaneseq
    %v381 = vshrl.u32 %v380, 7
    %v382 = vlaneseq
    %v383 = vand.u32 %v382, 127
    %v384 = vmul.u32 %v381, 9
    %vm385 = vcmp.ge.s32.totalorder %v383, %v384
    %v386 = vadd.s32 %v381, 1
    %v387 = vmul.u32 %v386, 9
    %vm388 = vcmp.lt.s32.totalorder %v383, %v387
    %vm389 = vmand %vm385, %vm388
    %v390 = vld [vmem:[%s7] sm:$0x1]
    %vm391 = vcmask 130048
    %v393 = vsel %vm391, %v377, 0
    %v396 = vsel %vm391, %v273, 0
    %v399 = vsel %vm391, %v278, 0
    %v402 = vsel %vm391, %v283, 0
    %404 = vmatprep.subr.mxu0 0.0
    %405 = vmatpush1.xpose.msra.mxu0 0.0
    %406 = vmatprep.subr.mxu0 0.0
    %407 = vmatpush1.xpose.msra.mxu0 0.0
    %408 = vmatprep.subr.mxu0 0.0
    %409 = vmatpush1.xpose.msra.mxu0 0.0
    %410 = vmatprep.subr.mxu0 0.0
    %411 = vmatpush1.xpose.msra.mxu0 0.0
    %412 = vmatprep.subr.mxu0 0.0
    %413 = vmatpush1.xpose.msra.mxu0 0.0
    %414 = vmatprep.subr.mxu0 0.0
    %415 = vmatpush1.xpose.msra.mxu0 0.0
    %416 = vmatprep.subr.mxu0 0.0
    %417 = vmatpush1.xpose.msra.mxu0 0.0
    %418 = vmatprep.subr.mxu0 0.0
    %419 = vmatpush1.xpose.msra.mxu0 0.0
    %420 = vmatprep.subr.mxu0 0.0
    %421 = vmatpush1.xpose.msra.mxu0 0.0
    %422 = vmatprep.subr.mxu0 0.0
    %423 = vmatpush1.xpose.msra.mxu0 0.0
    %424 = vmatprep.subr.mxu0 0.0
    %425 = vmatpush1.xpose.msra.mxu0 0.0
    %426 = vmatprep.subr.mxu0 0.0
    %427 = vmatpush1.xpose.msra.mxu0 0.0
    %428 = vmatprep.subr.mxu0 0.0
    %429 = vmatpush1.xpose.msra.mxu0 0.0
    %430 = vmatprep.subr.mxu0 0.0
    %431 = vmatpush1.xpose.msra.mxu0 %v402
    %432 = vmatprep.subr.mxu0 0.0
    %433 = vmatpush1.xpose.msra.mxu0 %v399
    %434 = vmatprep.subr.mxu0 0.0
    %435 = vmatpush1.xpose.msra.mxu0 %v396
    %436 = vmatprep.subr.mxu0 0.0
    %437 = vmatpush2.xpose.msra.mxu0 0.0
    %438 = vmatprep.subr.mxu0 0.0
    %439 = vmatpush2.xpose.msra.mxu0 0.0
    %440 = vmatprep.subr.mxu0 0.0
    %441 = vmatpush2.xpose.msra.mxu0 0.0
    %442 = vmatprep.subr.mxu0 0.0
    %443 = vmatpush2.xpose.msra.mxu0 0.0
    %444 = vmatprep.subr.mxu0 0.0
    %445 = vmatpush2.xpose.msra.mxu0 0.0
    %446 = vmatprep.subr.mxu0 0.0
    %447 = vmatpush2.xpose.msra.mxu0 0.0
    %448 = vmatprep.subr.mxu0 0.0
    %449 = vmatpush2.xpose.msra.mxu0 0.0
    %450 = vmatprep.subr.mxu0 0.0
    %451 = vmatpush2.xpose.msra.mxu0 0.0
    %452 = vmatprep.subr.mxu0 0.0
    %453 = vmatpush2.xpose.msra.mxu0 0.0
    %454 = vmatprep.subr.mxu0 0.0
    %455 = vmatpush2.xpose.msra.mxu0 0.0
    %456 = vmatprep.subr.mxu0 0.0
    %457 = vmatpush2.xpose.msra.mxu0 0.0
    %458 = vmatprep.subr.mxu0 0.0
    %459 = vmatpush2.xpose.msra.mxu0 0.0
    %460 = vmatprep.subr.mxu0 0.0
    %461 = vmatpush2.xpose.msra.mxu0 0.0
    %462 = vmatprep.subr.mxu0 0.0
    %463 = vmatpush2.xpose.msra.mxu0 0.0
    %464 = vmatprep.subr.mxu0 0.0
    %465 = vmatpush2.xpose.msra.mxu0 0.0
    %466 = vmatprep.subr.mxu0 0.0
    %467 = vmatpush2.xpose.msra.mxu0 0.0
    %468 = vmatprep.mubr.f32.mxu0 0.0
    %469 = vmatmul.mubr.f32.gmra.mxu0 %v393
    %v470 = vpop.f32.mrf.mxu0
    %v471 = vadd.f32 0.0, %v470
    %v472 = vpop.f32.mrf.mxu0
    %473 = vdwg.mxu0
    %v474 = vsel %vm389, %v471, -1e+30
    %vm475 = vcmask 140288
    %v476 = vsel %vm475, %v474, -inf
    %477 = vmax.xlane.f32.xlu0 %v476
    %v478 = vpop.xlane.xlu0 %477
    %v479 = vsub.f32 %v474, %v478
    %v480 = vmul.f32 %v479, 1.442695
    %v481 = vpow.pop %v480
    %v482 = vsel %vm475, %v481, 0.0
    %483 = vadd.xlane.f32.xlu0 %v482
    %v484 = vpop.xlane.xlu0 %483
    %v485 = vrcp.pop %v484
    %v486 = vmul.f32 %v481, %v485
    %487 = vrot.lane.b32.xlu0 %v273, 80
    %v488 = vpop.permute.xlu0 %487
    %489 = vrot.lane.b32.xlu0 %v278, 80
    %v490 = vpop.permute.xlu0 %489
    %491 = vrot.lane.b32.xlu0 %v283, 80
    %v492 = vpop.permute.xlu0 %491
    %vm495 = vcmask 146432
    %v497 = vsel %vm495, %v486, 0
    %vm499 = vcmask 1041408
    %v500 = vsel %vm499, %v492, 0
    %502 = vmatprep.subr.mxu0 0.0
    %503 = vmatpush1.msra.mxu0 0.0
    %504 = vmatprep.subr.mxu0 0.0
    %505 = vmatpush1.msra.mxu0 0.0
    %506 = vmatprep.subr.mxu0 0.0
    %507 = vmatpush1.msra.mxu0 0.0
    %508 = vmatprep.subr.mxu0 0.0
    %509 = vmatpush1.msra.mxu0 0.0
    %510 = vmatprep.subr.mxu0 0.0
    %511 = vmatpush1.msra.mxu0 0.0
    %512 = vmatprep.subr.mxu0 0.0
    %513 = vmatpush1.msra.mxu0 0.0
    %514 = vmatprep.subr.mxu0 0.0
    %515 = vmatpush1.msra.mxu0 0.0
    %516 = vmatprep.subr.mxu0 0.0
    %517 = vmatpush1.msra.mxu0 0.0
    %518 = vmatprep.subr.mxu0 0.0
    %519 = vmatpush1.msra.mxu0 0.0
    %520 = vmatprep.subr.mxu0 0.0
    %521 = vmatpush1.msra.mxu0 0.0
    %522 = vmatprep.subr.mxu0 0.0
    %523 = vmatpush1.msra.mxu0 0.0
    %524 = vmatprep.subr.mxu0 0.0
    %525 = vmatpush1.msra.mxu0 0.0
    %526 = vmatprep.subr.mxu0 0.0
    %527 = vmatpush1.msra.mxu0 0.0
    %528 = vmatprep.subr.mxu0 0.0
    %529 = vmatpush1.msra.mxu0 %v500
    %530 = vmatprep.subr.mxu0 0.0
    %531 = vmatpush1.msra.mxu0 %v490
    %532 = vmatprep.subr.mxu0 0.0
    %533 = vmatpush1.msra.mxu0 %v488
    %534 = vmatprep.subr.mxu0 0.0
    %535 = vmatpush2.msra.mxu0 0.0
    %536 = vmatprep.subr.mxu0 0.0
    %537 = vmatpush2.msra.mxu0 0.0
    %538 = vmatprep.subr.mxu0 0.0
    %539 = vmatpush2.msra.mxu0 0.0
    %540 = vmatprep.subr.mxu0 0.0
    %541 = vmatpush2.msra.mxu0 0.0
    %542 = vmatprep.subr.mxu0 0.0
    %543 = vmatpush2.msra.mxu0 0.0
    %544 = vmatprep.subr.mxu0 0.0
    %545 = vmatpush2.msra.mxu0 0.0
    %546 = vmatprep.subr.mxu0 0.0
    %547 = vmatpush2.msra.mxu0 0.0
    %548 = vmatprep.subr.mxu0 0.0
    %549 = vmatpush2.msra.mxu0 0.0
    %550 = vmatprep.subr.mxu0 0.0
    %551 = vmatpush2.msra.mxu0 0.0
    %552 = vmatprep.subr.mxu0 0.0
    %553 = vmatpush2.msra.mxu0 0.0
    %554 = vmatprep.subr.mxu0 0.0
    %555 = vmatpush2.msra.mxu0 0.0
    %556 = vmatprep.subr.mxu0 0.0
    %557 = vmatpush2.msra.mxu0 0.0
    %558 = vmatprep.subr.mxu0 0.0
    %559 = vmatpush2.msra.mxu0 0.0
    %560 = vmatprep.subr.mxu0 0.0
    %561 = vmatpush2.msra.mxu0 0.0
    %562 = vmatprep.subr.mxu0 0.0
    %563 = vmatpush2.msra.mxu0 0.0
    %564 = vmatprep.subr.mxu0 0.0
    %565 = vmatpush2.msra.mxu0 0.0
    %566 = vmatprep.mubr.f32.mxu0 0.0
    %567 = vmatmul.mubr.f32.gmra.mxu0 %v497
    %v568 = vpop.f32.mrf.mxu0
    %v569 = vadd.f32 0.0, %v568
    %v570 = vpop.f32.mrf.mxu0
    %571 = vdwg.mxu0
    %v573 = vsel %vm391, %v569, 0
    %575 = vmatprep.subr.mxu0 0.0
    %576 = vmatpush1.msra.mxu0 0.0
    %577 = vmatprep.subr.mxu0 0.0
    %578 = vmatpush1.msra.mxu0 0.0
    %579 = vmatprep.subr.mxu0 0.0
    %580 = vmatpush1.msra.mxu0 0.0
    %581 = vmatprep.subr.mxu0 0.0
    %582 = vmatpush1.msra.mxu0 0.0
    %583 = vmatprep.subr.mxu0 0.0
    %584 = vmatpush1.msra.mxu0 0.0
    %585 = vmatprep.subr.mxu0 0.0
    %586 = vmatpush1.msra.mxu0 0.0
    %587 = vmatprep.subr.mxu0 0.0
    %588 = vmatpush1.msra.mxu0 0.0
    %589 = vmatprep.subr.mxu0 0.0
    %590 = vmatpush1.msra.mxu0 0.0
    %591 = vmatprep.subr.mxu0 0.0
    %592 = vmatpush1.msra.mxu0 0.0
    %593 = vmatprep.subr.mxu0 0.0
    %594 = vmatpush1.msra.mxu0 0.0
    %595 = vmatprep.subr.mxu0 0.0
    %596 = vmatpush1.msra.mxu0 0.0
    %597 = vmatprep.subr.mxu0 0.0
    %598 = vmatpush1.msra.mxu0 0.0
    %599 = vmatprep.subr.mxu0 0.0
    %600 = vmatpush1.msra.mxu0 0.0
    %601 = vmatprep.subr.mxu0 0.0
    %602 = vmatpush1.msra.mxu0 0.0
    %603 = vmatprep.subr.mxu0 0.0
    %604 = vmatpush1.msra.mxu0 %v116
    %605 = vmatprep.subr.mxu0 0.0
    %606 = vmatpush1.msra.mxu0 %v115
    %607 = vmatprep.subr.mxu0 0.0
    %608 = vmatpush2.msra.mxu0 0.0
    %609 = vmatprep.subr.mxu0 0.0
    %610 = vmatpush2.msra.mxu0 0.0
    %611 = vmatprep.subr.mxu0 0.0
    %612 = vmatpush2.msra.mxu0 0.0
    %613 = vmatprep.subr.mxu0 0.0
    %614 = vmatpush2.msra.mxu0 0.0
    %615 = vmatprep.subr.mxu0 0.0
    %616 = vmatpush2.msra.mxu0 0.0
    %617 = vmatprep.subr.mxu0 0.0
    %618 = vmatpush2.msra.mxu0 0.0
    %619 = vmatprep.subr.mxu0 0.0
    %620 = vmatpush2.msra.mxu0 0.0
    %621 = vmatprep.subr.mxu0 0.0
    %622 = vmatpush2.msra.mxu0 0.0
    %623 = vmatprep.subr.mxu0 0.0
    %624 = vmatpush2.msra.mxu0 0.0
    %625 = vmatprep.subr.mxu0 0.0
    %626 = vmatpush2.msra.mxu0 0.0
    %627 = vmatprep.subr.mxu0 0.0
    %628 = vmatpush2.msra.mxu0 0.0
    %629 = vmatprep.subr.mxu0 0.0
    %630 = vmatpush2.msra.mxu0 0.0
    %631 = vmatprep.subr.mxu0 0.0
    %632 = vmatpush2.msra.mxu0 0.0
    %633 = vmatprep.subr.mxu0 0.0
    %634 = vmatpush2.msra.mxu0 0.0
    %635 = vmatprep.subr.mxu0 0.0
    %636 = vmatpush2.msra.mxu0 0.0
    %637 = vmatprep.subr.mxu0 0.0
    %638 = vmatpush2.msra.mxu0 0.0
    %639 = vmatprep.mubr.f32.mxu0 0.0
    %640 = vmatmul.mubr.f32.gmra.mxu0 %v573
    %v641 = vpop.f32.mrf.mxu0
    %v642 = vadd.f32 0.0, %v641
    %v643 = vpop.f32.mrf.mxu0
    %644 = vdwg.mxu0
    %v646 = vlaneseq
    %v647 = vshrl.u32 %v646, 7
    %v648 = vsub.s32 0, %v647
    %v649 = vrot.slane %v390, %v648
    %v651 = vadd.f32 %v649, %v642
    %652 = vrot.lane.b32.xlu0 %v377, 112
    %v653 = vpop.permute.xlu0 %652
    %654 = vrot.lane.b32.xlu0 %v273, 112
    %v655 = vpop.permute.xlu0 %654
    %656 = vrot.lane.b32.xlu0 %v278, 112
    %v657 = vpop.permute.xlu0 %656
    %658 = vrot.lane.b32.xlu0 %v283, 112
    %v659 = vpop.permute.xlu0 %658
    %v660 = vsel %vm391, %v653, 0
    %v662 = vsel %vm391, %v655, 0
    %v664 = vsel %vm391, %v657, 0
    %v666 = vsel %vm391, %v659, 0
    %668 = vmatprep.subr.mxu0 0.0
    %669 = vmatpush1.xpose.msra.mxu0 0.0
    %670 = vmatprep.subr.mxu0 0.0
    %671 = vmatpush1.xpose.msra.mxu0 0.0
    %672 = vmatprep.subr.mxu0 0.0
    %673 = vmatpush1.xpose.msra.mxu0 0.0
    %674 = vmatprep.subr.mxu0 0.0
    %675 = vmatpush1.xpose.msra.mxu0 0.0
    %676 = vmatprep.subr.mxu0 0.0
    %677 = vmatpush1.xpose.msra.mxu0 0.0
    %678 = vmatprep.subr.mxu0 0.0
    %679 = vmatpush1.xpose.msra.mxu0 0.0
    %680 = vmatprep.subr.mxu0 0.0
    %681 = vmatpush1.xpose.msra.mxu0 0.0
    %682 = vmatprep.subr.mxu0 0.0
    %683 = vmatpush1.xpose.msra.mxu0 0.0
    %684 = vmatprep.subr.mxu0 0.0
    %685 = vmatpush1.xpose.msra.mxu0 0.0
    %686 = vmatprep.subr.mxu0 0.0
    %687 = vmatpush1.xpose.msra.mxu0 0.0
    %688 = vmatprep.subr.mxu0 0.0
    %689 = vmatpush1.xpose.msra.mxu0 0.0
    %690 = vmatprep.subr.mxu0 0.0
    %691 = vmatpush1.xpose.msra.mxu0 0.0
    %692 = vmatprep.subr.mxu0 0.0
    %693 = vmatpush1.xpose.msra.mxu0 0.0
    %694 = vmatprep.subr.mxu0 0.0
    %695 = vmatpush1.xpose.msra.mxu0 %v666
    %696 = vmatprep.subr.mxu0 0.0
    %697 = vmatpush1.xpose.msra.mxu0 %v664
    %698 = vmatprep.subr.mxu0 0.0
    %699 = vmatpush1.xpose.msra.mxu0 %v662
    %700 = vmatprep.subr.mxu0 0.0
    %701 = vmatpush2.xpose.msra.mxu0 0.0
    %702 = vmatprep.subr.mxu0 0.0
    %703 = vmatpush2.xpose.msra.mxu0 0.0
    %704 = vmatprep.subr.mxu0 0.0
    %705 = vmatpush2.xpose.msra.mxu0 0.0
    %706 = vmatprep.subr.mxu0 0.0
    %707 = vmatpush2.xpose.msra.mxu0 0.0
    %708 = vmatprep.subr.mxu0 0.0
    %709 = vmatpush2.xpose.msra.mxu0 0.0
    %710 = vmatprep.subr.mxu0 0.0
    %711 = vmatpush2.xpose.msra.mxu0 0.0
    %712 = vmatprep.subr.mxu0 0.0
    %713 = vmatpush2.xpose.msra.mxu0 0.0
    %714 = vmatprep.subr.mxu0 0.0
    %715 = vmatpush2.xpose.msra.mxu0 0.0
    %716 = vmatprep.subr.mxu0 0.0
    %717 = vmatpush2.xpose.msra.mxu0 0.0
    %718 = vmatprep.subr.mxu0 0.0
    %719 = vmatpush2.xpose.msra.mxu0 0.0
    %720 = vmatprep.subr.mxu0 0.0
    %721 = vmatpush2.xpose.msra.mxu0 0.0
    %722 = vmatprep.subr.mxu0 0.0
    %723 = vmatpush2.xpose.msra.mxu0 0.0
    %724 = vmatprep.subr.mxu0 0.0
    %725 = vmatpush2.xpose.msra.mxu0 0.0
    %726 = vmatprep.subr.mxu0 0.0
    %727 = vmatpush2.xpose.msra.mxu0 0.0
    %728 = vmatprep.subr.mxu0 0.0
    %729 = vmatpush2.xpose.msra.mxu0 0.0
    %730 = vmatprep.subr.mxu0 0.0
    %731 = vmatpush2.xpose.msra.mxu0 0.0
    %732 = vmatprep.mubr.f32.mxu0 0.0
    %733 = vmatmul.mubr.f32.gmra.mxu0 %v660
    %v734 = vpop.f32.mrf.mxu0
    %v735 = vadd.f32 0.0, %v734
    %v736 = vpop.f32.mrf.mxu0
    %737 = vdwg.mxu0
    %v738 = vsel %vm389, %v735, -1e+30
    %v739 = vsel %vm475, %v738, -inf
    %740 = vmax.xlane.f32.xlu0 %v739
    %v741 = vpop.xlane.xlu0 %740
    %v742 = vsub.f32 %v738, %v741
    %v743 = vmul.f32 %v742, 1.442695
    %v744 = vpow.pop %v743
    %v745 = vsel %vm475, %v744, 0.0
    %746 = vadd.xlane.f32.xlu0 %v745
    %v747 = vpop.xlane.xlu0 %746
    %v748 = vrcp.pop %v747
    %v749 = vmul.f32 %v744, %v748
    %750 = vrot.lane.b32.xlu0 %v273, 64
    %v751 = vpop.permute.xlu0 %750
    %752 = vrot.lane.b32.xlu0 %v278, 64
    %v753 = vpop.permute.xlu0 %752
    %754 = vrot.lane.b32.xlu0 %v283, 64
    %v755 = vpop.permute.xlu0 %754
    %v759 = vsel %vm495, %v749, 0
    %v761 = vsel %vm499, %v755, 0
    %763 = vmatprep.subr.mxu0 0.0
    %764 = vmatpush1.msra.mxu0 0.0
    %765 = vmatprep.subr.mxu0 0.0
    %766 = vmatpush1.msra.mxu0 0.0
    %767 = vmatprep.subr.mxu0 0.0
    %768 = vmatpush1.msra.mxu0 0.0
    %769 = vmatprep.subr.mxu0 0.0
    %770 = vmatpush1.msra.mxu0 0.0
    %771 = vmatprep.subr.mxu0 0.0
    %772 = vmatpush1.msra.mxu0 0.0
    %773 = vmatprep.subr.mxu0 0.0
    %774 = vmatpush1.msra.mxu0 0.0
    %775 = vmatprep.subr.mxu0 0.0
    %776 = vmatpush1.msra.mxu0 0.0
    %777 = vmatprep.subr.mxu0 0.0
    %778 = vmatpush1.msra.mxu0 0.0
    %779 = vmatprep.subr.mxu0 0.0
    %780 = vmatpush1.msra.mxu0 0.0
    %781 = vmatprep.subr.mxu0 0.0
    %782 = vmatpush1.msra.mxu0 0.0
    %783 = vmatprep.subr.mxu0 0.0
    %784 = vmatpush1.msra.mxu0 0.0
    %785 = vmatprep.subr.mxu0 0.0
    %786 = vmatpush1.msra.mxu0 0.0
    %787 = vmatprep.subr.mxu0 0.0
    %788 = vmatpush1.msra.mxu0 0.0
    %789 = vmatprep.subr.mxu0 0.0
    %790 = vmatpush1.msra.mxu0 %v761
    %791 = vmatprep.subr.mxu0 0.0
    %792 = vmatpush1.msra.mxu0 %v753
    %793 = vmatprep.subr.mxu0 0.0
    %794 = vmatpush1.msra.mxu0 %v751
    %795 = vmatprep.subr.mxu0 0.0
    %796 = vmatpush2.msra.mxu0 0.0
    %797 = vmatprep.subr.mxu0 0.0
    %798 = vmatpush2.msra.mxu0 0.0
    %799 = vmatprep.subr.mxu0 0.0
    %800 = vmatpush2.msra.mxu0 0.0
    %801 = vmatprep.subr.mxu0 0.0
    %802 = vmatpush2.msra.mxu0 0.0
    %803 = vmatprep.subr.mxu0 0.0
    %804 = vmatpush2.msra.mxu0 0.0
    %805 = vmatprep.subr.mxu0 0.0
    %806 = vmatpush2.msra.mxu0 0.0
    %807 = vmatprep.subr.mxu0 0.0
    %808 = vmatpush2.msra.mxu0 0.0
    %809 = vmatprep.subr.mxu0 0.0
    %810 = vmatpush2.msra.mxu0 0.0
    %811 = vmatprep.subr.mxu0 0.0
    %812 = vmatpush2.msra.mxu0 0.0
    %813 = vmatprep.subr.mxu0 0.0
    %814 = vmatpush2.msra.mxu0 0.0
    %815 = vmatprep.subr.mxu0 0.0
    %816 = vmatpush2.msra.mxu0 0.0
    %817 = vmatprep.subr.mxu0 0.0
    %818 = vmatpush2.msra.mxu0 0.0
    %819 = vmatprep.subr.mxu0 0.0
    %820 = vmatpush2.msra.mxu0 0.0
    %821 = vmatprep.subr.mxu0 0.0
    %822 = vmatpush2.msra.mxu0 0.0
    %823 = vmatprep.subr.mxu0 0.0
    %824 = vmatpush2.msra.mxu0 0.0
    %825 = vmatprep.subr.mxu0 0.0
    %826 = vmatpush2.msra.mxu0 0.0
    %827 = vmatprep.mubr.f32.mxu0 0.0
    %828 = vmatmul.mubr.f32.gmra.mxu0 %v759
    %v829 = vpop.f32.mrf.mxu0
    %v830 = vadd.f32 0.0, %v829
    %v831 = vpop.f32.mrf.mxu0
    %832 = vdwg.mxu0
    %v834 = vsel %vm391, %v830, 0
    %836 = vmatprep.subr.mxu0 0.0
    %837 = vmatpush1.msra.mxu0 0.0
    %838 = vmatprep.subr.mxu0 0.0
    %839 = vmatpush1.msra.mxu0 0.0
    %840 = vmatprep.subr.mxu0 0.0
    %841 = vmatpush1.msra.mxu0 0.0
    %842 = vmatprep.subr.mxu0 0.0
    %843 = vmatpush1.msra.mxu0 0.0
    %844 = vmatprep.subr.mxu0 0.0
    %845 = vmatpush1.msra.mxu0 0.0
    %846 = vmatprep.subr.mxu0 0.0
    %847 = vmatpush1.msra.mxu0 0.0
    %848 = vmatprep.subr.mxu0 0.0
    %849 = vmatpush1.msra.mxu0 0.0
    %850 = vmatprep.subr.mxu0 0.0
    %851 = vmatpush1.msra.mxu0 0.0
    %852 = vmatprep.subr.mxu0 0.0
    %853 = vmatpush1.msra.mxu0 0.0
    %854 = vmatprep.subr.mxu0 0.0
    %855 = vmatpush1.msra.mxu0 0.0
    %856 = vmatprep.subr.mxu0 0.0
    %857 = vmatpush1.msra.mxu0 0.0
    %858 = vmatprep.subr.mxu0 0.0
    %859 = vmatpush1.msra.mxu0 0.0
    %860 = vmatprep.subr.mxu0 0.0
    %861 = vmatpush1.msra.mxu0 0.0
    %862 = vmatprep.subr.mxu0 0.0
    %863 = vmatpush1.msra.mxu0 0.0
    %864 = vmatprep.subr.mxu0 0.0
    %865 = vmatpush1.msra.mxu0 %v118
    %866 = vmatprep.subr.mxu0 0.0
    %867 = vmatpush1.msra.mxu0 %v117
    %868 = vmatprep.subr.mxu0 0.0
    %869 = vmatpush2.msra.mxu0 0.0
    %870 = vmatprep.subr.mxu0 0.0
    %871 = vmatpush2.msra.mxu0 0.0
    %872 = vmatprep.subr.mxu0 0.0
    %873 = vmatpush2.msra.mxu0 0.0
    %874 = vmatprep.subr.mxu0 0.0
    %875 = vmatpush2.msra.mxu0 0.0
    %876 = vmatprep.subr.mxu0 0.0
    %877 = vmatpush2.msra.mxu0 0.0
    %878 = vmatprep.subr.mxu0 0.0
    %879 = vmatpush2.msra.mxu0 0.0
    %880 = vmatprep.subr.mxu0 0.0
    %881 = vmatpush2.msra.mxu0 0.0
    %882 = vmatprep.subr.mxu0 0.0
    %883 = vmatpush2.msra.mxu0 0.0
    %884 = vmatprep.subr.mxu0 0.0
    %885 = vmatpush2.msra.mxu0 0.0
    %886 = vmatprep.subr.mxu0 0.0
    %887 = vmatpush2.msra.mxu0 0.0
    %888 = vmatprep.subr.mxu0 0.0
    %889 = vmatpush2.msra.mxu0 0.0
    %890 = vmatprep.subr.mxu0 0.0
    %891 = vmatpush2.msra.mxu0 0.0
    %892 = vmatprep.subr.mxu0 0.0
    %893 = vmatpush2.msra.mxu0 0.0
    %894 = vmatprep.subr.mxu0 0.0
    %895 = vmatpush2.msra.mxu0 0.0
    %896 = vmatprep.subr.mxu0 0.0
    %897 = vmatpush2.msra.mxu0 0.0
    %898 = vmatprep.subr.mxu0 0.0
    %899 = vmatpush2.msra.mxu0 0.0
    %900 = vmatprep.mubr.f32.mxu0 0.0
    %901 = vmatmul.mubr.f32.gmra.mxu0 %v834
    %v902 = vpop.f32.mrf.mxu0
    %v903 = vadd.f32 0.0, %v902
    %v904 = vpop.f32.mrf.mxu0
    %905 = vdwg.mxu0
    %v906 = vadd.f32 %v651, %v903
    %907 = vrot.lane.b32.xlu0 %v377, 96
    %v908 = vpop.permute.xlu0 %907
    %909 = vrot.lane.b32.xlu0 %v273, 96
    %v910 = vpop.permute.xlu0 %909
    %911 = vrot.lane.b32.xlu0 %v278, 96
    %v912 = vpop.permute.xlu0 %911
    %913 = vrot.lane.b32.xlu0 %v283, 96
    %v914 = vpop.permute.xlu0 %913
    %v915 = vsel %vm391, %v908, 0
    %v917 = vsel %vm391, %v910, 0
    %v919 = vsel %vm391, %v912, 0
    %v921 = vsel %vm391, %v914, 0
    %923 = vmatprep.subr.mxu0 0.0
    %924 = vmatpush1.xpose.msra.mxu0 0.0
    %925 = vmatprep.subr.mxu0 0.0
    %926 = vmatpush1.xpose.msra.mxu0 0.0
    %927 = vmatprep.subr.mxu0 0.0
    %928 = vmatpush1.xpose.msra.mxu0 0.0
    %929 = vmatprep.subr.mxu0 0.0
    %930 = vmatpush1.xpose.msra.mxu0 0.0
    %931 = vmatprep.subr.mxu0 0.0
    %932 = vmatpush1.xpose.msra.mxu0 0.0
    %933 = vmatprep.subr.mxu0 0.0
    %934 = vmatpush1.xpose.msra.mxu0 0.0
    %935 = vmatprep.subr.mxu0 0.0
    %936 = vmatpush1.xpose.msra.mxu0 0.0
    %937 = vmatprep.subr.mxu0 0.0
    %938 = vmatpush1.xpose.msra.mxu0 0.0
    %939 = vmatprep.subr.mxu0 0.0
    %940 = vmatpush1.xpose.msra.mxu0 0.0
    %941 = vmatprep.subr.mxu0 0.0
    %942 = vmatpush1.xpose.msra.mxu0 0.0
    %943 = vmatprep.subr.mxu0 0.0
    %944 = vmatpush1.xpose.msra.mxu0 0.0
    %945 = vmatprep.subr.mxu0 0.0
    %946 = vmatpush1.xpose.msra.mxu0 0.0
    %947 = vmatprep.subr.mxu0 0.0
    %948 = vmatpush1.xpose.msra.mxu0 0.0
    %949 = vmatprep.subr.mxu0 0.0
    %950 = vmatpush1.xpose.msra.mxu0 %v921
    %951 = vmatprep.subr.mxu0 0.0
    %952 = vmatpush1.xpose.msra.mxu0 %v919
    %953 = vmatprep.subr.mxu0 0.0
    %954 = vmatpush1.xpose.msra.mxu0 %v917
    %955 = vmatprep.subr.mxu0 0.0
    %956 = vmatpush2.xpose.msra.mxu0 0.0
    %957 = vmatprep.subr.mxu0 0.0
    %958 = vmatpush2.xpose.msra.mxu0 0.0
    %959 = vmatprep.subr.mxu0 0.0
    %960 = vmatpush2.xpose.msra.mxu0 0.0
    %961 = vmatprep.subr.mxu0 0.0
    %962 = vmatpush2.xpose.msra.mxu0 0.0
    %963 = vmatprep.subr.mxu0 0.0
    %964 = vmatpush2.xpose.msra.mxu0 0.0
    %965 = vmatprep.subr.mxu0 0.0
    %966 = vmatpush2.xpose.msra.mxu0 0.0
    %967 = vmatprep.subr.mxu0 0.0
    %968 = vmatpush2.xpose.msra.mxu0 0.0
    %969 = vmatprep.subr.mxu0 0.0
    %970 = vmatpush2.xpose.msra.mxu0 0.0
    %971 = vmatprep.subr.mxu0 0.0
    %972 = vmatpush2.xpose.msra.mxu0 0.0
    %973 = vmatprep.subr.mxu0 0.0
    %974 = vmatpush2.xpose.msra.mxu0 0.0
    %975 = vmatprep.subr.mxu0 0.0
    %976 = vmatpush2.xpose.msra.mxu0 0.0
    %977 = vmatprep.subr.mxu0 0.0
    %978 = vmatpush2.xpose.msra.mxu0 0.0
    %979 = vmatprep.subr.mxu0 0.0
    %980 = vmatpush2.xpose.msra.mxu0 0.0
    %981 = vmatprep.subr.mxu0 0.0
    %982 = vmatpush2.xpose.msra.mxu0 0.0
    %983 = vmatprep.subr.mxu0 0.0
    %984 = vmatpush2.xpose.msra.mxu0 0.0
    %985 = vmatprep.subr.mxu0 0.0
    %986 = vmatpush2.xpose.msra.mxu0 0.0
    %987 = vmatprep.mubr.f32.mxu0 0.0
    %988 = vmatmul.mubr.f32.gmra.mxu0 %v915
    %v989 = vpop.f32.mrf.mxu0
    %v990 = vadd.f32 0.0, %v989
    %v991 = vpop.f32.mrf.mxu0
    %992 = vdwg.mxu0
    %v993 = vsel %vm389, %v990, -1e+30
    %v994 = vsel %vm475, %v993, -inf
    %995 = vmax.xlane.f32.xlu0 %v994
    %v996 = vpop.xlane.xlu0 %995
    %v997 = vsub.f32 %v993, %v996
    %v998 = vmul.f32 %v997, 1.442695
    %v999 = vpow.pop %v998
    %v1000 = vsel %vm475, %v999, 0.0
    %1001 = vadd.xlane.f32.xlu0 %v1000
    %v1002 = vpop.xlane.xlu0 %1001
    %v1003 = vrcp.pop %v1002
    %v1004 = vmul.f32 %v999, %v1003
    %1005 = vrot.lane.b32.xlu0 %v273, 48
    %v1006 = vpop.permute.xlu0 %1005
    %1007 = vrot.lane.b32.xlu0 %v278, 48
    %v1008 = vpop.permute.xlu0 %1007
    %1009 = vrot.lane.b32.xlu0 %v283, 48
    %v1010 = vpop.permute.xlu0 %1009
    %v1014 = vsel %vm495, %v1004, 0
    %v1016 = vsel %vm499, %v1010, 0
    %1018 = vmatprep.subr.mxu0 0.0
    %1019 = vmatpush1.msra.mxu0 0.0
    %1020 = vmatprep.subr.mxu0 0.0
    %1021 = vmatpush1.msra.mxu0 0.0
    %1022 = vmatprep.subr.mxu0 0.0
    %1023 = vmatpush1.msra.mxu0 0.0
    %1024 = vmatprep.subr.mxu0 0.0
    %1025 = vmatpush1.msra.mxu0 0.0
    %1026 = vmatprep.subr.mxu0 0.0
    %1027 = vmatpush1.msra.mxu0 0.0
    %1028 = vmatprep.subr.mxu0 0.0
    %1029 = vmatpush1.msra.mxu0 0.0
    %1030 = vmatprep.subr.mxu0 0.0
    %1031 = vmatpush1.msra.mxu0 0.0
    %1032 = vmatprep.subr.mxu0 0.0
    %1033 = vmatpush1.msra.mxu0 0.0
    %1034 = vmatprep.subr.mxu0 0.0
    %1035 = vmatpush1.msra.mxu0 0.0
    %1036 = vmatprep.subr.mxu0 0.0
    %1037 = vmatpush1.msra.mxu0 0.0
    %1038 = vmatprep.subr.mxu0 0.0
    %1039 = vmatpush1.msra.mxu0 0.0
    %1040 = vmatprep.subr.mxu0 0.0
    %1041 = vmatpush1.msra.mxu0 0.0
    %1042 = vmatprep.subr.mxu0 0.0
    %1043 = vmatpush1.msra.mxu0 0.0
    %1044 = vmatprep.subr.mxu0 0.0
    %1045 = vmatpush1.msra.mxu0 %v1016
    %1046 = vmatprep.subr.mxu0 0.0
    %1047 = vmatpush1.msra.mxu0 %v1008
    %1048 = vmatprep.subr.mxu0 0.0
    %1049 = vmatpush1.msra.mxu0 %v1006
    %1050 = vmatprep.subr.mxu0 0.0
    %1051 = vmatpush2.msra.mxu0 0.0
    %1052 = vmatprep.subr.mxu0 0.0
    %1053 = vmatpush2.msra.mxu0 0.0
    %1054 = vmatprep.subr.mxu0 0.0
    %1055 = vmatpush2.msra.mxu0 0.0
    %1056 = vmatprep.subr.mxu0 0.0
    %1057 = vmatpush2.msra.mxu0 0.0
    %1058 = vmatprep.subr.mxu0 0.0
    %1059 = vmatpush2.msra.mxu0 0.0
    %1060 = vmatprep.subr.mxu0 0.0
    %1061 = vmatpush2.msra.mxu0 0.0
    %1062 = vmatprep.subr.mxu0 0.0
    %1063 = vmatpush2.msra.mxu0 0.0
    %1064 = vmatprep.subr.mxu0 0.0
    %1065 = vmatpush2.msra.mxu0 0.0
    %1066 = vmatprep.subr.mxu0 0.0
    %1067 = vmatpush2.msra.mxu0 0.0
    %1068 = vmatprep.subr.mxu0 0.0
    %1069 = vmatpush2.msra.mxu0 0.0
    %1070 = vmatprep.subr.mxu0 0.0
    %1071 = vmatpush2.msra.mxu0 0.0
    %1072 = vmatprep.subr.mxu0 0.0
    %1073 = vmatpush2.msra.mxu0 0.0
    %1074 = vmatprep.subr.mxu0 0.0
    %1075 = vmatpush2.msra.mxu0 0.0
    %1076 = vmatprep.subr.mxu0 0.0
    %1077 = vmatpush2.msra.mxu0 0.0
    %1078 = vmatprep.subr.mxu0 0.0
    %1079 = vmatpush2.msra.mxu0 0.0
    %1080 = vmatprep.subr.mxu0 0.0
    %1081 = vmatpush2.msra.mxu0 0.0
    %1082 = vmatprep.mubr.f32.mxu0 0.0
    %1083 = vmatmul.mubr.f32.gmra.mxu0 %v1014
    %v1084 = vpop.f32.mrf.mxu0
    %v1085 = vadd.f32 0.0, %v1084
    %v1086 = vpop.f32.mrf.mxu0
    %1087 = vdwg.mxu0
    %v1089 = vsel %vm391, %v1085, 0
    %1091 = vmatprep.subr.mxu0 0.0
    %1092 = vmatpush1.msra.mxu0 0.0
    %1093 = vmatprep.subr.mxu0 0.0
    %1094 = vmatpush1.msra.mxu0 0.0
    %1095 = vmatprep.subr.mxu0 0.0
    %1096 = vmatpush1.msra.mxu0 0.0
    %1097 = vmatprep.subr.mxu0 0.0
    %1098 = vmatpush1.msra.mxu0 0.0
    %1099 = vmatprep.subr.mxu0 0.0
    %1100 = vmatpush1.msra.mxu0 0.0
    %1101 = vmatprep.subr.mxu0 0.0
    %1102 = vmatpush1.msra.mxu0 0.0
    %1103 = vmatprep.subr.mxu0 0.0
    %1104 = vmatpush1.msra.mxu0 0.0
    %1105 = vmatprep.subr.mxu0 0.0
    %1106 = vmatpush1.msra.mxu0 0.0
    %1107 = vmatprep.subr.mxu0 0.0
    %1108 = vmatpush1.msra.mxu0 0.0
    %1109 = vmatprep.subr.mxu0 0.0
    %1110 = vmatpush1.msra.mxu0 0.0
    %1111 = vmatprep.subr.mxu0 0.0
    %1112 = vmatpush1.msra.mxu0 0.0
    %1113 = vmatprep.subr.mxu0 0.0
    %1114 = vmatpush1.msra.mxu0 0.0
    %1115 = vmatprep.subr.mxu0 0.0
    %1116 = vmatpush1.msra.mxu0 0.0
    %1117 = vmatprep.subr.mxu0 0.0
    %1118 = vmatpush1.msra.mxu0 0.0
    %1119 = vmatprep.subr.mxu0 0.0
    %1120 = vmatpush1.msra.mxu0 %v120
    %1121 = vmatprep.subr.mxu0 0.0
    %1122 = vmatpush1.msra.mxu0 %v119
    %1123 = vmatprep.subr.mxu0 0.0
    %1124 = vmatpush2.msra.mxu0 0.0
    %1125 = vmatprep.subr.mxu0 0.0
    %1126 = vmatpush2.msra.mxu0 0.0
    %1127 = vmatprep.subr.mxu0 0.0
    %1128 = vmatpush2.msra.mxu0 0.0
    %1129 = vmatprep.subr.mxu0 0.0
    %1130 = vmatpush2.msra.mxu0 0.0
    %1131 = vmatprep.subr.mxu0 0.0
    %1132 = vmatpush2.msra.mxu0 0.0
    %1133 = vmatprep.subr.mxu0 0.0
    %1134 = vmatpush2.msra.mxu0 0.0
    %1135 = vmatprep.subr.mxu0 0.0
    %1136 = vmatpush2.msra.mxu0 0.0
    %1137 = vmatprep.subr.mxu0 0.0
    %1138 = vmatpush2.msra.mxu0 0.0
    %1139 = vmatprep.subr.mxu0 0.0
    %1140 = vmatpush2.msra.mxu0 0.0
    %1141 = vmatprep.subr.mxu0 0.0
    %1142 = vmatpush2.msra.mxu0 0.0
    %1143 = vmatprep.subr.mxu0 0.0
    %1144 = vmatpush2.msra.mxu0 0.0
    %1145 = vmatprep.subr.mxu0 0.0
    %1146 = vmatpush2.msra.mxu0 0.0
    %1147 = vmatprep.subr.mxu0 0.0
    %1148 = vmatpush2.msra.mxu0 0.0
    %1149 = vmatprep.subr.mxu0 0.0
    %1150 = vmatpush2.msra.mxu0 0.0
    %1151 = vmatprep.subr.mxu0 0.0
    %1152 = vmatpush2.msra.mxu0 0.0
    %1153 = vmatprep.subr.mxu0 0.0
    %1154 = vmatpush2.msra.mxu0 0.0
    %1155 = vmatprep.mubr.f32.mxu0 0.0
    %1156 = vmatmul.mubr.f32.gmra.mxu0 %v1089
    %v1157 = vpop.f32.mrf.mxu0
    %v1158 = vadd.f32 0.0, %v1157
    %v1159 = vpop.f32.mrf.mxu0
    %1160 = vdwg.mxu0
    %v1161 = vadd.f32 %v906, %v1158
    %v1162 = vadd.f32 %v112, %v1161
    %v1163 = vld [vmem:[%s8] sm:$0x1]
    %v1164 = vld [vmem:[%s9] sm:$0x1]
    %v1165 = vsel %vm121, %v105, 0.0
    %1166 = vadd.xlane.f32.xlu0 %v1165
    %v1167 = vpop.xlane.xlu0 %1166
    %v1168 = vsel %vm124, %v106, 0.0
    %1169 = vadd.xlane.f32.xlu0 %v1168
    %v1170 = vpop.xlane.xlu0 %1169
    %v1171 = vmul.f32 %v1167, %v142
    %v1172 = vmul.f32 %v1170, %v142
    %v1173 = vsub.f32 %v105, %v1171
    %v1174 = vsub.f32 %v106, %v1172
    %v1175 = vmul.f32 %v1173, %v1173
    %v1176 = vmul.f32 %v1174, %v1174
    %v1177 = vsel %vm121, %v1175, 0.0
    %1178 = vadd.xlane.f32.xlu0 %v1177
    %v1179 = vpop.xlane.xlu0 %1178
    %v1180 = vsel %vm124, %v1176, 0.0
    %1181 = vadd.xlane.f32.xlu0 %v1180
    %v1182 = vpop.xlane.xlu0 %1181
    %v1183 = vmul.f32 %v1179, %v142
    %v1184 = vmul.f32 %v1182, %v142
    %v1185 = vadd.f32 %v1183, 1e-06
    %v1186 = vadd.f32 %v1184, 1e-06
    %v1187 = vrsqrt.pop %v1185
    %v1188 = vrsqrt.pop %v1186
    %v1189 = vmul.f32 %v1173, %v1187
    %v1190 = vmul.f32 %v1174, %v1188
    %v1192 = vlaneseq
    %v1193 = vshrl.u32 %v1192, 7
    %v1194 = vsub.s32 0, %v1193
    %v1195 = vrot.slane %v1163, %v1194
    %v1197 = vmul.f32 %v1189, %v1195
    %v1198 = vmul.f32 %v1190, %v1195
    %v1200 = vlaneseq
    %v1201 = vshrl.u32 %v1200, 7
    %v1202 = vsub.s32 0, %v1201
    %v1203 = vrot.slane %v1164, %v1202
    %v1205 = vadd.f32 %v1197, %v1203
    %v1206 = vadd.f32 %v1198, %v1203
    %1207 = vst.msk [vmem:[%s19] sm:$0xff] %vm121, %v1205
    %1208 = vst.msk [vmem:[%s19 + $0x8] sm:$0x3] %vm124, %v1206
    %v1209 = vld [vmem:[%s8] sm:$0x1]
    %v1210 = vld [vmem:[%s9] sm:$0x1]
    %v1211 = vsel %vm124, %v1162, 0.0
    %1212 = vadd.xlane.f32.xlu0 %v1211
    %v1213 = vpop.xlane.xlu0 %1212
    %v1214 = vmul.f32 %v1213, %v142
    %v1215 = vsub.f32 %v1162, %v1214
    %v1216 = vmul.f32 %v1215, %v1215
    %v1217 = vsel %vm124, %v1216, 0.0
    %1218 = vadd.xlane.f32.xlu0 %v1217
    %v1219 = vpop.xlane.xlu0 %1218
    %v1220 = vmul.f32 %v1219, %v142
    %v1221 = vadd.f32 %v1220, 1e-06
    %v1222 = vrsqrt.pop %v1221
    %v1223 = vmul.f32 %v1215, %v1222
    %v1225 = vlaneseq
    %v1226 = vshrl.u32 %v1225, 7
    %v1227 = vsub.s32 0, %v1226
    %v1228 = vrot.slane %v1209, %v1227
    %v1230 = vmul.f32 %v1223, %v1228
    %v1232 = vlaneseq
    %v1233 = vshrl.u32 %v1232, 7
    %v1234 = vsub.s32 0, %v1233
    %v1235 = vrot.slane %v1210, %v1234
    %v1237 = vadd.f32 %v1230, %v1235
    %1238 = vst.msk [vmem:[%s19] sm:$0x1] %vm126, %v1237
    %1239 = vst.msk [vmem:[%s19 + $0x4] sm:$0x2] %vm128, %v1237
    %v1240 = vld [vmem:[%s10] sm:$0x1]
    %v1241 = vld [vmem:[%s11] sm:$0x1]
    %v1242 = vld [vmem:[#allocation7] sm:$0xff]
    %v1243 = vld [vmem:[#allocation7 + $0x8] sm:$0xff]
    %v1244 = vld [vmem:[#allocation7 + $0x10] sm:$0xff]
    %v1245 = vld [vmem:[#allocation7 + $0x18] sm:$0xff]
    %v1246 = vld [vmem:[#allocation7 + $0x20] sm:$0xff]
    %v1247 = vld [vmem:[#allocation7 + $0x28] sm:$0xff]
    %1248 = vst.msk [vmem:[#allocation2] sm:$0xff] %vm121, %v105
    %1249 = vst.msk [vmem:[#allocation2 + $0x8] sm:$0x3] %vm124, %v106
    %1250 = vst.msk [vmem:[#allocation2] sm:$0x1] %vm126, %v108
    %1251 = vst.msk [vmem:[#allocation2 + $0x4] sm:$0x2] %vm128, %v108
    %v1252 = vld [vmem:[#allocation2] sm:$0xff]
    %v1253 = vld [vmem:[#allocation2 + $0x8] sm:$0x3]
    %v1254 = vsel %vm121, %v1252, 0.0
    %1255 = vadd.xlane.f32.xlu0 %v1254
    %v1256 = vpop.xlane.xlu0 %1255
    %v1257 = vsel %vm124, %v1253, 0.0
    %1258 = vadd.xlane.f32.xlu0 %v1257
    %v1259 = vpop.xlane.xlu0 %1258
    %v1260 = vmul.f32 %v1256, %v142
    %v1261 = vmul.f32 %v1259, %v142
    %v1262 = vsub.f32 %v1252, %v1260
    %v1263 = vsub.f32 %v1253, %v1261
    %v1264 = vmul.f32 %v1262, %v1262
    %v1265 = vmul.f32 %v1263, %v1263
    %v1266 = vsel %vm121, %v1264, 0.0
    %1267 = vadd.xlane.f32.xlu0 %v1266
    %v1268 = vpop.xlane.xlu0 %1267
    %v1269 = vsel %vm124, %v1265, 0.0
    %1270 = vadd.xlane.f32.xlu0 %v1269
    %v1271 = vpop.xlane.xlu0 %1270
    %v1272 = vmul.f32 %v1268, %v142
    %v1273 = vmul.f32 %v1271, %v142
    %v1274 = vadd.f32 %v1272, 1e-05
    %v1275 = vadd.f32 %v1273, 1e-05
    %v1276 = vrsqrt.pop %v1274
    %v1277 = vrsqrt.pop %v1275
    %v1278 = vmul.f32 %v1262, %v1276
    %v1279 = vmul.f32 %v1263, %v1277
    %v1281 = vlaneseq
    %v1282 = vshrl.u32 %v1281, 7
    %v1283 = vsub.s32 0, %v1282
    %v1284 = vrot.slane %v1240, %v1283
    %v1286 = vmul.f32 %v1278, %v1284
    %v1287 = vmul.f32 %v1279, %v1284
    %v1289 = vlaneseq
    %v1290 = vshrl.u32 %v1289, 7
    %v1291 = vsub.s32 0, %v1290
    %v1292 = vrot.slane %v1241, %v1291
    %v1294 = vadd.f32 %v1286, %v1292
    %v1295 = vadd.f32 %v1287, %v1292
    %v1296 = vld [vmem:[#allocation5] sm:$0xff]
    %v1297 = vld [vmem:[#allocation5 + $0x8] sm:$0xff]
    %v1298 = vld [vmem:[#allocation5 + $0x10] sm:$0xff]
    %v1299 = vld [vmem:[#allocation5 + $0x18] sm:$0xff]
    %v1300 = vld [vmem:[#allocation5 + $0x20] sm:$0xff]
    %v1301 = vld [vmem:[#allocation5 + $0x28] sm:$0xff]
    %v1303 = vsel %vm121, %v1294, 0
    %v1306 = vsel %vm121, %v1295, 0
    %1308 = vmatprep.subr.mxu0 0.0
    %1309 = vmatpush1.msra.mxu0 0.0
    %1310 = vmatprep.subr.mxu0 0.0
    %1311 = vmatpush1.msra.mxu0 0.0
    %1312 = vmatprep.subr.mxu0 0.0
    %1313 = vmatpush1.msra.mxu0 0.0
    %1314 = vmatprep.subr.mxu0 0.0
    %1315 = vmatpush1.msra.mxu0 0.0
    %1316 = vmatprep.subr.mxu0 0.0
    %1317 = vmatpush1.msra.mxu0 0.0
    %1318 = vmatprep.subr.mxu0 0.0
    %1319 = vmatpush1.msra.mxu0 0.0
    %1320 = vmatprep.subr.mxu0 0.0
    %1321 = vmatpush1.msra.mxu0 0.0
    %1322 = vmatprep.subr.mxu0 0.0
    %1323 = vmatpush1.msra.mxu0 0.0
    %1324 = vmatprep.subr.mxu0 0.0
    %1325 = vmatpush1.msra.mxu0 0.0
    %1326 = vmatprep.subr.mxu0 0.0
    %1327 = vmatpush1.msra.mxu0 0.0
    %1328 = vmatprep.subr.mxu0 0.0
    %1329 = vmatpush1.msra.mxu0 %v1301
    %1330 = vmatprep.subr.mxu0 0.0
    %1331 = vmatpush1.msra.mxu0 %v1300
    %1332 = vmatprep.subr.mxu0 0.0
    %1333 = vmatpush1.msra.mxu0 %v1299
    %1334 = vmatprep.subr.mxu0 0.0
    %1335 = vmatpush1.msra.mxu0 %v1298
    %1336 = vmatprep.subr.mxu0 0.0
    %1337 = vmatpush1.msra.mxu0 %v1297
    %1338 = vmatprep.subr.mxu0 0.0
    %1339 = vmatpush1.msra.mxu0 %v1296
    %1340 = vmatprep.subr.mxu0 0.0
    %1341 = vmatpush2.msra.mxu0 0.0
    %1342 = vmatprep.subr.mxu0 0.0
    %1343 = vmatpush2.msra.mxu0 0.0
    %1344 = vmatprep.subr.mxu0 0.0
    %1345 = vmatpush2.msra.mxu0 0.0
    %1346 = vmatprep.subr.mxu0 0.0
    %1347 = vmatpush2.msra.mxu0 0.0
    %1348 = vmatprep.subr.mxu0 0.0
    %1349 = vmatpush2.msra.mxu0 0.0
    %1350 = vmatprep.subr.mxu0 0.0
    %1351 = vmatpush2.msra.mxu0 0.0
    %1352 = vmatprep.subr.mxu0 0.0
    %1353 = vmatpush2.msra.mxu0 0.0
    %1354 = vmatprep.subr.mxu0 0.0
    %1355 = vmatpush2.msra.mxu0 0.0
    %1356 = vmatprep.subr.mxu0 0.0
    %1357 = vmatpush2.msra.mxu0 0.0
    %1358 = vmatprep.subr.mxu0 0.0
    %1359 = vmatpush2.msra.mxu0 0.0
    %1360 = vmatprep.subr.mxu0 0.0
    %1361 = vmatpush2.msra.mxu0 0.0
    %1362 = vmatprep.subr.mxu0 0.0
    %1363 = vmatpush2.msra.mxu0 0.0
    %1364 = vmatprep.subr.mxu0 0.0
    %1365 = vmatpush2.msra.mxu0 0.0
    %1366 = vmatprep.subr.mxu0 0.0
    %1367 = vmatpush2.msra.mxu0 0.0
    %1368 = vmatprep.subr.mxu0 0.0
    %1369 = vmatpush2.msra.mxu0 0.0
    %1370 = vmatprep.subr.mxu0 0.0
    %1371 = vmatpush2.msra.mxu0 0.0
    %1372 = vmatprep.mubr.f32.mxu0 0.0
    %1373 = vmatmul.mubr.f32.gmra.mxu0 %v1303
    %v1374 = vpop.f32.mrf.mxu0
    %v1375 = vadd.f32 0.0, %v1374
    %v1376 = vpop.f32.mrf.mxu0
    %1377 = vmatprep.mubr.f32.mxu0 0.0
    %1378 = vmatmul.mubr.f32.gmra.mxu0 %v1306
    %v1379 = vpop.f32.mrf.mxu0
    %v1380 = vadd.f32 0.0, %v1379
    %v1381 = vpop.f32.mrf.mxu0
    %1382 = vdwg.mxu0
    %v1383 = vsel %vm124, %v108, 0.0
    %1384 = vadd.xlane.f32.xlu0 %v1383
    %v1385 = vpop.xlane.xlu0 %1384
    %v1386 = vmul.f32 %v1385, %v142
    %v1387 = vsub.f32 %v108, %v1386
    %v1388 = vmul.f32 %v1387, %v1387
    %v1389 = vsel %vm124, %v1388, 0.0
    %1390 = vadd.xlane.f32.xlu0 %v1389
    %v1391 = vpop.xlane.xlu0 %1390
    %v1392 = vmul.f32 %v1391, %v142
    %v1393 = vadd.f32 %v1392, 1e-05
    %v1394 = vrsqrt.pop %v1393
    %v1395 = vmul.f32 %v1387, %v1394
    %v1396 = vmul.f32 %v1395, %v1284
    %v1397 = vadd.f32 %v1396, %v1292
    %v1398 = vld [vmem:[#allocation3] sm:$0xff]
    %v1399 = vld [vmem:[#allocation3 + $0x8] sm:$0xff]
    %v1400 = vld [vmem:[#allocation3 + $0x10] sm:$0xff]
    %v1401 = vld [vmem:[#allocation3 + $0x18] sm:$0xff]
    %v1402 = vld [vmem:[#allocation3 + $0x20] sm:$0xff]
    %v1403 = vld [vmem:[#allocation3 + $0x28] sm:$0xff]
    %v1405 = vsel %vm121, %v1397, 0
    %1407 = vmatprep.subr.mxu0 0.0
    %1408 = vmatpush1.msra.mxu0 0.0
    %1409 = vmatprep.subr.mxu0 0.0
    %1410 = vmatpush1.msra.mxu0 0.0
    %1411 = vmatprep.subr.mxu0 0.0
    %1412 = vmatpush1.msra.mxu0 0.0
    %1413 = vmatprep.subr.mxu0 0.0
    %1414 = vmatpush1.msra.mxu0 0.0
    %1415 = vmatprep.subr.mxu0 0.0
    %1416 = vmatpush1.msra.mxu0 0.0
    %1417 = vmatprep.subr.mxu0 0.0
    %1418 = vmatpush1.msra.mxu0 0.0
    %1419 = vmatprep.subr.mxu0 0.0
    %1420 = vmatpush1.msra.mxu0 0.0
    %1421 = vmatprep.subr.mxu0 0.0
    %1422 = vmatpush1.msra.mxu0 0.0
    %1423 = vmatprep.subr.mxu0 0.0
    %1424 = vmatpush1.msra.mxu0 0.0
    %1425 = vmatprep.subr.mxu0 0.0
    %1426 = vmatpush1.msra.mxu0 0.0
    %1427 = vmatprep.subr.mxu0 0.0
    %1428 = vmatpush1.msra.mxu0 %v1403
    %1429 = vmatprep.subr.mxu0 0.0
    %1430 = vmatpush1.msra.mxu0 %v1402
    %1431 = vmatprep.subr.mxu0 0.0
    %1432 = vmatpush1.msra.mxu0 %v1401
    %1433 = vmatprep.subr.mxu0 0.0
    %1434 = vmatpush1.msra.mxu0 %v1400
    %1435 = vmatprep.subr.mxu0 0.0
    %1436 = vmatpush1.msra.mxu0 %v1399
    %1437 = vmatprep.subr.mxu0 0.0
    %1438 = vmatpush1.msra.mxu0 %v1398
    %1439 = vmatprep.subr.mxu0 0.0
    %1440 = vmatpush2.msra.mxu0 0.0
    %1441 = vmatprep.subr.mxu0 0.0
    %1442 = vmatpush2.msra.mxu0 0.0
    %1443 = vmatprep.subr.mxu0 0.0
    %1444 = vmatpush2.msra.mxu0 0.0
    %1445 = vmatprep.subr.mxu0 0.0
    %1446 = vmatpush2.msra.mxu0 0.0
    %1447 = vmatprep.subr.mxu0 0.0
    %1448 = vmatpush2.msra.mxu0 0.0
    %1449 = vmatprep.subr.mxu0 0.0
    %1450 = vmatpush2.msra.mxu0 0.0
    %1451 = vmatprep.subr.mxu0 0.0
    %1452 = vmatpush2.msra.mxu0 0.0
    %1453 = vmatprep.subr.mxu0 0.0
    %1454 = vmatpush2.msra.mxu0 0.0
    %1455 = vmatprep.subr.mxu0 0.0
    %1456 = vmatpush2.msra.mxu0 0.0
    %1457 = vmatprep.subr.mxu0 0.0
    %1458 = vmatpush2.msra.mxu0 0.0
    %1459 = vmatprep.subr.mxu0 0.0
    %1460 = vmatpush2.msra.mxu0 0.0
    %1461 = vmatprep.subr.mxu0 0.0
    %1462 = vmatpush2.msra.mxu0 0.0
    %1463 = vmatprep.subr.mxu0 0.0
    %1464 = vmatpush2.msra.mxu0 0.0
    %1465 = vmatprep.subr.mxu0 0.0
    %1466 = vmatpush2.msra.mxu0 0.0
    %1467 = vmatprep.subr.mxu0 0.0
    %1468 = vmatpush2.msra.mxu0 0.0
    %1469 = vmatprep.subr.mxu0 0.0
    %1470 = vmatpush2.msra.mxu0 0.0
    %1471 = vmatprep.mubr.f32.mxu0 0.0
    %1472 = vmatmul.mubr.f32.gmra.mxu0 %v1405
    %v1473 = vpop.f32.mrf.mxu0
    %v1474 = vadd.f32 0.0, %v1473
    %v1475 = vpop.f32.mrf.mxu0
    %1476 = vdwg.mxu0
    %v1477 = vmul.u32 %v381, 5
    %vm1478 = vcmp.ge.s32.totalorder %v383, %v1477
    %v1479 = vmul.u32 %v386, 5
    %vm1480 = vcmp.lt.s32.totalorder %v383, %v1479
    %vm1481 = vmand %vm1478, %vm1480
    %v1482 = vld [vmem:[%s15] sm:$0x1]
    %v1484 = vsel %vm391, %v1474, 0
    %v1487 = vsel %vm391, %v1375, 0
    %v1490 = vsel %vm391, %v1380, 0
    %1492 = vmatprep.subr.mxu0 0.0
    %1493 = vmatpush1.xpose.msra.mxu0 0.0
    %1494 = vmatprep.subr.mxu0 0.0
    %1495 = vmatpush1.xpose.msra.mxu0 0.0
    %1496 = vmatprep.subr.mxu0 0.0
    %1497 = vmatpush1.xpose.msra.mxu0 0.0
    %1498 = vmatprep.subr.mxu0 0.0
    %1499 = vmatpush1.xpose.msra.mxu0 0.0
    %1500 = vmatprep.subr.mxu0 0.0
    %1501 = vmatpush1.xpose.msra.mxu0 0.0
    %1502 = vmatprep.subr.mxu0 0.0
    %1503 = vmatpush1.xpose.msra.mxu0 0.0
    %1504 = vmatprep.subr.mxu0 0.0
    %1505 = vmatpush1.xpose.msra.mxu0 0.0
    %1506 = vmatprep.subr.mxu0 0.0
    %1507 = vmatpush1.xpose.msra.mxu0 0.0
    %1508 = vmatprep.subr.mxu0 0.0
    %1509 = vmatpush1.xpose.msra.mxu0 0.0
    %1510 = vmatprep.subr.mxu0 0.0
    %1511 = vmatpush1.xpose.msra.mxu0 0.0
    %1512 = vmatprep.subr.mxu0 0.0
    %1513 = vmatpush1.xpose.msra.mxu0 0.0
    %1514 = vmatprep.subr.mxu0 0.0
    %1515 = vmatpush1.xpose.msra.mxu0 0.0
    %1516 = vmatprep.subr.mxu0 0.0
    %1517 = vmatpush1.xpose.msra.mxu0 0.0
    %1518 = vmatprep.subr.mxu0 0.0
    %1519 = vmatpush1.xpose.msra.mxu0 0.0
    %1520 = vmatprep.subr.mxu0 0.0
    %1521 = vmatpush1.xpose.msra.mxu0 %v1490
    %1522 = vmatprep.subr.mxu0 0.0
    %1523 = vmatpush1.xpose.msra.mxu0 %v1487
    %1524 = vmatprep.subr.mxu0 0.0
    %1525 = vmatpush2.xpose.msra.mxu0 0.0
    %1526 = vmatprep.subr.mxu0 0.0
    %1527 = vmatpush2.xpose.msra.mxu0 0.0
    %1528 = vmatprep.subr.mxu0 0.0
    %1529 = vmatpush2.xpose.msra.mxu0 0.0
    %1530 = vmatprep.subr.mxu0 0.0
    %1531 = vmatpush2.xpose.msra.mxu0 0.0
    %1532 = vmatprep.subr.mxu0 0.0
    %1533 = vmatpush2.xpose.msra.mxu0 0.0
    %1534 = vmatprep.subr.mxu0 0.0
    %1535 = vmatpush2.xpose.msra.mxu0 0.0
    %1536 = vmatprep.subr.mxu0 0.0
    %1537 = vmatpush2.xpose.msra.mxu0 0.0
    %1538 = vmatprep.subr.mxu0 0.0
    %1539 = vmatpush2.xpose.msra.mxu0 0.0
    %1540 = vmatprep.subr.mxu0 0.0
    %1541 = vmatpush2.xpose.msra.mxu0 0.0
    %1542 = vmatprep.subr.mxu0 0.0
    %1543 = vmatpush2.xpose.msra.mxu0 0.0
    %1544 = vmatprep.subr.mxu0 0.0
    %1545 = vmatpush2.xpose.msra.mxu0 0.0
    %1546 = vmatprep.subr.mxu0 0.0
    %1547 = vmatpush2.xpose.msra.mxu0 0.0
    %1548 = vmatprep.subr.mxu0 0.0
    %1549 = vmatpush2.xpose.msra.mxu0 0.0
    %1550 = vmatprep.subr.mxu0 0.0
    %1551 = vmatpush2.xpose.msra.mxu0 0.0
    %1552 = vmatprep.subr.mxu0 0.0
    %1553 = vmatpush2.xpose.msra.mxu0 0.0
    %1554 = vmatprep.subr.mxu0 0.0
    %1555 = vmatpush2.xpose.msra.mxu0 0.0
    %1556 = vmatprep.mubr.f32.mxu0 0.0
    %1557 = vmatmul.mubr.f32.gmra.mxu0 %v1484
    %v1558 = vpop.f32.mrf.mxu0
    %v1559 = vadd.f32 0.0, %v1558
    %v1560 = vpop.f32.mrf.mxu0
    %1561 = vdwg.mxu0
    %v1562 = vsel %vm1481, %v1559, -1e+30
    %vm1563 = vcmask 74752
    %v1564 = vsel %vm1563, %v1562, -inf
    %1565 = vmax.xlane.f32.xlu0 %v1564
    %v1566 = vpop.xlane.xlu0 %1565
    %v1567 = vsub.f32 %v1562, %v1566
    %v1568 = vmul.f32 %v1567, 1.442695
    %v1569 = vpow.pop %v1568
    %v1570 = vsel %vm1563, %v1569, 0.0
    %1571 = vadd.xlane.f32.xlu0 %v1570
    %v1572 = vpop.xlane.xlu0 %1571
    %v1573 = vrcp.pop %v1572
    %v1574 = vmul.f32 %v1569, %v1573
    %1575 = vrot.lane.b32.xlu0 %v1375, 80
    %v1576 = vpop.permute.xlu0 %1575
    %1577 = vrot.lane.b32.xlu0 %v1380, 80
    %v1578 = vpop.permute.xlu0 %1577
    %vm1580 = vcmask 80896
    %v1582 = vsel %vm1580, %v1574, 0
    %v1584 = vsel %vm499, %v1578, 0
    %1586 = vmatprep.subr.mxu0 0.0
    %1587 = vmatpush1.msra.mxu0 0.0
    %1588 = vmatprep.subr.mxu0 0.0
    %1589 = vmatpush1.msra.mxu0 0.0
    %1590 = vmatprep.subr.mxu0 0.0
    %1591 = vmatpush1.msra.mxu0 0.0
    %1592 = vmatprep.subr.mxu0 0.0
    %1593 = vmatpush1.msra.mxu0 0.0
    %1594 = vmatprep.subr.mxu0 0.0
    %1595 = vmatpush1.msra.mxu0 0.0
    %1596 = vmatprep.subr.mxu0 0.0
    %1597 = vmatpush1.msra.mxu0 0.0
    %1598 = vmatprep.subr.mxu0 0.0
    %1599 = vmatpush1.msra.mxu0 0.0
    %1600 = vmatprep.subr.mxu0 0.0
    %1601 = vmatpush1.msra.mxu0 0.0
    %1602 = vmatprep.subr.mxu0 0.0
    %1603 = vmatpush1.msra.mxu0 0.0
    %1604 = vmatprep.subr.mxu0 0.0
    %1605 = vmatpush1.msra.mxu0 0.0
    %1606 = vmatprep.subr.mxu0 0.0
    %1607 = vmatpush1.msra.mxu0 0.0
    %1608 = vmatprep.subr.mxu0 0.0
    %1609 = vmatpush1.msra.mxu0 0.0
    %1610 = vmatprep.subr.mxu0 0.0
    %1611 = vmatpush1.msra.mxu0 0.0
    %1612 = vmatprep.subr.mxu0 0.0
    %1613 = vmatpush1.msra.mxu0 0.0
    %1614 = vmatprep.subr.mxu0 0.0
    %1615 = vmatpush1.msra.mxu0 %v1584
    %1616 = vmatprep.subr.mxu0 0.0
    %1617 = vmatpush1.msra.mxu0 %v1576
    %1618 = vmatprep.subr.mxu0 0.0
    %1619 = vmatpush2.msra.mxu0 0.0
    %1620 = vmatprep.subr.mxu0 0.0
    %1621 = vmatpush2.msra.mxu0 0.0
    %1622 = vmatprep.subr.mxu0 0.0
    %1623 = vmatpush2.msra.mxu0 0.0
    %1624 = vmatprep.subr.mxu0 0.0
    %1625 = vmatpush2.msra.mxu0 0.0
    %1626 = vmatprep.subr.mxu0 0.0
    %1627 = vmatpush2.msra.mxu0 0.0
    %1628 = vmatprep.subr.mxu0 0.0
    %1629 = vmatpush2.msra.mxu0 0.0
    %1630 = vmatprep.subr.mxu0 0.0
    %1631 = vmatpush2.msra.mxu0 0.0
    %1632 = vmatprep.subr.mxu0 0.0
    %1633 = vmatpush2.msra.mxu0 0.0
    %1634 = vmatprep.subr.mxu0 0.0
    %1635 = vmatpush2.msra.mxu0 0.0
    %1636 = vmatprep.subr.mxu0 0.0
    %1637 = vmatpush2.msra.mxu0 0.0
    %1638 = vmatprep.subr.mxu0 0.0
    %1639 = vmatpush2.msra.mxu0 0.0
    %1640 = vmatprep.subr.mxu0 0.0
    %1641 = vmatpush2.msra.mxu0 0.0
    %1642 = vmatprep.subr.mxu0 0.0
    %1643 = vmatpush2.msra.mxu0 0.0
    %1644 = vmatprep.subr.mxu0 0.0
    %1645 = vmatpush2.msra.mxu0 0.0
    %1646 = vmatprep.subr.mxu0 0.0
    %1647 = vmatpush2.msra.mxu0 0.0
    %1648 = vmatprep.subr.mxu0 0.0
    %1649 = vmatpush2.msra.mxu0 0.0
    %1650 = vmatprep.mubr.f32.mxu0 0.0
    %1651 = vmatmul.mubr.f32.gmra.mxu0 %v1582
    %v1652 = vpop.f32.mrf.mxu0
    %v1653 = vadd.f32 0.0, %v1652
    %v1654 = vpop.f32.mrf.mxu0
    %1655 = vdwg.mxu0
    %v1657 = vsel %vm391, %v1653, 0
    %1659 = vmatprep.subr.mxu0 0.0
    %1660 = vmatpush1.msra.mxu0 0.0
    %1661 = vmatprep.subr.mxu0 0.0
    %1662 = vmatpush1.msra.mxu0 0.0
    %1663 = vmatprep.subr.mxu0 0.0
    %1664 = vmatpush1.msra.mxu0 0.0
    %1665 = vmatprep.subr.mxu0 0.0
    %1666 = vmatpush1.msra.mxu0 0.0
    %1667 = vmatprep.subr.mxu0 0.0
    %1668 = vmatpush1.msra.mxu0 0.0
    %1669 = vmatprep.subr.mxu0 0.0
    %1670 = vmatpush1.msra.mxu0 0.0
    %1671 = vmatprep.subr.mxu0 0.0
    %1672 = vmatpush1.msra.mxu0 0.0
    %1673 = vmatprep.subr.mxu0 0.0
    %1674 = vmatpush1.msra.mxu0 0.0
    %1675 = vmatprep.subr.mxu0 0.0
    %1676 = vmatpush1.msra.mxu0 0.0
    %1677 = vmatprep.subr.mxu0 0.0
    %1678 = vmatpush1.msra.mxu0 0.0
    %1679 = vmatprep.subr.mxu0 0.0
    %1680 = vmatpush1.msra.mxu0 0.0
    %1681 = vmatprep.subr.mxu0 0.0
    %1682 = vmatpush1.msra.mxu0 0.0
    %1683 = vmatprep.subr.mxu0 0.0
    %1684 = vmatpush1.msra.mxu0 0.0
    %1685 = vmatprep.subr.mxu0 0.0
    %1686 = vmatpush1.msra.mxu0 0.0
    %1687 = vmatprep.subr.mxu0 0.0
    %1688 = vmatpush1.msra.mxu0 %v1243
    %1689 = vmatprep.subr.mxu0 0.0
    %1690 = vmatpush1.msra.mxu0 %v1242
    %1691 = vmatprep.subr.mxu0 0.0
    %1692 = vmatpush2.msra.mxu0 0.0
    %1693 = vmatprep.subr.mxu0 0.0
    %1694 = vmatpush2.msra.mxu0 0.0
    %1695 = vmatprep.subr.mxu0 0.0
    %1696 = vmatpush2.msra.mxu0 0.0
    %1697 = vmatprep.subr.mxu0 0.0
    %1698 = vmatpush2.msra.mxu0 0.0
    %1699 = vmatprep.subr.mxu0 0.0
    %1700 = vmatpush2.msra.mxu0 0.0
    %1701 = vmatprep.subr.mxu0 0.0
    %1702 = vmatpush2.msra.mxu0 0.0
    %1703 = vmatprep.subr.mxu0 0.0
    %1704 = vmatpush2.msra.mxu0 0.0
    %1705 = vmatprep.subr.mxu0 0.0
    %1706 = vmatpush2.msra.mxu0 0.0
    %1707 = vmatprep.subr.mxu0 0.0
    %1708 = vmatpush2.msra.mxu0 0.0
    %1709 = vmatprep.subr.mxu0 0.0
    %1710 = vmatpush2.msra.mxu0 0.0
    %1711 = vmatprep.subr.mxu0 0.0
    %1712 = vmatpush2.msra.mxu0 0.0
    %1713 = vmatprep.subr.mxu0 0.0
    %1714 = vmatpush2.msra.mxu0 0.0
    %1715 = vmatprep.subr.mxu0 0.0
    %1716 = vmatpush2.msra.mxu0 0.0
    %1717 = vmatprep.subr.mxu0 0.0
    %1718 = vmatpush2.msra.mxu0 0.0
    %1719 = vmatprep.subr.mxu0 0.0
    %1720 = vmatpush2.msra.mxu0 0.0
    %1721 = vmatprep.subr.mxu0 0.0
    %1722 = vmatpush2.msra.mxu0 0.0
    %1723 = vmatprep.mubr.f32.mxu0 0.0
    %1724 = vmatmul.mubr.f32.gmra.mxu0 %v1657
    %v1725 = vpop.f32.mrf.mxu0
    %v1726 = vadd.f32 0.0, %v1725
    %v1727 = vpop.f32.mrf.mxu0
    %1728 = vdwg.mxu0
    %v1730 = vlaneseq
    %v1731 = vshrl.u32 %v1730, 7
    %v1732 = vsub.s32 0, %v1731
    %v1733 = vrot.slane %v1482, %v1732
    %v1735 = vadd.f32 %v1733, %v1726
    %1736 = vrot.lane.b32.xlu0 %v1474, 112
    %v1737 = vpop.permute.xlu0 %1736
    %1738 = vrot.lane.b32.xlu0 %v1375, 112
    %v1739 = vpop.permute.xlu0 %1738
    %1740 = vrot.lane.b32.xlu0 %v1380, 112
    %v1741 = vpop.permute.xlu0 %1740
    %v1742 = vsel %vm391, %v1737, 0
    %v1744 = vsel %vm391, %v1739, 0
    %v1746 = vsel %vm391, %v1741, 0
    %1748 = vmatprep.subr.mxu0 0.0
    %1749 = vmatpush1.xpose.msra.mxu0 0.0
    %1750 = vmatprep.subr.mxu0 0.0
    %1751 = vmatpush1.xpose.msra.mxu0 0.0
    %1752 = vmatprep.subr.mxu0 0.0
    %1753 = vmatpush1.xpose.msra.mxu0 0.0
    %1754 = vmatprep.subr.mxu0 0.0
    %1755 = vmatpush1.xpose.msra.mxu0 0.0
    %1756 = vmatprep.subr.mxu0 0.0
    %1757 = vmatpush1.xpose.msra.mxu0 0.0
    %1758 = vmatprep.subr.mxu0 0.0
    %1759 = vmatpush1.xpose.msra.mxu0 0.0
    %1760 = vmatprep.subr.mxu0 0.0
    %1761 = vmatpush1.xpose.msra.mxu0 0.0
    %1762 = vmatprep.subr.mxu0 0.0
    %1763 = vmatpush1.xpose.msra.mxu0 0.0
    %1764 = vmatprep.subr.mxu0 0.0
    %1765 = vmatpush1.xpose.msra.mxu0 0.0
    %1766 = vmatprep.subr.mxu0 0.0
    %1767 = vmatpush1.xpose.msra.mxu0 0.0
    %1768 = vmatprep.subr.mxu0 0.0
    %1769 = vmatpush1.xpose.msra.mxu0 0.0
    %1770 = vmatprep.subr.mxu0 0.0
    %1771 = vmatpush1.xpose.msra.mxu0 0.0
    %1772 = vmatprep.subr.mxu0 0.0
    %1773 = vmatpush1.xpose.msra.mxu0 0.0
    %1774 = vmatprep.subr.mxu0 0.0
    %1775 = vmatpush1.xpose.msra.mxu0 0.0
    %1776 = vmatprep.subr.mxu0 0.0
    %1777 = vmatpush1.xpose.msra.mxu0 %v1746
    %1778 = vmatprep.subr.mxu0 0.0
    %1779 = vmatpush1.xpose.msra.mxu0 %v1744
    %1780 = vmatprep.subr.mxu0 0.0
    %1781 = vmatpush2.xpose.msra.mxu0 0.0
    %1782 = vmatprep.subr.mxu0 0.0
    %1783 = vmatpush2.xpose.msra.mxu0 0.0
    %1784 = vmatprep.subr.mxu0 0.0
    %1785 = vmatpush2.xpose.msra.mxu0 0.0
    %1786 = vmatprep.subr.mxu0 0.0
    %1787 = vmatpush2.xpose.msra.mxu0 0.0
    %1788 = vmatprep.subr.mxu0 0.0
    %1789 = vmatpush2.xpose.msra.mxu0 0.0
    %1790 = vmatprep.subr.mxu0 0.0
    %1791 = vmatpush2.xpose.msra.mxu0 0.0
    %1792 = vmatprep.subr.mxu0 0.0
    %1793 = vmatpush2.xpose.msra.mxu0 0.0
    %1794 = vmatprep.subr.mxu0 0.0
    %1795 = vmatpush2.xpose.msra.mxu0 0.0
    %1796 = vmatprep.subr.mxu0 0.0
    %1797 = vmatpush2.xpose.msra.mxu0 0.0
    %1798 = vmatprep.subr.mxu0 0.0
    %1799 = vmatpush2.xpose.msra.mxu0 0.0
    %1800 = vmatprep.subr.mxu0 0.0
    %1801 = vmatpush2.xpose.msra.mxu0 0.0
    %1802 = vmatprep.subr.mxu0 0.0
    %1803 = vmatpush2.xpose.msra.mxu0 0.0
    %1804 = vmatprep.subr.mxu0 0.0
    %1805 = vmatpush2.xpose.msra.mxu0 0.0
    %1806 = vmatprep.subr.mxu0 0.0
    %1807 = vmatpush2.xpose.msra.mxu0 0.0
    %1808 = vmatprep.subr.mxu0 0.0
    %1809 = vmatpush2.xpose.msra.mxu0 0.0
    %1810 = vmatprep.subr.mxu0 0.0
    %1811 = vmatpush2.xpose.msra.mxu0 0.0
    %1812 = vmatprep.mubr.f32.mxu0 0.0
    %1813 = vmatmul.mubr.f32.gmra.mxu0 %v1742
    %v1814 = vpop.f32.mrf.mxu0
    %v1815 = vadd.f32 0.0, %v1814
    %v1816 = vpop.f32.mrf.mxu0
    %1817 = vdwg.mxu0
    %v1818 = vsel %vm1481, %v1815, -1e+30
    %v1819 = vsel %vm1563, %v1818, -inf
    %1820 = vmax.xlane.f32.xlu0 %v1819
    %v1821 = vpop.xlane.xlu0 %1820
    %v1822 = vsub.f32 %v1818, %v1821
    %v1823 = vmul.f32 %v1822, 1.442695
    %v1824 = vpow.pop %v1823
    %v1825 = vsel %vm1563, %v1824, 0.0
    %1826 = vadd.xlane.f32.xlu0 %v1825
    %v1827 = vpop.xlane.xlu0 %1826
    %v1828 = vrcp.pop %v1827
    %v1829 = vmul.f32 %v1824, %v1828
    %1830 = vrot.lane.b32.xlu0 %v1375, 64
    %v1831 = vpop.permute.xlu0 %1830
    %1832 = vrot.lane.b32.xlu0 %v1380, 64
    %v1833 = vpop.permute.xlu0 %1832
    %v1836 = vsel %vm1580, %v1829, 0
    %v1838 = vsel %vm499, %v1833, 0
    %1840 = vmatprep.subr.mxu0 0.0
    %1841 = vmatpush1.msra.mxu0 0.0
    %1842 = vmatprep.subr.mxu0 0.0
    %1843 = vmatpush1.msra.mxu0 0.0
    %1844 = vmatprep.subr.mxu0 0.0
    %1845 = vmatpush1.msra.mxu0 0.0
    %1846 = vmatprep.subr.mxu0 0.0
    %1847 = vmatpush1.msra.mxu0 0.0
    %1848 = vmatprep.subr.mxu0 0.0
    %1849 = vmatpush1.msra.mxu0 0.0
    %1850 = vmatprep.subr.mxu0 0.0
    %1851 = vmatpush1.msra.mxu0 0.0
    %1852 = vmatprep.subr.mxu0 0.0
    %1853 = vmatpush1.msra.mxu0 0.0
    %1854 = vmatprep.subr.mxu0 0.0
    %1855 = vmatpush1.msra.mxu0 0.0
    %1856 = vmatprep.subr.mxu0 0.0
    %1857 = vmatpush1.msra.mxu0 0.0
    %1858 = vmatprep.subr.mxu0 0.0
    %1859 = vmatpush1.msra.mxu0 0.0
    %1860 = vmatprep.subr.mxu0 0.0
    %1861 = vmatpush1.msra.mxu0 0.0
    %1862 = vmatprep.subr.mxu0 0.0
    %1863 = vmatpush1.msra.mxu0 0.0
    %1864 = vmatprep.subr.mxu0 0.0
    %1865 = vmatpush1.msra.mxu0 0.0
    %1866 = vmatprep.subr.mxu0 0.0
    %1867 = vmatpush1.msra.mxu0 0.0
    %1868 = vmatprep.subr.mxu0 0.0
    %1869 = vmatpush1.msra.mxu0 %v1838
    %1870 = vmatprep.subr.mxu0 0.0
    %1871 = vmatpush1.msra.mxu0 %v1831
    %1872 = vmatprep.subr.mxu0 0.0
    %1873 = vmatpush2.msra.mxu0 0.0
    %1874 = vmatprep.subr.mxu0 0.0
    %1875 = vmatpush2.msra.mxu0 0.0
    %1876 = vmatprep.subr.mxu0 0.0
    %1877 = vmatpush2.msra.mxu0 0.0
    %1878 = vmatprep.subr.mxu0 0.0
    %1879 = vmatpush2.msra.mxu0 0.0
    %1880 = vmatprep.subr.mxu0 0.0
    %1881 = vmatpush2.msra.mxu0 0.0
    %1882 = vmatprep.subr.mxu0 0.0
    %1883 = vmatpush2.msra.mxu0 0.0
    %1884 = vmatprep.subr.mxu0 0.0
    %1885 = vmatpush2.msra.mxu0 0.0
    %1886 = vmatprep.subr.mxu0 0.0
    %1887 = vmatpush2.msra.mxu0 0.0
    %1888 = vmatprep.subr.mxu0 0.0
    %1889 = vmatpush2.msra.mxu0 0.0
    %1890 = vmatprep.subr.mxu0 0.0
    %1891 = vmatpush2.msra.mxu0 0.0
    %1892 = vmatprep.subr.mxu0 0.0
    %1893 = vmatpush2.msra.mxu0 0.0
    %1894 = vmatprep.subr.mxu0 0.0
    %1895 = vmatpush2.msra.mxu0 0.0
    %1896 = vmatprep.subr.mxu0 0.0
    %1897 = vmatpush2.msra.mxu0 0.0
    %1898 = vmatprep.subr.mxu0 0.0
    %1899 = vmatpush2.msra.mxu0 0.0
    %1900 = vmatprep.subr.mxu0 0.0
    %1901 = vmatpush2.msra.mxu0 0.0
    %1902 = vmatprep.subr.mxu0 0.0
    %1903 = vmatpush2.msra.mxu0 0.0
    %1904 = vmatprep.mubr.f32.mxu0 0.0
    %1905 = vmatmul.mubr.f32.gmra.mxu0 %v1836
    %v1906 = vpop.f32.mrf.mxu0
    %v1907 = vadd.f32 0.0, %v1906
    %v1908 = vpop.f32.mrf.mxu0
    %1909 = vdwg.mxu0
    %v1911 = vsel %vm391, %v1907, 0
    %1913 = vmatprep.subr.mxu0 0.0
    %1914 = vmatpush1.msra.mxu0 0.0
    %1915 = vmatprep.subr.mxu0 0.0
    %1916 = vmatpush1.msra.mxu0 0.0
    %1917 = vmatprep.subr.mxu0 0.0
    %1918 = vmatpush1.msra.mxu0 0.0
    %1919 = vmatprep.subr.mxu0 0.0
    %1920 = vmatpush1.msra.mxu0 0.0
    %1921 = vmatprep.subr.mxu0 0.0
    %1922 = vmatpush1.msra.mxu0 0.0
    %1923 = vmatprep.subr.mxu0 0.0
    %1924 = vmatpush1.msra.mxu0 0.0
    %1925 = vmatprep.subr.mxu0 0.0
    %1926 = vmatpush1.msra.mxu0 0.0
    %1927 = vmatprep.subr.mxu0 0.0
    %1928 = vmatpush1.msra.mxu0 0.0
    %1929 = vmatprep.subr.mxu0 0.0
    %1930 = vmatpush1.msra.mxu0 0.0
    %1931 = vmatprep.subr.mxu0 0.0
    %1932 = vmatpush1.msra.mxu0 0.0
    %1933 = vmatprep.subr.mxu0 0.0
    %1934 = vmatpush1.msra.mxu0 0.0
    %1935 = vmatprep.subr.mxu0 0.0
    %1936 = vmatpush1.msra.mxu0 0.0
    %1937 = vmatprep.subr.mxu0 0.0
    %1938 = vmatpush1.msra.mxu0 0.0
    %1939 = vmatprep.subr.mxu0 0.0
    %1940 = vmatpush1.msra.mxu0 0.0
    %1941 = vmatprep.subr.mxu0 0.0
    %1942 = vmatpush1.msra.mxu0 %v1245
    %1943 = vmatprep.subr.mxu0 0.0
    %1944 = vmatpush1.msra.mxu0 %v1244
    %1945 = vmatprep.subr.mxu0 0.0
    %1946 = vmatpush2.msra.mxu0 0.0
    %1947 = vmatprep.subr.mxu0 0.0
    %1948 = vmatpush2.msra.mxu0 0.0
    %1949 = vmatprep.subr.mxu0 0.0
    %1950 = vmatpush2.msra.mxu0 0.0
    %1951 = vmatprep.subr.mxu0 0.0
    %1952 = vmatpush2.msra.mxu0 0.0
    %1953 = vmatprep.subr.mxu0 0.0
    %1954 = vmatpush2.msra.mxu0 0.0
    %1955 = vmatprep.subr.mxu0 0.0
    %1956 = vmatpush2.msra.mxu0 0.0
    %1957 = vmatprep.subr.mxu0 0.0
    %1958 = vmatpush2.msra.mxu0 0.0
    %1959 = vmatprep.subr.mxu0 0.0
    %1960 = vmatpush2.msra.mxu0 0.0
    %1961 = vmatprep.subr.mxu0 0.0
    %1962 = vmatpush2.msra.mxu0 0.0
    %1963 = vmatprep.subr.mxu0 0.0
    %1964 = vmatpush2.msra.mxu0 0.0
    %1965 = vmatprep.subr.mxu0 0.0
    %1966 = vmatpush2.msra.mxu0 0.0
    %1967 = vmatprep.subr.mxu0 0.0
    %1968 = vmatpush2.msra.mxu0 0.0
    %1969 = vmatprep.subr.mxu0 0.0
    %1970 = vmatpush2.msra.mxu0 0.0
    %1971 = vmatprep.subr.mxu0 0.0
    %1972 = vmatpush2.msra.mxu0 0.0
    %1973 = vmatprep.subr.mxu0 0.0
    %1974 = vmatpush2.msra.mxu0 0.0
    %1975 = vmatprep.subr.mxu0 0.0
    %1976 = vmatpush2.msra.mxu0 0.0
    %1977 = vmatprep.mubr.f32.mxu0 0.0
    %1978 = vmatmul.mubr.f32.gmra.mxu0 %v1911
    %v1979 = vpop.f32.mrf.mxu0
    %v1980 = vadd.f32 0.0, %v1979
    %v1981 = vpop.f32.mrf.mxu0
    %1982 = vdwg.mxu0
    %v1983 = vadd.f32 %v1735, %v1980
    %1984 = vrot.lane.b32.xlu0 %v1474, 96
    %v1985 = vpop.permute.xlu0 %1984
    %1986 = vrot.lane.b32.xlu0 %v1375, 96
    %v1987 = vpop.permute.xlu0 %1986
    %1988 = vrot.lane.b32.xlu0 %v1380, 96
    %v1989 = vpop.permute.xlu0 %1988
    %v1990 = vsel %vm391, %v1985, 0
    %v1992 = vsel %vm391, %v1987, 0
    %v1994 = vsel %vm391, %v1989, 0
    %1996 = vmatprep.subr.mxu0 0.0
    %1997 = vmatpush1.xpose.msra.mxu0 0.0
    %1998 = vmatprep.subr.mxu0 0.0
    %1999 = vmatpush1.xpose.msra.mxu0 0.0
    %2000 = vmatprep.subr.mxu0 0.0
    %2001 = vmatpush1.xpose.msra.mxu0 0.0
    %2002 = vmatprep.subr.mxu0 0.0
    %2003 = vmatpush1.xpose.msra.mxu0 0.0
    %2004 = vmatprep.subr.mxu0 0.0
    %2005 = vmatpush1.xpose.msra.mxu0 0.0
    %2006 = vmatprep.subr.mxu0 0.0
    %2007 = vmatpush1.xpose.msra.mxu0 0.0
    %2008 = vmatprep.subr.mxu0 0.0
    %2009 = vmatpush1.xpose.msra.mxu0 0.0
    %2010 = vmatprep.subr.mxu0 0.0
    %2011 = vmatpush1.xpose.msra.mxu0 0.0
    %2012 = vmatprep.subr.mxu0 0.0
    %2013 = vmatpush1.xpose.msra.mxu0 0.0
    %2014 = vmatprep.subr.mxu0 0.0
    %2015 = vmatpush1.xpose.msra.mxu0 0.0
    %2016 = vmatprep.subr.mxu0 0.0
    %2017 = vmatpush1.xpose.msra.mxu0 0.0
    %2018 = vmatprep.subr.mxu0 0.0
    %2019 = vmatpush1.xpose.msra.mxu0 0.0
    %2020 = vmatprep.subr.mxu0 0.0
    %2021 = vmatpush1.xpose.msra.mxu0 0.0
    %2022 = vmatprep.subr.mxu0 0.0
    %2023 = vmatpush1.xpose.msra.mxu0 0.0
    %2024 = vmatprep.subr.mxu0 0.0
    %2025 = vmatpush1.xpose.msra.mxu0 %v1994
    %2026 = vmatprep.subr.mxu0 0.0
    %2027 = vmatpush1.xpose.msra.mxu0 %v1992
    %2028 = vmatprep.subr.mxu0 0.0
    %2029 = vmatpush2.xpose.msra.mxu0 0.0
    %2030 = vmatprep.subr.mxu0 0.0
    %2031 = vmatpush2.xpose.msra.mxu0 0.0
    %2032 = vmatprep.subr.mxu0 0.0
    %2033 = vmatpush2.xpose.msra.mxu0 0.0
    %2034 = vmatprep.subr.mxu0 0.0
    %2035 = vmatpush2.xpose.msra.mxu0 0.0
    %2036 = vmatprep.subr.mxu0 0.0
    %2037 = vmatpush2.xpose.msra.mxu0 0.0
    %2038 = vmatprep.subr.mxu0 0.0
    %2039 = vmatpush2.xpose.msra.mxu0 0.0
    %2040 = vmatprep.subr.mxu0 0.0
    %2041 = vmatpush2.xpose.msra.mxu0 0.0
    %2042 = vmatprep.subr.mxu0 0.0
    %2043 = vmatpush2.xpose.msra.mxu0 0.0
    %2044 = vmatprep.subr.mxu0 0.0
    %2045 = vmatpush2.xpose.msra.mxu0 0.0
    %2046 = vmatprep.subr.mxu0 0.0
    %2047 = vmatpush2.xpose.msra.mxu0 0.0
    %2048 = vmatprep.subr.mxu0 0.0
    %2049 = vmatpush2.xpose.msra.mxu0 0.0
    %2050 = vmatprep.subr.mxu0 0.0
    %2051 = vmatpush2.xpose.msra.mxu0 0.0
    %2052 = vmatprep.subr.mxu0 0.0
    %2053 = vmatpush2.xpose.msra.mxu0 0.0
    %2054 = vmatprep.subr.mxu0 0.0
    %2055 = vmatpush2.xpose.msra.mxu0 0.0
    %2056 = vmatprep.subr.mxu0 0.0
    %2057 = vmatpush2.xpose.msra.mxu0 0.0
    %2058 = vmatprep.subr.mxu0 0.0
    %2059 = vmatpush2.xpose.msra.mxu0 0.0
    %2060 = vmatprep.mubr.f32.mxu0 0.0
    %2061 = vmatmul.mubr.f32.gmra.mxu0 %v1990
    %v2062 = vpop.f32.mrf.mxu0
    %v2063 = vadd.f32 0.0, %v2062
    %v2064 = vpop.f32.mrf.mxu0
    %2065 = vdwg.mxu0
    %v2066 = vsel %vm1481, %v2063, -1e+30
    %v2067 = vsel %vm1563, %v2066, -inf
    %2068 = vmax.xlane.f32.xlu0 %v2067
    %v2069 = vpop.xlane.xlu0 %2068
    %v2070 = vsub.f32 %v2066, %v2069
    %v2071 = vmul.f32 %v2070, 1.442695
    %v2072 = vpow.pop %v2071
    %v2073 = vsel %vm1563, %v2072, 0.0
    %2074 = vadd.xlane.f32.xlu0 %v2073
    %v2075 = vpop.xlane.xlu0 %2074
    %v2076 = vrcp.pop %v2075
    %v2077 = vmul.f32 %v2072, %v2076
    %2078 = vrot.lane.b32.xlu0 %v1375, 48
    %v2079 = vpop.permute.xlu0 %2078
    %2080 = vrot.lane.b32.xlu0 %v1380, 48
    %v2081 = vpop.permute.xlu0 %2080
    %v2084 = vsel %vm1580, %v2077, 0
    %v2086 = vsel %vm499, %v2081, 0
    %2088 = vmatprep.subr.mxu0 0.0
    %2089 = vmatpush1.msra.mxu0 0.0
    %2090 = vmatprep.subr.mxu0 0.0
    %2091 = vmatpush1.msra.mxu0 0.0
    %2092 = vmatprep.subr.mxu0 0.0
    %2093 = vmatpush1.msra.mxu0 0.0
    %2094 = vmatprep.subr.mxu0 0.0
    %2095 = vmatpush1.msra.mxu0 0.0
    %2096 = vmatprep.subr.mxu0 0.0
    %2097 = vmatpush1.msra.mxu0 0.0
    %2098 = vmatprep.subr.mxu0 0.0
    %2099 = vmatpush1.msra.mxu0 0.0
    %2100 = vmatprep.subr.mxu0 0.0
    %2101 = vmatpush1.msra.mxu0 0.0
    %2102 = vmatprep.subr.mxu0 0.0
    %2103 = vmatpush1.msra.mxu0 0.0
    %2104 = vmatprep.subr.mxu0 0.0
    %2105 = vmatpush1.msra.mxu0 0.0
    %2106 = vmatprep.subr.mxu0 0.0
    %2107 = vmatpush1.msra.mxu0 0.0
    %2108 = vmatprep.subr.mxu0 0.0
    %2109 = vmatpush1.msra.mxu0 0.0
    %2110 = vmatprep.subr.mxu0 0.0
    %2111 = vmatpush1.msra.mxu0 0.0
    %2112 = vmatprep.subr.mxu0 0.0
    %2113 = vmatpush1.msra.mxu0 0.0
    %2114 = vmatprep.subr.mxu0 0.0
    %2115 = vmatpush1.msra.mxu0 0.0
    %2116 = vmatprep.subr.mxu0 0.0
    %2117 = vmatpush1.msra.mxu0 %v2086
    %2118 = vmatprep.subr.mxu0 0.0
    %2119 = vmatpush1.msra.mxu0 %v2079
    %2120 = vmatprep.subr.mxu0 0.0
    %2121 = vmatpush2.msra.mxu0 0.0
    %2122 = vmatprep.subr.mxu0 0.0
    %2123 = vmatpush2.msra.mxu0 0.0
    %2124 = vmatprep.subr.mxu0 0.0
    %2125 = vmatpush2.msra.mxu0 0.0
    %2126 = vmatprep.subr.mxu0 0.0
    %2127 = vmatpush2.msra.mxu0 0.0
    %2128 = vmatprep.subr.mxu0 0.0
    %2129 = vmatpush2.msra.mxu0 0.0
    %2130 = vmatprep.subr.mxu0 0.0
    %2131 = vmatpush2.msra.mxu0 0.0
    %2132 = vmatprep.subr.mxu0 0.0
    %2133 = vmatpush2.msra.mxu0 0.0
    %2134 = vmatprep.subr.mxu0 0.0
    %2135 = vmatpush2.msra.mxu0 0.0
    %2136 = vmatprep.subr.mxu0 0.0
    %2137 = vmatpush2.msra.mxu0 0.0
    %2138 = vmatprep.subr.mxu0 0.0
    %2139 = vmatpush2.msra.mxu0 0.0
    %2140 = vmatprep.subr.mxu0 0.0
    %2141 = vmatpush2.msra.mxu0 0.0
    %2142 = vmatprep.subr.mxu0 0.0
    %2143 = vmatpush2.msra.mxu0 0.0
    %2144 = vmatprep.subr.mxu0 0.0
    %2145 = vmatpush2.msra.mxu0 0.0
    %2146 = vmatprep.subr.mxu0 0.0
    %2147 = vmatpush2.msra.mxu0 0.0
    %2148 = vmatprep.subr.mxu0 0.0
    %2149 = vmatpush2.msra.mxu0 0.0
    %2150 = vmatprep.subr.mxu0 0.0
    %2151 = vmatpush2.msra.mxu0 0.0
    %2152 = vmatprep.mubr.f32.mxu0 0.0
    %2153 = vmatmul.mubr.f32.gmra.mxu0 %v2084
    %v2154 = vpop.f32.mrf.mxu0
    %v2155 = vadd.f32 0.0, %v2154
    %v2156 = vpop.f32.mrf.mxu0
    %2157 = vdwg.mxu0
    %v2159 = vsel %vm391, %v2155, 0
    %2161 = vmatprep.subr.mxu0 0.0
    %2162 = vmatpush1.msra.mxu0 0.0
    %2163 = vmatprep.subr.mxu0 0.0
    %2164 = vmatpush1.msra.mxu0 0.0
    %2165 = vmatprep.subr.mxu0 0.0
    %2166 = vmatpush1.msra.mxu0 0.0
    %2167 = vmatprep.subr.mxu0 0.0
    %2168 = vmatpush1.msra.mxu0 0.0
    %2169 = vmatprep.subr.mxu0 0.0
    %2170 = vmatpush1.msra.mxu0 0.0
    %2171 = vmatprep.subr.mxu0 0.0
    %2172 = vmatpush1.msra.mxu0 0.0
    %2173 = vmatprep.subr.mxu0 0.0
    %2174 = vmatpush1.msra.mxu0 0.0
    %2175 = vmatprep.subr.mxu0 0.0
    %2176 = vmatpush1.msra.mxu0 0.0
    %2177 = vmatprep.subr.mxu0 0.0
    %2178 = vmatpush1.msra.mxu0 0.0
    %2179 = vmatprep.subr.mxu0 0.0
    %2180 = vmatpush1.msra.mxu0 0.0
    %2181 = vmatprep.subr.mxu0 0.0
    %2182 = vmatpush1.msra.mxu0 0.0
    %2183 = vmatprep.subr.mxu0 0.0
    %2184 = vmatpush1.msra.mxu0 0.0
    %2185 = vmatprep.subr.mxu0 0.0
    %2186 = vmatpush1.msra.mxu0 0.0
    %2187 = vmatprep.subr.mxu0 0.0
    %2188 = vmatpush1.msra.mxu0 0.0
    %2189 = vmatprep.subr.mxu0 0.0
    %2190 = vmatpush1.msra.mxu0 %v1247
    %2191 = vmatprep.subr.mxu0 0.0
    %2192 = vmatpush1.msra.mxu0 %v1246
    %2193 = vmatprep.subr.mxu0 0.0
    %2194 = vmatpush2.msra.mxu0 0.0
    %2195 = vmatprep.subr.mxu0 0.0
    %2196 = vmatpush2.msra.mxu0 0.0
    %2197 = vmatprep.subr.mxu0 0.0
    %2198 = vmatpush2.msra.mxu0 0.0
    %2199 = vmatprep.subr.mxu0 0.0
    %2200 = vmatpush2.msra.mxu0 0.0
    %2201 = vmatprep.subr.mxu0 0.0
    %2202 = vmatpush2.msra.mxu0 0.0
    %2203 = vmatprep.subr.mxu0 0.0
    %2204 = vmatpush2.msra.mxu0 0.0
    %2205 = vmatprep.subr.mxu0 0.0
    %2206 = vmatpush2.msra.mxu0 0.0
    %2207 = vmatprep.subr.mxu0 0.0
    %2208 = vmatpush2.msra.mxu0 0.0
    %2209 = vmatprep.subr.mxu0 0.0
    %2210 = vmatpush2.msra.mxu0 0.0
    %2211 = vmatprep.subr.mxu0 0.0
    %2212 = vmatpush2.msra.mxu0 0.0
    %2213 = vmatprep.subr.mxu0 0.0
    %2214 = vmatpush2.msra.mxu0 0.0
    %2215 = vmatprep.subr.mxu0 0.0
    %2216 = vmatpush2.msra.mxu0 0.0
    %2217 = vmatprep.subr.mxu0 0.0
    %2218 = vmatpush2.msra.mxu0 0.0
    %2219 = vmatprep.subr.mxu0 0.0
    %2220 = vmatpush2.msra.mxu0 0.0
    %2221 = vmatprep.subr.mxu0 0.0
    %2222 = vmatpush2.msra.mxu0 0.0
    %2223 = vmatprep.subr.mxu0 0.0
    %2224 = vmatpush2.msra.mxu0 0.0
    %2225 = vmatprep.mubr.f32.mxu0 0.0
    %2226 = vmatmul.mubr.f32.gmra.mxu0 %v2159
    %v2227 = vpop.f32.mrf.mxu0
    %v2228 = vadd.f32 0.0, %v2227
    %v2229 = vpop.f32.mrf.mxu0
    %2230 = vdwg.mxu0
    %v2231 = vadd.f32 %v1983, %v2228
    %v2232 = vadd.f32 %v108, %v2231
    %v2233 = vld [vmem:[%s16] sm:$0x1]
    %v2234 = vld [vmem:[%s17] sm:$0x1]
    %v2235 = vsel %vm121, %v102, 0.0
    %2236 = vadd.xlane.f32.xlu0 %v2235
    %v2237 = vpop.xlane.xlu0 %2236
    %v2238 = vsel %vm121, %v103, 0.0
    %2239 = vadd.xlane.f32.xlu0 %v2238
    %v2240 = vpop.xlane.xlu0 %2239
    %v2241 = vsel %vm124, %v104, 0.0
    %2242 = vadd.xlane.f32.xlu0 %v2241
    %v2243 = vpop.xlane.xlu0 %2242
    %v2244 = vmul.f32 %v2237, %v142
    %v2245 = vmul.f32 %v2240, %v142
    %v2246 = vmul.f32 %v2243, %v142
    %v2247 = vsub.f32 %v102, %v2244
    %v2248 = vsub.f32 %v103, %v2245
    %v2249 = vsub.f32 %v104, %v2246
    %v2250 = vmul.f32 %v2247, %v2247
    %v2251 = vmul.f32 %v2248, %v2248
    %v2252 = vmul.f32 %v2249, %v2249
    %v2253 = vsel %vm121, %v2250, 0.0
    %2254 = vadd.xlane.f32.xlu0 %v2253
    %v2255 = vpop.xlane.xlu0 %2254
    %v2256 = vsel %vm121, %v2251, 0.0
    %2257 = vadd.xlane.f32.xlu0 %v2256
    %v2258 = vpop.xlane.xlu0 %2257
    %v2259 = vsel %vm124, %v2252, 0.0
    %2260 = vadd.xlane.f32.xlu0 %v2259
    %v2261 = vpop.xlane.xlu0 %2260
    %v2262 = vmul.f32 %v2255, %v142
    %v2263 = vmul.f32 %v2258, %v142
    %v2264 = vmul.f32 %v2261, %v142
    %v2265 = vadd.f32 %v2262, 1e-06
    %v2266 = vadd.f32 %v2263, 1e-06
    %v2267 = vadd.f32 %v2264, 1e-06
    %v2268 = vrsqrt.pop %v2265
    %v2269 = vrsqrt.pop %v2266
    %v2270 = vrsqrt.pop %v2267
    %v2271 = vmul.f32 %v2247, %v2268
    %v2272 = vmul.f32 %v2248, %v2269
    %v2273 = vmul.f32 %v2249, %v2270
    %v2275 = vlaneseq
    %v2276 = vshrl.u32 %v2275, 7
    %v2277 = vsub.s32 0, %v2276
    %v2278 = vrot.slane %v2233, %v2277
    %v2280 = vmul.f32 %v2271, %v2278
    %v2281 = vmul.f32 %v2272, %v2278
    %v2282 = vmul.f32 %v2273, %v2278
    %v2284 = vlaneseq
    %v2285 = vshrl.u32 %v2284, 7
    %v2286 = vsub.s32 0, %v2285
    %v2287 = vrot.slane %v2234, %v2286
    %v2289 = vadd.f32 %v2280, %v2287
    %v2290 = vadd.f32 %v2281, %v2287
    %v2291 = vadd.f32 %v2282, %v2287
    %2292 = vst.msk [vmem:[%s18] sm:$0xff] %vm121, %v2289
    %2293 = vst.msk [vmem:[%s18 + $0x8] sm:$0xff] %vm121, %v2290
    %2294 = vst.msk [vmem:[%s18 + $0x10] sm:$0x3] %vm124, %v2291
    %v2295 = vld [vmem:[%s16] sm:$0x1]
    %v2296 = vld [vmem:[%s17] sm:$0x1]
    %v2297 = vsel %vm124, %v2232, 0.0
    %2298 = vadd.xlane.f32.xlu0 %v2297
    %v2299 = vpop.xlane.xlu0 %2298
    %v2300 = vmul.f32 %v2299, %v142
    %v2301 = vsub.f32 %v2232, %v2300
    %v2302 = vmul.f32 %v2301, %v2301
    %v2303 = vsel %vm124, %v2302, 0.0
    %2304 = vadd.xlane.f32.xlu0 %v2303
    %v2305 = vpop.xlane.xlu0 %2304
    %v2306 = vmul.f32 %v2305, %v142
    %v2307 = vadd.f32 %v2306, 1e-06
    %v2308 = vrsqrt.pop %v2307
    %v2309 = vmul.f32 %v2301, %v2308
    %v2311 = vlaneseq
    %v2312 = vshrl.u32 %v2311, 7
    %v2313 = vsub.s32 0, %v2312
    %v2314 = vrot.slane %v2295, %v2313
    %v2316 = vmul.f32 %v2309, %v2314
    %v2318 = vlaneseq
    %v2319 = vshrl.u32 %v2318, 7
    %v2320 = vsub.s32 0, %v2319
    %v2321 = vrot.slane %v2296, %v2320
    %v2323 = vadd.f32 %v2316, %v2321
    %2324 = vst.msk [vmem:[%s18] sm:$0x1] %vm126, %v2323
    %2325 = vst.msk [vmem:[%s18 + $0x8] sm:$0x2] %vm128, %v2323
    // Predicated region
    $region86: #{multi_scale_encoder_forward.1} parent=1 // pred_check
      _
    $region87: #{multi_scale_encoder_forward.1} parent=1 // pred_check_branch
      %2327 = sbr.rel (0) target = $region89
    $region88: #{multi_scale_encoder_forward.1} parent=1 // pred_region
      _
    $region89: #{multi_scale_encoder_forward.1} parent=1 // pred_fallthru
      _
    // Predicated region
    $region90: #{multi_scale_encoder_forward.1} parent=1 // pred_check
      _
    $region91: #{multi_scale_encoder_forward.1} parent=1 // pred_check_branch
      %2329 = sbr.rel (0) target = $region93
    $region92: #{multi_scale_encoder_forward.1} parent=1 // pred_region
      _
    $region93: #{multi_scale_encoder_forward.1} parent=1 // pred_fallthru
      _
    // Predicated region
    $region94: #{multi_scale_encoder_forward.1} parent=1 // pred_check
      _
    $region95: #{multi_scale_encoder_forward.1} parent=1 // pred_check_branch
      %2331 = sbr.rel (0) target = $region97
    $region96: #{multi_scale_encoder_forward.1} parent=1 // pred_region
      _
    $region97: #{multi_scale_encoder_forward.1} parent=1 // pred_fallthru
      _
    // Predicated region
    $region98: #{multi_scale_encoder_forward.1} parent=1 // pred_check
      _
    $region99: #{multi_scale_encoder_forward.1} parent=1 // pred_check_branch
      %2333 = sbr.rel (0) target = $region101
    $region100: #{multi_scale_encoder_forward.1} parent=1 // pred_region
      _
    $region101: #{multi_scale_encoder_forward.1} parent=1 // pred_fallthru
      _
    %2334 = vsyncpa [#allocation4], 1
    %2335 = vsyncpa [#allocation6], 1

</llo_original>
